<compile_context>
chip_gen: v6e
topology: v6e:2x2x1
jax: 0.10.0
libtpu: 0.0.40
codegen_flags: <defaults>
</compile_context>

<pallas_src>
import jax
import jax.numpy as jnp
import numpy as np
from jax.experimental import pallas as pl
from jax.experimental.pallas import tpu as pltpu


# ----------------------------------------------------------------------------
# Fused Pallas kernel: conv1 + ReLU + conv2 + ReLU + fc
# ----------------------------------------------------------------------------
def _cnn_ws4_fused_kernel(x_ref, r1_ref, cw1_ref, b1_ref,
                          r2_ref, cw2_ref, b2_ref,
                          wfc_ref, msum_ref, bfc_ref, o_ref):
    f32 = jnp.float32

    def conv_relu(a, r_ref, cw_ref, b_ref):
        # a:  (N*H, W*Cin)      rows=(n, h)  lanes=(w, cin)
        # out:(N*Ho, Wo*Cout)   rows=(n, oh) lanes=(ow, cout)
        kh = r_ref.shape[0]
        kw = cw_ref.shape[0] // kh
        acc = None
        for i in range(kh):
            ra = jnp.dot(r_ref[i], a, preferred_element_type=f32)
            for j in range(kw):
                c = jnp.dot(ra, cw_ref[i * kw + j], preferred_element_type=f32)
                acc = c if acc is None else acc + c
        return jnp.maximum(acc + b_ref[...], 0.0)

    a0 = x_ref[...].astype(f32)                   # (N*20, 20*4)
    y1 = conv_relu(a0, r1_ref, cw1_ref, b1_ref)   # (N*10, 10*16)
    y2 = conv_relu(y1, r2_ref, cw2_ref, b2_ref)   # (N*5,  5*32)

    # fc folded in: elementwise multiply with the pre-permuted fc weight map,
    # sum rows belonging to each sample (msum matmul) and sum over lanes.
    p = y2 * wfc_ref[...]                                         # (N*5, 160)
    red = jnp.dot(msum_ref[...], p, preferred_element_type=f32)   # (N, 160)
    o_ref[...] = (jnp.sum(red, axis=-1, keepdims=True)
                  + bfc_ref[...]).astype(o_ref.dtype)             # (N, 1)


def cnn_ws4_forward(x_nchw, prepped):
    n, c, h, w = x_nchw.shape
    # Only per-forward glue: NCHW -> rows=(n,h), lanes=(w,c) slab (tiny input).
    a0 = jnp.transpose(x_nchw, (0, 2, 3, 1)).reshape(n * h, w * c)
    a0 = a0.astype(jnp.float32)
    return pl.pallas_call(
        _cnn_ws4_fused_kernel,
        out_shape=jax.ShapeDtypeStruct((n, 1), jnp.float32),
        # Whole problem (< 3 MB padded) fits in VMEM: no grid, no tiling.
        in_specs=[pl.BlockSpec(memory_space=pltpu.MemorySpace.VMEM)] * 10,
        out_specs=pl.BlockSpec(memory_space=pltpu.MemorySpace.VMEM),
    )(a0, prepped["r1"], prepped["cw1"], prepped["b1t"],
      prepped["r2"], prepped["cw2"], prepped["b2t"],
      prepped["wfc_map"], prepped["msum"], prepped["bfc2d"])


# ----------------------------------------------------------------------------
# One-time parameter preparation (hoisted out of the per-forward path)
# ----------------------------------------------------------------------------
def _conv_selectors(w_oihw, b, n, h_in, w_in, stride, pad):
    """Build row selectors R_i and weight-embedded column selectors CW_ij."""
    w_oihw = np.asarray(w_oihw, np.float32)
    b = np.asarray(b, np.float32)
    cout, cin, kh, kw = w_oihw.shape
    h_out = (h_in + 2 * pad - kh) // stride + 1
    w_out = (w_in + 2 * pad - kw) // stride + 1

    # R[i]: (N*h_out, N*h_in); picks input row h = stride*oh + i - pad (0 if OOB)
    r = np.zeros((kh, n * h_out, n * h_in), np.float32)
    for i in range(kh):
        for bi in range(n):
            for oh in range(h_out):
                hh = stride * oh + i - pad
                if 0 <= hh < h_in:
                    r[i, bi * h_out + oh, bi * h_in + hh] = 1.0

    # CW[i*kw+j]: (w_in*cin, w_out*cout); picks input col w = stride*ow + j - pad
    # and applies the (cin, cout) weight block of tap (i, j).
    cw = np.zeros((kh * kw, w_in * cin, w_out * cout), np.float32)
    for i in range(kh):
        for j in range(kw):
            wt = w_oihw[:, :, i, j].T                      # (cin, cout)
            for ow in range(w_out):
                ww = stride * ow + j - pad
                if 0 <= ww < w_in:
                    cw[i * kw + j,
                       ww * cin:(ww + 1) * cin,
                       ow * cout:(ow + 1) * cout] = wt

    bias = np.tile(b, w_out)[None, :]                      # (1, w_out*cout)
    return r, cw, bias, h_out, w_out


def prepare_params(params, n_batch, h_in, w_in):
    r1, cw1, b1t, h1, w1o = _conv_selectors(
        params["w1"], params["b1"], n_batch, h_in, w_in, stride=2, pad=1)
    r2, cw2, b2t, h2, w2o = _conv_selectors(
        params["w2"], params["b2"], n_batch, h1, w1o, stride=2, pad=1)
    cout2 = int(np.asarray(params["w2"]).shape[0])

    # fc: PyTorch view() flattens (c, h, w); kernel activation y2 has
    # rows=(n, h), lanes=(w, c) -> permute the fc weight once to match.
    wfc = np.asarray(params["wfc"], np.float32).reshape(cout2, h2, w2o)  # (c,h,w)
    wmap = np.transpose(wfc, (1, 2, 0)).reshape(h2, w2o * cout2)         # (h,(w,c))
    wmap = np.tile(wmap, (n_batch, 1))                                   # (n*h, w*c)

    msum = np.zeros((n_batch, n_batch * h2), np.float32)   # per-sample row sums
    for bi in range(n_batch):
        msum[bi, bi * h2:(bi + 1) * h2] = 1.0

    bfc = np.asarray(params["bfc"], np.float32).reshape(1, 1)

    to = jnp.asarray
    return {"r1": to(r1), "cw1": to(cw1), "b1t": to(b1t),
            "r2": to(r2), "cw2": to(cw2), "b2t": to(b2t),
            "wfc_map": to(wmap), "msum": to(msum), "bfc2d": to(bfc)}


# ----------------------------------------------------------------------------
# Parameter init (PyTorch-like uniform(-1/sqrt(fan_in), 1/sqrt(fan_in)))
# ----------------------------------------------------------------------------
def init_params(key):
    ks = jax.random.split(key, 6)

    def u(k, shape, fan_in):
        bound = 1.0 / np.sqrt(fan_in)
        return jax.random.uniform(k, shape, jnp.float32, -bound, bound)

    return {
        "w1": u(ks[0], (16, 4, 3, 3), 4 * 3 * 3),
        "b1": u(ks[1], (16,), 4 * 3 * 3),
        "w2": u(ks[2], (32, 16, 3, 3), 16 * 3 * 3),
        "b2": u(ks[3], (32,), 16 * 3 * 3),
        "wfc": u(ks[4], (1, 32 * 5 * 5), 32 * 5 * 5),
        "bfc": u(ks[5], (1,), 32 * 5 * 5),
    }


# ----------------------------------------------------------------------------
# Pure-JAX reference (for correctness check)
# ----------------------------------------------------------------------------
def _ref_forward(x_nchw, p):
    def conv(x, w, b, stride, padding):
        y = jax.lax.conv_general_dilated(
            x, w, window_strides=(stride, stride),
            padding=((padding, padding), (padding, padding)),
            dimension_numbers=("NCHW", "OIHW", "NCHW"))
        return jnp.maximum(y + b[None, :, None, None], 0.0)

    x = conv(x_nchw, p["w1"], p["b1"], 2, 1)
    x = conv(x, p["w2"], p["b2"], 2, 1)
    x = x.reshape(x.shape[0], -1)
    return x @ p["wfc"].T + p["bfc"]


if __name__ == "__main__":
    key = jax.random.PRNGKey(0)
    k_param, k_x = jax.random.split(key)
    params = init_params(k_param)
    x = jax.random.normal(k_x, (2, 4, 20, 20), dtype=jnp.float32)   # NCHW

    prepped = prepare_params(params, n_batch=2, h_in=20, w_in=20)   # one-time prep
    fwd = jax.jit(cnn_ws4_forward)

    out = jax.block_until_ready(fwd(x, prepped))
    assert out.shape == (2, 1), out.shape

    ref = jax.block_until_ready(_ref_forward(x, params))
    np.testing.assert_allclose(np.asarray(out), np.asarray(ref),
                               rtol=1e-3, atol=1e-4)

    print("KERNEL_OK")
</pallas_src>

<mosaic_0001>
module attributes {stable_mosaic.version = 11 : i64} {
  func.func @_cnn_ws4_fused_kernel(%arg0: memref<40x80xf32, #tpu.memory_space<vmem>>, %arg1: memref<3x20x40xf32, #tpu.memory_space<vmem>>, %arg2: memref<9x80x160xf32, #tpu.memory_space<vmem>>, %arg3: memref<1x160xf32, #tpu.memory_space<vmem>>, %arg4: memref<3x10x20xf32, #tpu.memory_space<vmem>>, %arg5: memref<9x160x160xf32, #tpu.memory_space<vmem>>, %arg6: memref<1x160xf32, #tpu.memory_space<vmem>>, %arg7: memref<10x160xf32, #tpu.memory_space<vmem>>, %arg8: memref<2x10xf32, #tpu.memory_space<vmem>>, %arg9: memref<1x1xf32, #tpu.memory_space<vmem>>, %arg10: memref<2x1xf32, #tpu.memory_space<vmem>>) attributes {dimension_semantics = [], scalar_prefetch = 0 : i64, scratch_operands = 0 : i64, tpu.core_type = #tpu.core_type<tc>} {
    %c0 = arith.constant 0 : index
    %c0_0 = arith.constant 0 : index
    %0 = vector.load %arg0[%c0, %c0_0] : memref<40x80xf32, #tpu.memory_space<vmem>>, vector<40x80xf32>
    %c0_1 = arith.constant 0 : index
    %c0_2 = arith.constant 0 : index
    %c0_3 = arith.constant 0 : index
    %1 = vector.load %arg1[%c0_1, %c0_2, %c0_3] : memref<3x20x40xf32, #tpu.memory_space<vmem>>, vector<1x20x40xf32>
    %2 = vector.shape_cast %1 : vector<1x20x40xf32> to vector<20x40xf32>
    %cst = arith.constant dense<0.000000e+00> : vector<20x80xf32>
    %3 = tpu.matmul %2, %0, %cst {dimension_numbers = #tpu.dot_dimension_numbers<[1], [0], [0], [1], [0, 0, 1, 1], [], []>} : vector<20x40xf32>, vector<40x80xf32>, vector<20x80xf32> -> vector<20x80xf32>
    %c0_4 = arith.constant 0 : index
    %c0_5 = arith.constant 0 : index
    %c0_6 = arith.constant 0 : index
    %4 = vector.load %arg2[%c0_4, %c0_5, %c0_6] : memref<9x80x160xf32, #tpu.memory_space<vmem>>, vector<1x80x160xf32>
    %5 = vector.shape_cast %4 : vector<1x80x160xf32> to vector<80x160xf32>
    %cst_7 = arith.constant dense<0.000000e+00> : vector<20x160xf32>
    %6 = tpu.matmul %3, %5, %cst_7 {dimension_numbers = #tpu.dot_dimension_numbers<[1], [0], [0], [1], [0, 0, 1, 1], [], []>} : vector<20x80xf32>, vector<80x160xf32>, vector<20x160xf32> -> vector<20x160xf32>
    %c1 = arith.constant 1 : index
    %c0_8 = arith.constant 0 : index
    %c0_9 = arith.constant 0 : index
    %7 = vector.load %arg2[%c1, %c0_8, %c0_9] : memref<9x80x160xf32, #tpu.memory_space<vmem>>, vector<1x80x160xf32>
    %8 = vector.shape_cast %7 : vector<1x80x160xf32> to vector<80x160xf32>
    %cst_10 = arith.constant dense<0.000000e+00> : vector<20x160xf32>
    %9 = tpu.matmul %3, %8, %cst_10 {dimension_numbers = #tpu.dot_dimension_numbers<[1], [0], [0], [1], [0, 0, 1, 1], [], []>} : vector<20x80xf32>, vector<80x160xf32>, vector<20x160xf32> -> vector<20x160xf32>
    %10 = arith.addf %6, %9 : vector<20x160xf32>
    %c2 = arith.constant 2 : index
    %c0_11 = arith.constant 0 : index
    %c0_12 = arith.constant 0 : index
    %11 = vector.load %arg2[%c2, %c0_11, %c0_12] : memref<9x80x160xf32, #tpu.memory_space<vmem>>, vector<1x80x160xf32>
    %12 = vector.shape_cast %11 : vector<1x80x160xf32> to vector<80x160xf32>
    %cst_13 = arith.constant dense<0.000000e+00> : vector<20x160xf32>
    %13 = tpu.matmul %3, %12, %cst_13 {dimension_numbers = #tpu.dot_dimension_numbers<[1], [0], [0], [1], [0, 0, 1, 1], [], []>} : vector<20x80xf32>, vector<80x160xf32>, vector<20x160xf32> -> vector<20x160xf32>
    %14 = arith.addf %10, %13 : vector<20x160xf32>
    %c1_14 = arith.constant 1 : index
    %c0_15 = arith.constant 0 : index
    %c0_16 = arith.constant 0 : index
    %15 = vector.load %arg1[%c1_14, %c0_15, %c0_16] : memref<3x20x40xf32, #tpu.memory_space<vmem>>, vector<1x20x40xf32>
    %16 = vector.shape_cast %15 : vector<1x20x40xf32> to vector<20x40xf32>
    %cst_17 = arith.constant dense<0.000000e+00> : vector<20x80xf32>
    %17 = tpu.matmul %16, %0, %cst_17 {dimension_numbers = #tpu.dot_dimension_numbers<[1], [0], [0], [1], [0, 0, 1, 1], [], []>} : vector<20x40xf32>, vector<40x80xf32>, vector<20x80xf32> -> vector<20x80xf32>
    %c3 = arith.constant 3 : index
    %c0_18 = arith.constant 0 : index
    %c0_19 = arith.constant 0 : index
    %18 = vector.load %arg2[%c3, %c0_18, %c0_19] : memref<9x80x160xf32, #tpu.memory_space<vmem>>, vector<1x80x160xf32>
    %19 = vector.shape_cast %18 : vector<1x80x160xf32> to vector<80x160xf32>
    %cst_20 = arith.constant dense<0.000000e+00> : vector<20x160xf32>
    %20 = tpu.matmul %17, %19, %cst_20 {dimension_numbers = #tpu.dot_dimension_numbers<[1], [0], [0], [1], [0, 0, 1, 1], [], []>} : vector<20x80xf32>, vector<80x160xf32>, vector<20x160xf32> -> vector<20x160xf32>
    %21 = arith.addf %14, %20 : vector<20x160xf32>
    %c4 = arith.constant 4 : index
    %c0_21 = arith.constant 0 : index
    %c0_22 = arith.constant 0 : index
    %22 = vector.load %arg2[%c4, %c0_21, %c0_22] : memref<9x80x160xf32, #tpu.memory_space<vmem>>, vector<1x80x160xf32>
    %23 = vector.shape_cast %22 : vector<1x80x160xf32> to vector<80x160xf32>
    %cst_23 = arith.constant dense<0.000000e+00> : vector<20x160xf32>
    %24 = tpu.matmul %17, %23, %cst_23 {dimension_numbers = #tpu.dot_dimension_numbers<[1], [0], [0], [1], [0, 0, 1, 1], [], []>} : vector<20x80xf32>, vector<80x160xf32>, vector<20x160xf32> -> vector<20x160xf32>
    %25 = arith.addf %21, %24 : vector<20x160xf32>
    %c5 = arith.constant 5 : index
    %c0_24 = arith.constant 0 : index
    %c0_25 = arith.constant 0 : index
    %26 = vector.load %arg2[%c5, %c0_24, %c0_25] : memref<9x80x160xf32, #tpu.memory_space<vmem>>, vector<1x80x160xf32>
    %27 = vector.shape_cast %26 : vector<1x80x160xf32> to vector<80x160xf32>
    %cst_26 = arith.constant dense<0.000000e+00> : vector<20x160xf32>
    %28 = tpu.matmul %17, %27, %cst_26 {dimension_numbers = #tpu.dot_dimension_numbers<[1], [0], [0], [1], [0, 0, 1, 1], [], []>} : vector<20x80xf32>, vector<80x160xf32>, vector<20x160xf32> -> vector<20x160xf32>
    %29 = arith.addf %25, %28 : vector<20x160xf32>
    %c2_27 = arith.constant 2 : index
    %c0_28 = arith.constant 0 : index
    %c0_29 = arith.constant 0 : index
    %30 = vector.load %arg1[%c2_27, %c0_28, %c0_29] : memref<3x20x40xf32, #tpu.memory_space<vmem>>, vector<1x20x40xf32>
    %31 = vector.shape_cast %30 : vector<1x20x40xf32> to vector<20x40xf32>
    %cst_30 = arith.constant dense<0.000000e+00> : vector<20x80xf32>
    %32 = tpu.matmul %31, %0, %cst_30 {dimension_numbers = #tpu.dot_dimension_numbers<[1], [0], [0], [1], [0, 0, 1, 1], [], []>} : vector<20x40xf32>, vector<40x80xf32>, vector<20x80xf32> -> vector<20x80xf32>
    %c6 = arith.constant 6 : index
    %c0_31 = arith.constant 0 : index
    %c0_32 = arith.constant 0 : index
    %33 = vector.load %arg2[%c6, %c0_31, %c0_32] : memref<9x80x160xf32, #tpu.memory_space<vmem>>, vector<1x80x160xf32>
    %34 = vector.shape_cast %33 : vector<1x80x160xf32> to vector<80x160xf32>
    %cst_33 = arith.constant dense<0.000000e+00> : vector<20x160xf32>
    %35 = tpu.matmul %32, %34, %cst_33 {dimension_numbers = #tpu.dot_dimension_numbers<[1], [0], [0], [1], [0, 0, 1, 1], [], []>} : vector<20x80xf32>, vector<80x160xf32>, vector<20x160xf32> -> vector<20x160xf32>
    %36 = arith.addf %29, %35 : vector<20x160xf32>
    %c7 = arith.constant 7 : index
    %c0_34 = arith.constant 0 : index
    %c0_35 = arith.constant 0 : index
    %37 = vector.load %arg2[%c7, %c0_34, %c0_35] : memref<9x80x160xf32, #tpu.memory_space<vmem>>, vector<1x80x160xf32>
    %38 = vector.shape_cast %37 : vector<1x80x160xf32> to vector<80x160xf32>
    %cst_36 = arith.constant dense<0.000000e+00> : vector<20x160xf32>
    %39 = tpu.matmul %32, %38, %cst_36 {dimension_numbers = #tpu.dot_dimension_numbers<[1], [0], [0], [1], [0, 0, 1, 1], [], []>} : vector<20x80xf32>, vector<80x160xf32>, vector<20x160xf32> -> vector<20x160xf32>
    %40 = arith.addf %36, %39 : vector<20x160xf32>
    %c8 = arith.constant 8 : index
    %c0_37 = arith.constant 0 : index
    %c0_38 = arith.constant 0 : index
    %41 = vector.load %arg2[%c8, %c0_37, %c0_38] : memref<9x80x160xf32, #tpu.memory_space<vmem>>, vector<1x80x160xf32>
    %42 = vector.shape_cast %41 : vector<1x80x160xf32> to vector<80x160xf32>
    %cst_39 = arith.constant dense<0.000000e+00> : vector<20x160xf32>
    %43 = tpu.matmul %32, %42, %cst_39 {dimension_numbers = #tpu.dot_dimension_numbers<[1], [0], [0], [1], [0, 0, 1, 1], [], []>} : vector<20x80xf32>, vector<80x160xf32>, vector<20x160xf32> -> vector<20x160xf32>
    %44 = arith.addf %40, %43 : vector<20x160xf32>
    %c0_40 = arith.constant 0 : index
    %c0_41 = arith.constant 0 : index
    %45 = vector.load %arg3[%c0_40, %c0_41] : memref<1x160xf32, #tpu.memory_space<vmem>>, vector<1x160xf32>
    %46 = vector.broadcast %45 : vector<1x160xf32> to vector<20x160xf32>
    %47 = arith.addf %44, %46 : vector<20x160xf32>
    %cst_42 = arith.constant 0.000000e+00 : f32
    %48 = vector.broadcast %cst_42 : f32 to vector<20x160xf32>
    %49 = arith.maximumf %47, %48 : vector<20x160xf32>
    %c0_43 = arith.constant 0 : index
    %c0_44 = arith.constant 0 : index
    %c0_45 = arith.constant 0 : index
    %50 = vector.load %arg4[%c0_43, %c0_44, %c0_45] : memref<3x10x20xf32, #tpu.memory_space<vmem>>, vector<1x10x20xf32>
    %51 = vector.shape_cast %50 : vector<1x10x20xf32> to vector<10x20xf32>
    %cst_46 = arith.constant dense<0.000000e+00> : vector<10x160xf32>
    %52 = tpu.matmul %51, %49, %cst_46 {dimension_numbers = #tpu.dot_dimension_numbers<[1], [0], [0], [1], [0, 0, 1, 1], [], []>} : vector<10x20xf32>, vector<20x160xf32>, vector<10x160xf32> -> vector<10x160xf32>
    %c0_47 = arith.constant 0 : index
    %c0_48 = arith.constant 0 : index
    %c0_49 = arith.constant 0 : index
    %53 = vector.load %arg5[%c0_47, %c0_48, %c0_49] : memref<9x160x160xf32, #tpu.memory_space<vmem>>, vector<1x160x160xf32>
    %54 = vector.shape_cast %53 : vector<1x160x160xf32> to vector<160x160xf32>
    %cst_50 = arith.constant dense<0.000000e+00> : vector<10x160xf32>
    %55 = tpu.matmul %52, %54, %cst_50 {dimension_numbers = #tpu.dot_dimension_numbers<[1], [0], [0], [1], [0, 0, 1, 1], [], []>} : vector<10x160xf32>, vector<160x160xf32>, vector<10x160xf32> -> vector<10x160xf32>
    %c1_51 = arith.constant 1 : index
    %c0_52 = arith.constant 0 : index
    %c0_53 = arith.constant 0 : index
    %56 = vector.load %arg5[%c1_51, %c0_52, %c0_53] : memref<9x160x160xf32, #tpu.memory_space<vmem>>, vector<1x160x160xf32>
    %57 = vector.shape_cast %56 : vector<1x160x160xf32> to vector<160x160xf32>
    %cst_54 = arith.constant dense<0.000000e+00> : vector<10x160xf32>
    %58 = tpu.matmul %52, %57, %cst_54 {dimension_numbers = #tpu.dot_dimension_numbers<[1], [0], [0], [1], [0, 0, 1, 1], [], []>} : vector<10x160xf32>, vector<160x160xf32>, vector<10x160xf32> -> vector<10x160xf32>
    %59 = arith.addf %55, %58 : vector<10x160xf32>
    %c2_55 = arith.constant 2 : index
    %c0_56 = arith.constant 0 : index
    %c0_57 = arith.constant 0 : index
    %60 = vector.load %arg5[%c2_55, %c0_56, %c0_57] : memref<9x160x160xf32, #tpu.memory_space<vmem>>, vector<1x160x160xf32>
    %61 = vector.shape_cast %60 : vector<1x160x160xf32> to vector<160x160xf32>
    %cst_58 = arith.constant dense<0.000000e+00> : vector<10x160xf32>
    %62 = tpu.matmul %52, %61, %cst_58 {dimension_numbers = #tpu.dot_dimension_numbers<[1], [0], [0], [1], [0, 0, 1, 1], [], []>} : vector<10x160xf32>, vector<160x160xf32>, vector<10x160xf32> -> vector<10x160xf32>
    %63 = arith.addf %59, %62 : vector<10x160xf32>
    %c1_59 = arith.constant 1 : index
    %c0_60 = arith.constant 0 : index
    %c0_61 = arith.constant 0 : index
    %64 = vector.load %arg4[%c1_59, %c0_60, %c0_61] : memref<3x10x20xf32, #tpu.memory_space<vmem>>, vector<1x10x20xf32>
    %65 = vector.shape_cast %64 : vector<1x10x20xf32> to vector<10x20xf32>
    %cst_62 = arith.constant dense<0.000000e+00> : vector<10x160xf32>
    %66 = tpu.matmul %65, %49, %cst_62 {dimension_numbers = #tpu.dot_dimension_numbers<[1], [0], [0], [1], [0, 0, 1, 1], [], []>} : vector<10x20xf32>, vector<20x160xf32>, vector<10x160xf32> -> vector<10x160xf32>
    %c3_63 = arith.constant 3 : index
    %c0_64 = arith.constant 0 : index
    %c0_65 = arith.constant 0 : index
    %67 = vector.load %arg5[%c3_63, %c0_64, %c0_65] : memref<9x160x160xf32, #tpu.memory_space<vmem>>, vector<1x160x160xf32>
    %68 = vector.shape_cast %67 : vector<1x160x160xf32> to vector<160x160xf32>
    %cst_66 = arith.constant dense<0.000000e+00> : vector<10x160xf32>
    %69 = tpu.matmul %66, %68, %cst_66 {dimension_numbers = #tpu.dot_dimension_numbers<[1], [0], [0], [1], [0, 0, 1, 1], [], []>} : vector<10x160xf32>, vector<160x160xf32>, vector<10x160xf32> -> vector<10x160xf32>
    %70 = arith.addf %63, %69 : vector<10x160xf32>
    %c4_67 = arith.constant 4 : index
    %c0_68 = arith.constant 0 : index
    %c0_69 = arith.constant 0 : index
    %71 = vector.load %arg5[%c4_67, %c0_68, %c0_69] : memref<9x160x160xf32, #tpu.memory_space<vmem>>, vector<1x160x160xf32>
    %72 = vector.shape_cast %71 : vector<1x160x160xf32> to vector<160x160xf32>
    %cst_70 = arith.constant dense<0.000000e+00> : vector<10x160xf32>
    %73 = tpu.matmul %66, %72, %cst_70 {dimension_numbers = #tpu.dot_dimension_numbers<[1], [0], [0], [1], [0, 0, 1, 1], [], []>} : vector<10x160xf32>, vector<160x160xf32>, vector<10x160xf32> -> vector<10x160xf32>
    %74 = arith.addf %70, %73 : vector<10x160xf32>
    %c5_71 = arith.constant 5 : index
    %c0_72 = arith.constant 0 : index
    %c0_73 = arith.constant 0 : index
    %75 = vector.load %arg5[%c5_71, %c0_72, %c0_73] : memref<9x160x160xf32, #tpu.memory_space<vmem>>, vector<1x160x160xf32>
    %76 = vector.shape_cast %75 : vector<1x160x160xf32> to vector<160x160xf32>
    %cst_74 = arith.constant dense<0.000000e+00> : vector<10x160xf32>
    %77 = tpu.matmul %66, %76, %cst_74 {dimension_numbers = #tpu.dot_dimension_numbers<[1], [0], [0], [1], [0, 0, 1, 1], [], []>} : vector<10x160xf32>, vector<160x160xf32>, vector<10x160xf32> -> vector<10x160xf32>
    %78 = arith.addf %74, %77 : vector<10x160xf32>
    %c2_75 = arith.constant 2 : index
    %c0_76 = arith.constant 0 : index
    %c0_77 = arith.constant 0 : index
    %79 = vector.load %arg4[%c2_75, %c0_76, %c0_77] : memref<3x10x20xf32, #tpu.memory_space<vmem>>, vector<1x10x20xf32>
    %80 = vector.shape_cast %79 : vector<1x10x20xf32> to vector<10x20xf32>
    %cst_78 = arith.constant dense<0.000000e+00> : vector<10x160xf32>
    %81 = tpu.matmul %80, %49, %cst_78 {dimension_numbers = #tpu.dot_dimension_numbers<[1], [0], [0], [1], [0, 0, 1, 1], [], []>} : vector<10x20xf32>, vector<20x160xf32>, vector<10x160xf32> -> vector<10x160xf32>
    %c6_79 = arith.constant 6 : index
    %c0_80 = arith.constant 0 : index
    %c0_81 = arith.constant 0 : index
    %82 = vector.load %arg5[%c6_79, %c0_80, %c0_81] : memref<9x160x160xf32, #tpu.memory_space<vmem>>, vector<1x160x160xf32>
    %83 = vector.shape_cast %82 : vector<1x160x160xf32> to vector<160x160xf32>
    %cst_82 = arith.constant dense<0.000000e+00> : vector<10x160xf32>
    %84 = tpu.matmul %81, %83, %cst_82 {dimension_numbers = #tpu.dot_dimension_numbers<[1], [0], [0], [1], [0, 0, 1, 1], [], []>} : vector<10x160xf32>, vector<160x160xf32>, vector<10x160xf32> -> vector<10x160xf32>
    %85 = arith.addf %78, %84 : vector<10x160xf32>
    %c7_83 = arith.constant 7 : index
    %c0_84 = arith.constant 0 : index
    %c0_85 = arith.constant 0 : index
    %86 = vector.load %arg5[%c7_83, %c0_84, %c0_85] : memref<9x160x160xf32, #tpu.memory_space<vmem>>, vector<1x160x160xf32>
    %87 = vector.shape_cast %86 : vector<1x160x160xf32> to vector<160x160xf32>
    %cst_86 = arith.constant dense<0.000000e+00> : vector<10x160xf32>
    %88 = tpu.matmul %81, %87, %cst_86 {dimension_numbers = #tpu.dot_dimension_numbers<[1], [0], [0], [1], [0, 0, 1, 1], [], []>} : vector<10x160xf32>, vector<160x160xf32>, vector<10x160xf32> -> vector<10x160xf32>
    %89 = arith.addf %85, %88 : vector<10x160xf32>
    %c8_87 = arith.constant 8 : index
    %c0_88 = arith.constant 0 : index
    %c0_89 = arith.constant 0 : index
    %90 = vector.load %arg5[%c8_87, %c0_88, %c0_89] : memref<9x160x160xf32, #tpu.memory_space<vmem>>, vector<1x160x160xf32>
    %91 = vector.shape_cast %90 : vector<1x160x160xf32> to vector<160x160xf32>
    %cst_90 = arith.constant dense<0.000000e+00> : vector<10x160xf32>
    %92 = tpu.matmul %81, %91, %cst_90 {dimension_numbers = #tpu.dot_dimension_numbers<[1], [0], [0], [1], [0, 0, 1, 1], [], []>} : vector<10x160xf32>, vector<160x160xf32>, vector<10x160xf32> -> vector<10x160xf32>
    %93 = arith.addf %89, %92 : vector<10x160xf32>
    %c0_91 = arith.constant 0 : index
    %c0_92 = arith.constant 0 : index
    %94 = vector.load %arg6[%c0_91, %c0_92] : memref<1x160xf32, #tpu.memory_space<vmem>>, vector<1x160xf32>
    %95 = vector.broadcast %94 : vector<1x160xf32> to vector<10x160xf32>
    %96 = arith.addf %93, %95 : vector<10x160xf32>
    %cst_93 = arith.constant 0.000000e+00 : f32
    %97 = vector.broadcast %cst_93 : f32 to vector<10x160xf32>
    %98 = arith.maximumf %96, %97 : vector<10x160xf32>
    %c0_94 = arith.constant 0 : index
    %c0_95 = arith.constant 0 : index
    %99 = vector.load %arg7[%c0_94, %c0_95] : memref<10x160xf32, #tpu.memory_space<vmem>>, vector<10x160xf32>
    %100 = arith.mulf %98, %99 : vector<10x160xf32>
    %c0_96 = arith.constant 0 : index
    %c0_97 = arith.constant 0 : index
    %101 = vector.load %arg8[%c0_96, %c0_97] : memref<2x10xf32, #tpu.memory_space<vmem>>, vector<2x10xf32>
    %cst_98 = arith.constant dense<0.000000e+00> : vector<2x160xf32>
    %102 = tpu.matmul %101, %100, %cst_98 {dimension_numbers = #tpu.dot_dimension_numbers<[1], [0], [0], [1], [0, 0, 1, 1], [], []>} : vector<2x10xf32>, vector<10x160xf32>, vector<2x160xf32> -> vector<2x160xf32>
    %cst_99 = arith.constant dense<0.000000e+00> : vector<2xf32>
    %103 = vector.multi_reduction <add>, %102, %cst_99 [1] : vector<2x160xf32> to vector<2xf32>
    %104 = vector.shape_cast %103 : vector<2xf32> to vector<2x1xf32>
    %c0_100 = arith.constant 0 : index
    %c0_101 = arith.constant 0 : index
    %105 = vector.load %arg9[%c0_100, %c0_101] : memref<1x1xf32, #tpu.memory_space<vmem>>, vector<1x1xf32>
    %106 = vector.broadcast %105 : vector<1x1xf32> to vector<2x1xf32>
    %107 = arith.addf %104, %106 : vector<2x1xf32>
    %c0_102 = arith.constant 0 : index
    %c0_103 = arith.constant 0 : index
    %108 = vector.load %arg10[%c0_102, %c0_103] : memref<2x1xf32, #tpu.memory_space<vmem>>, vector<2x1xf32>
    tpu.vector_store %arg10[%c0_102, %c0_103], %107 {strides = array<i32>} : memref<2x1xf32, #tpu.memory_space<vmem>>, vector<2x1xf32>,
    return
  }
}

</mosaic_0001>

<llo_original>
// kernel: cnn_ws4_forward.1
$region0: #{cnn_ws4_forward.1}
  #allocation0 [shape = 'u32[]', space=smem, size = 0x4, offset = 0x4, fixed_abs, tag = 'smem constant byte address 0x4 - core index']
  #allocation1 [shape = 'u32[144,128]{1,0:T(1,128)}', space=vmem, size = 0x12000, scoped, tag = 'internal scratch']
  #allocation2 [shape = 'f32[1,1]{1,0:T(1,128)S(1)}', space=vmem, size = 0x200, scoped, tag = 'scoped memory for cnn_ws4_forward.1']
  %s0 = inlined_call_operand.vmem [shape: f32[40,80], index: 0, kind: input, shape index: {}]
  %s1 = inlined_call_operand.hbm [shape: f32[3,20,40], index: 1, kind: input, shape index: {}]
  %s2 = inlined_call_operand.hbm [shape: f32[9,80,160], index: 2, kind: input, shape index: {}]
  %s3 = inlined_call_operand.hbm [shape: f32[1,160], index: 3, kind: input, shape index: {}]
  %s4 = inlined_call_operand.vmem [shape: f32[3,10,20], index: 4, kind: input, shape index: {}]
  %s5 = inlined_call_operand.hbm [shape: f32[9,160,160], index: 5, kind: input, shape index: {}]
  %s6 = inlined_call_operand.hbm [shape: f32[1,160], index: 6, kind: input, shape index: {}]
  %s7 = inlined_call_operand.hbm [shape: f32[10,160], index: 7, kind: input, shape index: {}]
  %s8 = inlined_call_operand.hbm [shape: f32[2,10], index: 8, kind: input, shape index: {}]
  %s9 = inlined_call_operand.<no memory space> [shape: f32[1,1], index: 9, kind: input, shape index: {}]
  %s10 = inlined_call_operand.vmem [shape: f32[2,1], index: 10, kind: output, shape index: {}]
  %s11 = sld [smem:[#allocation0]]
  $region78: #{cnn_ws4_forward.1} parent=0
    _
  %s13 = ssub.s32 1, %s11
  %s14 = scalar_select 0, %s13, %s11
  %v15 = vstv %s9
  %16 = vst [vmem:[#allocation2] sm:$0x1] %v15
  $region1: #{cnn_ws4_forward.1} parent=0
    #allocation3 [shape = 'u8[36864]{0}', space=vmem, size = 0x9000, scoped, tag = 'input window, operand 1, single buffered']
    #allocation4 [shape = 's32[1]{0}', space=sflag, size = 0x4, scoped, tag = 'scoped memory for cnn_ws4_forward.1']
    #allocation5 [shape = 'u8[737280]{0}', space=vmem, size = 0xb4000, scoped, tag = 'input window, operand 2, single buffered']
    #allocation6 [shape = 's32[1]{0}', space=sflag, size = 0x4, scoped, tag = 'scoped memory for cnn_ws4_forward.1']
    #allocation7 [shape = 'u8[1024]{0}', space=vmem, size = 0x400, scoped, tag = 'input window, operand 3, single buffered']
    #allocation8 [shape = 'u8[1474560]{0}', space=vmem, size = 0x168000, scoped, tag = 'input window, operand 5, single buffered']
    #allocation9 [shape = 's32[1]{0}', space=sflag, size = 0x4, scoped, tag = 'scoped memory for cnn_ws4_forward.1']
    #allocation10 [shape = 'u8[1024]{0}', space=vmem, size = 0x400, scoped, tag = 'input window, operand 6, single buffered']
    #allocation11 [shape = 'u8[16384]{0}', space=vmem, size = 0x4000, scoped, tag = 'input window, operand 7, single buffered']
    #allocation12 [shape = 's32[1]{0}', space=sflag, size = 0x4, scoped, tag = 'scoped memory for cnn_ws4_forward.1']
    #allocation13 [shape = 'u8[1024]{0}', space=vmem, size = 0x400, scoped, tag = 'input window, operand 8, single buffered']
    %17 = vsyncpa [#allocation4], 0
    %18 = vsyncpa [#allocation6], 0
    %19 = vsyncpa [#allocation9], 0
    %20 = vsyncpa [#allocation12], 0
    // Predicated region
    $region2: #{cnn_ws4_forward.1} parent=1 // pred_check
      _
    $region3: #{cnn_ws4_forward.1} parent=1 // pred_check_branch
      %22 = sbr.rel (0) target = $region5
    $region4: #{cnn_ws4_forward.1} parent=1 // pred_region
      _
    $region5: #{cnn_ws4_forward.1} parent=1 // pred_fallthru
      _
    // Predicated region
    $region6: #{cnn_ws4_forward.1} parent=1 // pred_check
      _
    $region7: #{cnn_ws4_forward.1} parent=1 // pred_check_branch
      %24 = sbr.rel (0) target = $region9
    $region8: #{cnn_ws4_forward.1} parent=1 // pred_region
      %s26 = ssub.s32 1152, 1152
      %27 = vsyncadd [#allocation4], %s26
      %s28 = sshll.u32 [#allocation3], 4
      %s29 = int_to_ptr.vmem [resolvable:$true] %s28
      %34 = dma.hbm_to_vmem [thread:$0]  %s1, 1152, %s29, [#allocation4], 128, 128, 8
    $region9: #{cnn_ws4_forward.1} parent=1 // pred_fallthru
      _
    // Predicated region
    $region10: #{cnn_ws4_forward.1} parent=1 // pred_check
      _
    $region11: #{cnn_ws4_forward.1} parent=1 // pred_check_branch
      %36 = sbr.rel (0) target = $region13
    $region12: #{cnn_ws4_forward.1} parent=1 // pred_region
      %s38 = ssub.s32 23040, 23040
      %39 = vsyncadd [#allocation6], %s38
      %s40 = sshll.u32 [#allocation5], 4
      %s41 = int_to_ptr.vmem [resolvable:$true] %s40
      %46 = dma.hbm_to_vmem [thread:$0]  %s2, 23040, %s41, [#allocation6], 256, 256, 16
    $region13: #{cnn_ws4_forward.1} parent=1 // pred_fallthru
      _
    // Predicated region
    $region14: #{cnn_ws4_forward.1} parent=1 // pred_check
      _
    $region15: #{cnn_ws4_forward.1} parent=1 // pred_check_branch
      %48 = sbr.rel (0) target = $region17
    $region16: #{cnn_ws4_forward.1} parent=1 // pred_region
      %s50 = ssub.s32 32, 32
      %51 = vsyncadd [#allocation6], %s50
      %s53 = sshll.u32 [#allocation7], 4
      %s54 = int_to_ptr.vmem [resolvable:$true] %s53
      %56 = dma.hbm_to_vmem [thread:$0]  %s3, 32, %s54, [#allocation6]
    $region17: #{cnn_ws4_forward.1} parent=1 // pred_fallthru
      _
    // Predicated region
    $region18: #{cnn_ws4_forward.1} parent=1 // pred_check
      _
    $region19: #{cnn_ws4_forward.1} parent=1 // pred_check_branch
      %58 = sbr.rel (0) target = $region21
    $region20: #{cnn_ws4_forward.1} parent=1 // pred_region
      _
    $region21: #{cnn_ws4_forward.1} parent=1 // pred_fallthru
      _
    // Predicated region
    $region22: #{cnn_ws4_forward.1} parent=1 // pred_check
      _
    $region23: #{cnn_ws4_forward.1} parent=1 // pred_check_branch
      %60 = sbr.rel (0) target = $region25
    $region24: #{cnn_ws4_forward.1} parent=1 // pred_region
      %s62 = ssub.s32 46080, 46080
      %63 = vsyncadd [#allocation9], %s62
      %s64 = sshll.u32 [#allocation8], 4
      %s65 = int_to_ptr.vmem [resolvable:$true] %s64
      %70 = dma.hbm_to_vmem [thread:$0]  %s5, 46080, %s65, [#allocation9], 256, 256, 16
    $region25: #{cnn_ws4_forward.1} parent=1 // pred_fallthru
      _
    // Predicated region
    $region26: #{cnn_ws4_forward.1} parent=1 // pred_check
      _
    $region27: #{cnn_ws4_forward.1} parent=1 // pred_check_branch
      %72 = sbr.rel (0) target = $region29
    $region28: #{cnn_ws4_forward.1} parent=1 // pred_region
      %s74 = ssub.s32 32, 32
      %75 = vsyncadd [#allocation9], %s74
      %s77 = sshll.u32 [#allocation10], 4
      %s78 = int_to_ptr.vmem [resolvable:$true] %s77
      %80 = dma.hbm_to_vmem [thread:$0]  %s6, 32, %s78, [#allocation9]
    $region29: #{cnn_ws4_forward.1} parent=1 // pred_fallthru
      _
    // Predicated region
    $region30: #{cnn_ws4_forward.1} parent=1 // pred_check
      _
    $region31: #{cnn_ws4_forward.1} parent=1 // pred_check_branch
      %82 = sbr.rel (0) target = $region33
    $region32: #{cnn_ws4_forward.1} parent=1 // pred_region
      %s84 = ssub.s32 512, 512
      %85 = vsyncadd [#allocation12], %s84
      %s86 = sshll.u32 [#allocation11], 4
      %s87 = int_to_ptr.vmem [resolvable:$true] %s86
      %92 = dma.hbm_to_vmem [thread:$0]  %s7, 512, %s87, [#allocation12], 256, 256, 16
    $region33: #{cnn_ws4_forward.1} parent=1 // pred_fallthru
      _
    // Predicated region
    $region34: #{cnn_ws4_forward.1} parent=1 // pred_check
      _
    $region35: #{cnn_ws4_forward.1} parent=1 // pred_check_branch
      %94 = sbr.rel (0) target = $region37
    $region36: #{cnn_ws4_forward.1} parent=1 // pred_region
      %s96 = ssub.s32 32, 32
      %97 = vsyncadd [#allocation12], %s96
      %s99 = sshll.u32 [#allocation13], 4
      %s100 = int_to_ptr.vmem [resolvable:$true] %s99
      %102 = dma.hbm_to_vmem [thread:$0]  %s8, 32, %s100, [#allocation12]
    $region37: #{cnn_ws4_forward.1} parent=1 // pred_fallthru
      _
    // Predicated region
    $region38: #{cnn_ws4_forward.1} parent=1 // pred_check
      _
    $region39: #{cnn_ws4_forward.1} parent=1 // pred_check_branch
      %104 = sbr.rel (0) target = $region41
    $region40: #{cnn_ws4_forward.1} parent=1 // pred_region
      _
    $region41: #{cnn_ws4_forward.1} parent=1 // pred_fallthru
      _
    // Predicated region
    $region42: #{cnn_ws4_forward.1} parent=1 // pred_check
      _
    $region43: #{cnn_ws4_forward.1} parent=1 // pred_check_branch
      %106 = sbr.rel (0) target = $region45
    $region44: #{cnn_ws4_forward.1} parent=1 // pred_region
      %107 = dma.done [#allocation4], 1152
    $region45: #{cnn_ws4_forward.1} parent=1 // pred_fallthru
      _
    // Predicated region
    $region46: #{cnn_ws4_forward.1} parent=1 // pred_check
      _
    $region47: #{cnn_ws4_forward.1} parent=1 // pred_check_branch
      %109 = sbr.rel (0) target = $region49
    $region48: #{cnn_ws4_forward.1} parent=1 // pred_region
      %110 = dma.done [#allocation6], 23040
    $region49: #{cnn_ws4_forward.1} parent=1 // pred_fallthru
      _
    // Predicated region
    $region50: #{cnn_ws4_forward.1} parent=1 // pred_check
      _
    $region51: #{cnn_ws4_forward.1} parent=1 // pred_check_branch
      %112 = sbr.rel (0) target = $region53
    $region52: #{cnn_ws4_forward.1} parent=1 // pred_region
      %113 = dma.done [#allocation6], 32
    $region53: #{cnn_ws4_forward.1} parent=1 // pred_fallthru
      _
    // Predicated region
    $region54: #{cnn_ws4_forward.1} parent=1 // pred_check
      _
    $region55: #{cnn_ws4_forward.1} parent=1 // pred_check_branch
      %115 = sbr.rel (0) target = $region57
    $region56: #{cnn_ws4_forward.1} parent=1 // pred_region
      %116 = dma.done [#allocation9], 46080
    $region57: #{cnn_ws4_forward.1} parent=1 // pred_fallthru
      _
    // Predicated region
    $region58: #{cnn_ws4_forward.1} parent=1 // pred_check
      _
    $region59: #{cnn_ws4_forward.1} parent=1 // pred_check_branch
      %118 = sbr.rel (0) target = $region61
    $region60: #{cnn_ws4_forward.1} parent=1 // pred_region
      %119 = dma.done [#allocation9], 32
    $region61: #{cnn_ws4_forward.1} parent=1 // pred_fallthru
      _
    // Predicated region
    $region62: #{cnn_ws4_forward.1} parent=1 // pred_check
      _
    $region63: #{cnn_ws4_forward.1} parent=1 // pred_check_branch
      %121 = sbr.rel (0) target = $region65
    $region64: #{cnn_ws4_forward.1} parent=1 // pred_region
      %122 = dma.done [#allocation12], 512
    $region65: #{cnn_ws4_forward.1} parent=1 // pred_fallthru
      _
    // Predicated region
    $region66: #{cnn_ws4_forward.1} parent=1 // pred_check
      _
    $region67: #{cnn_ws4_forward.1} parent=1 // pred_check_branch
      %124 = sbr.rel (0) target = $region69
    $region68: #{cnn_ws4_forward.1} parent=1 // pred_region
      %125 = dma.done [#allocation12], 32
    $region69: #{cnn_ws4_forward.1} parent=1 // pred_fallthru
      _
    %v126 = vld [vmem:[%s0] sm:$0xff]
    %v127 = vld [vmem:[%s0 + $0x8] sm:$0xff]
    %v128 = vld [vmem:[%s0 + $0x10] sm:$0xff]
    %v129 = vld [vmem:[%s0 + $0x18] sm:$0xff]
    %v130 = vld [vmem:[%s0 + $0x20] sm:$0xff]
    %v131 = vld [vmem:[#allocation3] sm:$0xff]
    %v132 = vld [vmem:[#allocation3 + $0x8] sm:$0xff]
    %v133 = vld [vmem:[#allocation3 + $0x10] sm:$0xf]
    %vm134 = vcmask 326656
    %v136 = vsel %vm134, %v131, 0
    %v139 = vsel %vm134, %v132, 0
    %v142 = vsel %vm134, %v133, 0
    %144 = vmatprep.subr.mxu0 0.0
    %145 = vmatpush1.msra.mxu0 0.0
    %146 = vmatprep.subr.mxu0 0.0
    %147 = vmatpush1.msra.mxu0 0.0
    %148 = vmatprep.subr.mxu0 0.0
    %149 = vmatpush1.msra.mxu0 0.0
    %150 = vmatprep.subr.mxu0 0.0
    %151 = vmatpush1.msra.mxu0 0.0
    %152 = vmatprep.subr.mxu0 0.0
    %153 = vmatpush1.msra.mxu0 0.0
    %154 = vmatprep.subr.mxu0 0.0
    %155 = vmatpush1.msra.mxu0 0.0
    %156 = vmatprep.subr.mxu0 0.0
    %157 = vmatpush1.msra.mxu0 0.0
    %158 = vmatprep.subr.mxu0 0.0
    %159 = vmatpush1.msra.mxu0 0.0
    %160 = vmatprep.subr.mxu0 0.0
    %161 = vmatpush1.msra.mxu0 0.0
    %162 = vmatprep.subr.mxu0 0.0
    %163 = vmatpush1.msra.mxu0 0.0
    %164 = vmatprep.subr.mxu0 0.0
    %165 = vmatpush1.msra.mxu0 0.0
    %166 = vmatprep.subr.mxu0 0.0
    %167 = vmatpush1.msra.mxu0 %v130
    %168 = vmatprep.subr.mxu0 0.0
    %169 = vmatpush1.msra.mxu0 %v129
    %170 = vmatprep.subr.mxu0 0.0
    %171 = vmatpush1.msra.mxu0 %v128
    %172 = vmatprep.subr.mxu0 0.0
    %173 = vmatpush1.msra.mxu0 %v127
    %174 = vmatprep.subr.mxu0 0.0
    %175 = vmatpush1.msra.mxu0 %v126
    %176 = vmatprep.subr.mxu0 0.0
    %177 = vmatpush2.msra.mxu0 0.0
    %178 = vmatprep.subr.mxu0 0.0
    %179 = vmatpush2.msra.mxu0 0.0
    %180 = vmatprep.subr.mxu0 0.0
    %181 = vmatpush2.msra.mxu0 0.0
    %182 = vmatprep.subr.mxu0 0.0
    %183 = vmatpush2.msra.mxu0 0.0
    %184 = vmatprep.subr.mxu0 0.0
    %185 = vmatpush2.msra.mxu0 0.0
    %186 = vmatprep.subr.mxu0 0.0
    %187 = vmatpush2.msra.mxu0 0.0
    %188 = vmatprep.subr.mxu0 0.0
    %189 = vmatpush2.msra.mxu0 0.0
    %190 = vmatprep.subr.mxu0 0.0
    %191 = vmatpush2.msra.mxu0 0.0
    %192 = vmatprep.subr.mxu0 0.0
    %193 = vmatpush2.msra.mxu0 0.0
    %194 = vmatprep.subr.mxu0 0.0
    %195 = vmatpush2.msra.mxu0 0.0
    %196 = vmatprep.subr.mxu0 0.0
    %197 = vmatpush2.msra.mxu0 0.0
    %198 = vmatprep.subr.mxu0 0.0
    %199 = vmatpush2.msra.mxu0 0.0
    %200 = vmatprep.subr.mxu0 0.0
    %201 = vmatpush2.msra.mxu0 0.0
    %202 = vmatprep.subr.mxu0 0.0
    %203 = vmatpush2.msra.mxu0 0.0
    %204 = vmatprep.subr.mxu0 0.0
    %205 = vmatpush2.msra.mxu0 0.0
    %206 = vmatprep.subr.mxu0 0.0
    %207 = vmatpush2.msra.mxu0 0.0
    %208 = vmatprep.mubr.f32.mxu0 0.0
    %209 = vmatmul.mubr.f32.gmra.mxu0 %v136
    %v210 = vpop.f32.mrf.mxu0
    %v211 = vadd.f32 0.0, %v210
    %v212 = vpop.f32.mrf.mxu0
    %213 = vmatprep.mubr.f32.mxu0 0.0
    %214 = vmatmul.mubr.f32.gmra.mxu0 %v139
    %v215 = vpop.f32.mrf.mxu0
    %v216 = vadd.f32 0.0, %v215
    %v217 = vpop.f32.mrf.mxu0
    %218 = vmatprep.mubr.f32.mxu0 0.0
    %219 = vmatmul.mubr.f32.gmra.mxu0 %v142
    %v220 = vpop.f32.mrf.mxu0
    %v221 = vadd.f32 0.0, %v220
    %v222 = vpop.f32.mrf.mxu0
    %223 = vdwg.mxu0
    %v224 = vld [vmem:[#allocation5] sm:$0xff]
    %v225 = vld [vmem:[#allocation5 + $0x8] sm:$0xff]
    %v226 = vld [vmem:[#allocation5 + $0x10] sm:$0xff]
    %v227 = vld [vmem:[#allocation5 + $0x18] sm:$0xff]
    %v228 = vld [vmem:[#allocation5 + $0x20] sm:$0xff]
    %v229 = vld [vmem:[#allocation5 + $0x28] sm:$0xff]
    %v230 = vld [vmem:[#allocation5 + $0x30] sm:$0xff]
    %v231 = vld [vmem:[#allocation5 + $0x38] sm:$0xff]
    %v232 = vld [vmem:[#allocation5 + $0x40] sm:$0xff]
    %v233 = vld [vmem:[#allocation5 + $0x48] sm:$0xff]
    %v234 = vld [vmem:[#allocation5 + $0x50] sm:$0xff]
    %v235 = vld [vmem:[#allocation5 + $0x58] sm:$0xff]
    %v236 = vld [vmem:[#allocation5 + $0x60] sm:$0xff]
    %v237 = vld [vmem:[#allocation5 + $0x68] sm:$0xff]
    %v238 = vld [vmem:[#allocation5 + $0x70] sm:$0xff]
    %v239 = vld [vmem:[#allocation5 + $0x78] sm:$0xff]
    %v240 = vld [vmem:[#allocation5 + $0x80] sm:$0xff]
    %v241 = vld [vmem:[#allocation5 + $0x88] sm:$0xff]
    %v242 = vld [vmem:[#allocation5 + $0x90] sm:$0xff]
    %v243 = vld [vmem:[#allocation5 + $0x98] sm:$0xff]
    %s244 = scalar_lea.vmem [#allocation5], 160
    %v245 = vld [vmem:[%s244] sm:$0xff]
    %v246 = vld [vmem:[%s244 + $0x8] sm:$0xff]
    %v247 = vld [vmem:[%s244 + $0x10] sm:$0xff]
    %v248 = vld [vmem:[%s244 + $0x18] sm:$0xff]
    %v249 = vld [vmem:[%s244 + $0x20] sm:$0xff]
    %v250 = vld [vmem:[%s244 + $0x28] sm:$0xff]
    %v251 = vld [vmem:[%s244 + $0x30] sm:$0xff]
    %v252 = vld [vmem:[%s244 + $0x38] sm:$0xff]
    %v253 = vld [vmem:[%s244 + $0x40] sm:$0xff]
    %v254 = vld [vmem:[%s244 + $0x48] sm:$0xff]
    %v255 = vld [vmem:[%s244 + $0x50] sm:$0xff]
    %v256 = vld [vmem:[%s244 + $0x58] sm:$0xff]
    %v257 = vld [vmem:[%s244 + $0x60] sm:$0xff]
    %v258 = vld [vmem:[%s244 + $0x68] sm:$0xff]
    %v259 = vld [vmem:[%s244 + $0x70] sm:$0xff]
    %v260 = vld [vmem:[%s244 + $0x78] sm:$0xff]
    %v261 = vld [vmem:[%s244 + $0x80] sm:$0xff]
    %v262 = vld [vmem:[%s244 + $0x88] sm:$0xff]
    %v263 = vld [vmem:[%s244 + $0x90] sm:$0xff]
    %v264 = vld [vmem:[%s244 + $0x98] sm:$0xff]
    %vm265 = vcmask 654336
    %v267 = vsel %vm265, %v211, 0
    %v270 = vsel %vm265, %v216, 0
    %v273 = vsel %vm265, %v221, 0
    %275 = vmatprep.subr.mxu0 0.0
    %276 = vmatpush1.msra.mxu0 0.0
    %277 = vmatprep.subr.mxu0 0.0
    %278 = vmatpush1.msra.mxu0 0.0
    %279 = vmatprep.subr.mxu0 0.0
    %280 = vmatpush1.msra.mxu0 0.0
    %281 = vmatprep.subr.mxu0 0.0
    %282 = vmatpush1.msra.mxu0 0.0
    %283 = vmatprep.subr.mxu0 0.0
    %284 = vmatpush1.msra.mxu0 0.0
    %285 = vmatprep.subr.mxu0 0.0
    %286 = vmatpush1.msra.mxu0 0.0
    %287 = vmatprep.subr.mxu0 %v264
    %288 = vmatpush1.msra.mxu0 %v263
    %289 = vmatprep.subr.mxu0 %v262
    %290 = vmatpush1.msra.mxu0 %v261
    %291 = vmatprep.subr.mxu0 %v260
    %292 = vmatpush1.msra.mxu0 %v259
    %293 = vmatprep.subr.mxu0 %v258
    %294 = vmatpush1.msra.mxu0 %v257
    %295 = vmatprep.subr.mxu0 %v256
    %296 = vmatpush1.msra.mxu0 %v255
    %297 = vmatprep.subr.mxu0 %v254
    %298 = vmatpush1.msra.mxu0 %v253
    %299 = vmatprep.subr.mxu0 %v252
    %300 = vmatpush1.msra.mxu0 %v251
    %301 = vmatprep.subr.mxu0 %v250
    %302 = vmatpush1.msra.mxu0 %v249
    %303 = vmatprep.subr.mxu0 %v248
    %304 = vmatpush1.msra.mxu0 %v247
    %305 = vmatprep.subr.mxu0 %v246
    %306 = vmatpush1.msra.mxu0 %v245
    %307 = vmatprep.subr.mxu0 0.0
    %308 = vmatpush2.msra.mxu0 0.0
    %309 = vmatprep.subr.mxu0 0.0
    %310 = vmatpush2.msra.mxu0 0.0
    %311 = vmatprep.subr.mxu0 0.0
    %312 = vmatpush2.msra.mxu0 0.0
    %313 = vmatprep.subr.mxu0 0.0
    %314 = vmatpush2.msra.mxu0 0.0
    %315 = vmatprep.subr.mxu0 0.0
    %316 = vmatpush2.msra.mxu0 0.0
    %317 = vmatprep.subr.mxu0 0.0
    %318 = vmatpush2.msra.mxu0 0.0
    %319 = vmatprep.subr.mxu0 0.0
    %320 = vmatpush2.msra.mxu0 0.0
    %321 = vmatprep.subr.mxu0 0.0
    %322 = vmatpush2.msra.mxu0 0.0
    %323 = vmatprep.subr.mxu0 0.0
    %324 = vmatpush2.msra.mxu0 0.0
    %325 = vmatprep.subr.mxu0 0.0
    %326 = vmatpush2.msra.mxu0 0.0
    %327 = vmatprep.subr.mxu0 0.0
    %328 = vmatpush2.msra.mxu0 0.0
    %329 = vmatprep.subr.mxu0 0.0
    %330 = vmatpush2.msra.mxu0 0.0
    %331 = vmatprep.subr.mxu0 0.0
    %332 = vmatpush2.msra.mxu0 0.0
    %333 = vmatprep.subr.mxu0 0.0
    %334 = vmatpush2.msra.mxu0 0.0
    %335 = vmatprep.subr.mxu0 0.0
    %336 = vmatpush2.msra.mxu0 0.0
    %337 = vmatprep.subr.mxu0 0.0
    %338 = vmatpush2.msra.mxu0 0.0
    %339 = vmatprep.mubr.f32.mxu0 0.0
    %340 = vmatmul.mubr.f32.gmra.mxu0 %v267
    %v341 = vpop.f32.mrf.mxu0
    %v342 = vadd.f32 0.0, %v341
    %v343 = vpop.f32.mrf.mxu0
    %v344 = vadd.f32 0.0, %v343
    %345 = vmatprep.mubr.f32.mxu0 0.0
    %346 = vmatmul.mubr.f32.gmra.mxu0 %v270
    %v347 = vpop.f32.mrf.mxu0
    %v348 = vadd.f32 0.0, %v347
    %v349 = vpop.f32.mrf.mxu0
    %v350 = vadd.f32 0.0, %v349
    %351 = vmatprep.mubr.f32.mxu0 0.0
    %352 = vmatmul.mubr.f32.gmra.mxu0 %v273
    %v353 = vpop.f32.mrf.mxu0
    %v354 = vadd.f32 0.0, %v353
    %v355 = vpop.f32.mrf.mxu0
    %v356 = vadd.f32 0.0, %v355
    %357 = vdwg.mxu0
    %358 = vmatprep.subr.mxu0 0.0
    %359 = vmatpush1.msra.mxu0 0.0
    %360 = vmatprep.subr.mxu0 0.0
    %361 = vmatpush1.msra.mxu0 0.0
    %362 = vmatprep.subr.mxu0 0.0
    %363 = vmatpush1.msra.mxu0 0.0
    %364 = vmatprep.subr.mxu0 0.0
    %365 = vmatpush1.msra.mxu0 0.0
    %366 = vmatprep.subr.mxu0 0.0
    %367 = vmatpush1.msra.mxu0 0.0
    %368 = vmatprep.subr.mxu0 0.0
    %369 = vmatpush1.msra.mxu0 0.0
    %370 = vmatprep.subr.mxu0 %v243
    %371 = vmatpush1.msra.mxu0 %v242
    %372 = vmatprep.subr.mxu0 %v241
    %373 = vmatpush1.msra.mxu0 %v240
    %374 = vmatprep.subr.mxu0 %v239
    %375 = vmatpush1.msra.mxu0 %v238
    %376 = vmatprep.subr.mxu0 %v237
    %377 = vmatpush1.msra.mxu0 %v236
    %378 = vmatprep.subr.mxu0 %v235
    %379 = vmatpush1.msra.mxu0 %v234
    %380 = vmatprep.subr.mxu0 %v233
    %381 = vmatpush1.msra.mxu0 %v232
    %382 = vmatprep.subr.mxu0 %v231
    %383 = vmatpush1.msra.mxu0 %v230
    %384 = vmatprep.subr.mxu0 %v229
    %385 = vmatpush1.msra.mxu0 %v228
    %386 = vmatprep.subr.mxu0 %v227
    %387 = vmatpush1.msra.mxu0 %v226
    %388 = vmatprep.subr.mxu0 %v225
    %389 = vmatpush1.msra.mxu0 %v224
    %390 = vmatprep.subr.mxu0 0.0
    %391 = vmatpush2.msra.mxu0 0.0
    %392 = vmatprep.subr.mxu0 0.0
    %393 = vmatpush2.msra.mxu0 0.0
    %394 = vmatprep.subr.mxu0 0.0
    %395 = vmatpush2.msra.mxu0 0.0
    %396 = vmatprep.subr.mxu0 0.0
    %397 = vmatpush2.msra.mxu0 0.0
    %398 = vmatprep.subr.mxu0 0.0
    %399 = vmatpush2.msra.mxu0 0.0
    %400 = vmatprep.subr.mxu0 0.0
    %401 = vmatpush2.msra.mxu0 0.0
    %402 = vmatprep.subr.mxu0 0.0
    %403 = vmatpush2.msra.mxu0 0.0
    %404 = vmatprep.subr.mxu0 0.0
    %405 = vmatpush2.msra.mxu0 0.0
    %406 = vmatprep.subr.mxu0 0.0
    %407 = vmatpush2.msra.mxu0 0.0
    %408 = vmatprep.subr.mxu0 0.0
    %409 = vmatpush2.msra.mxu0 0.0
    %410 = vmatprep.subr.mxu0 0.0
    %411 = vmatpush2.msra.mxu0 0.0
    %412 = vmatprep.subr.mxu0 0.0
    %413 = vmatpush2.msra.mxu0 0.0
    %414 = vmatprep.subr.mxu0 0.0
    %415 = vmatpush2.msra.mxu0 0.0
    %416 = vmatprep.subr.mxu0 0.0
    %417 = vmatpush2.msra.mxu0 0.0
    %418 = vmatprep.subr.mxu0 0.0
    %419 = vmatpush2.msra.mxu0 0.0
    %420 = vmatprep.subr.mxu0 0.0
    %421 = vmatpush2.msra.mxu0 0.0
    %422 = vmatprep.mubr.f32.mxu0 0.0
    %423 = vmatmul.mubr.f32.gmra.mxu0 %v267
    %v424 = vpop.f32.mrf.mxu0
    %v425 = vadd.f32 %v342, %v424
    %v426 = vpop.f32.mrf.mxu0
    %v427 = vadd.f32 %v344, %v426
    %428 = vmatprep.mubr.f32.mxu0 0.0
    %429 = vmatmul.mubr.f32.gmra.mxu0 %v270
    %v430 = vpop.f32.mrf.mxu0
    %v431 = vadd.f32 %v348, %v430
    %v432 = vpop.f32.mrf.mxu0
    %v433 = vadd.f32 %v350, %v432
    %434 = vmatprep.mubr.f32.mxu0 0.0
    %435 = vmatmul.mubr.f32.gmra.mxu0 %v273
    %v436 = vpop.f32.mrf.mxu0
    %v437 = vadd.f32 %v354, %v436
    %v438 = vpop.f32.mrf.mxu0
    %v439 = vadd.f32 %v356, %v438
    %440 = vdwg.mxu0
    %s441 = scalar_lea.vmem [#allocation5], 320
    %v442 = vld [vmem:[%s441] sm:$0xff]
    %v443 = vld [vmem:[%s441 + $0x8] sm:$0xff]
    %v444 = vld [vmem:[%s441 + $0x10] sm:$0xff]
    %v445 = vld [vmem:[%s441 + $0x18] sm:$0xff]
    %v446 = vld [vmem:[%s441 + $0x20] sm:$0xff]
    %v447 = vld [vmem:[%s441 + $0x28] sm:$0xff]
    %v448 = vld [vmem:[%s441 + $0x30] sm:$0xff]
    %v449 = vld [vmem:[%s441 + $0x38] sm:$0xff]
    %v450 = vld [vmem:[%s441 + $0x40] sm:$0xff]
    %v451 = vld [vmem:[%s441 + $0x48] sm:$0xff]
    %v452 = vld [vmem:[%s441 + $0x50] sm:$0xff]
    %v453 = vld [vmem:[%s441 + $0x58] sm:$0xff]
    %v454 = vld [vmem:[%s441 + $0x60] sm:$0xff]
    %v455 = vld [vmem:[%s441 + $0x68] sm:$0xff]
    %v456 = vld [vmem:[%s441 + $0x70] sm:$0xff]
    %v457 = vld [vmem:[%s441 + $0x78] sm:$0xff]
    %v458 = vld [vmem:[%s441 + $0x80] sm:$0xff]
    %v459 = vld [vmem:[%s441 + $0x88] sm:$0xff]
    %v460 = vld [vmem:[%s441 + $0x90] sm:$0xff]
    %v461 = vld [vmem:[%s441 + $0x98] sm:$0xff]
    %462 = vmatprep.subr.mxu0 0.0
    %463 = vmatpush1.msra.mxu0 0.0
    %464 = vmatprep.subr.mxu0 0.0
    %465 = vmatpush1.msra.mxu0 0.0
    %466 = vmatprep.subr.mxu0 0.0
    %467 = vmatpush1.msra.mxu0 0.0
    %468 = vmatprep.subr.mxu0 0.0
    %469 = vmatpush1.msra.mxu0 0.0
    %470 = vmatprep.subr.mxu0 0.0
    %471 = vmatpush1.msra.mxu0 0.0
    %472 = vmatprep.subr.mxu0 0.0
    %473 = vmatpush1.msra.mxu0 0.0
    %474 = vmatprep.subr.mxu0 %v461
    %475 = vmatpush1.msra.mxu0 %v460
    %476 = vmatprep.subr.mxu0 %v459
    %477 = vmatpush1.msra.mxu0 %v458
    %478 = vmatprep.subr.mxu0 %v457
    %479 = vmatpush1.msra.mxu0 %v456
    %480 = vmatprep.subr.mxu0 %v455
    %481 = vmatpush1.msra.mxu0 %v454
    %482 = vmatprep.subr.mxu0 %v453
    %483 = vmatpush1.msra.mxu0 %v452
    %484 = vmatprep.subr.mxu0 %v451
    %485 = vmatpush1.msra.mxu0 %v450
    %486 = vmatprep.subr.mxu0 %v449
    %487 = vmatpush1.msra.mxu0 %v448
    %488 = vmatprep.subr.mxu0 %v447
    %489 = vmatpush1.msra.mxu0 %v446
    %490 = vmatprep.subr.mxu0 %v445
    %491 = vmatpush1.msra.mxu0 %v444
    %492 = vmatprep.subr.mxu0 %v443
    %493 = vmatpush1.msra.mxu0 %v442
    %494 = vmatprep.subr.mxu0 0.0
    %495 = vmatpush2.msra.mxu0 0.0
    %496 = vmatprep.subr.mxu0 0.0
    %497 = vmatpush2.msra.mxu0 0.0
    %498 = vmatprep.subr.mxu0 0.0
    %499 = vmatpush2.msra.mxu0 0.0
    %500 = vmatprep.subr.mxu0 0.0
    %501 = vmatpush2.msra.mxu0 0.0
    %502 = vmatprep.subr.mxu0 0.0
    %503 = vmatpush2.msra.mxu0 0.0
    %504 = vmatprep.subr.mxu0 0.0
    %505 = vmatpush2.msra.mxu0 0.0
    %506 = vmatprep.subr.mxu0 0.0
    %507 = vmatpush2.msra.mxu0 0.0
    %508 = vmatprep.subr.mxu0 0.0
    %509 = vmatpush2.msra.mxu0 0.0
    %510 = vmatprep.subr.mxu0 0.0
    %511 = vmatpush2.msra.mxu0 0.0
    %512 = vmatprep.subr.mxu0 0.0
    %513 = vmatpush2.msra.mxu0 0.0
    %514 = vmatprep.subr.mxu0 0.0
    %515 = vmatpush2.msra.mxu0 0.0
    %516 = vmatprep.subr.mxu0 0.0
    %517 = vmatpush2.msra.mxu0 0.0
    %518 = vmatprep.subr.mxu0 0.0
    %519 = vmatpush2.msra.mxu0 0.0
    %520 = vmatprep.subr.mxu0 0.0
    %521 = vmatpush2.msra.mxu0 0.0
    %522 = vmatprep.subr.mxu0 0.0
    %523 = vmatpush2.msra.mxu0 0.0
    %524 = vmatprep.subr.mxu0 0.0
    %525 = vmatpush2.msra.mxu0 0.0
    %526 = vmatprep.mubr.f32.mxu0 0.0
    %527 = vmatmul.mubr.f32.gmra.mxu0 %v267
    %v528 = vpop.f32.mrf.mxu0
    %v529 = vadd.f32 0.0, %v528
    %v530 = vpop.f32.mrf.mxu0
    %v531 = vadd.f32 0.0, %v530
    %532 = vmatprep.mubr.f32.mxu0 0.0
    %533 = vmatmul.mubr.f32.gmra.mxu0 %v270
    %v534 = vpop.f32.mrf.mxu0
    %v535 = vadd.f32 0.0, %v534
    %v536 = vpop.f32.mrf.mxu0
    %v537 = vadd.f32 0.0, %v536
    %538 = vmatprep.mubr.f32.mxu0 0.0
    %539 = vmatmul.mubr.f32.gmra.mxu0 %v273
    %v540 = vpop.f32.mrf.mxu0
    %v541 = vadd.f32 0.0, %v540
    %v542 = vpop.f32.mrf.mxu0
    %v543 = vadd.f32 0.0, %v542
    %544 = vdwg.mxu0
    %v545 = vadd.f32 %v425, %v529
    %v546 = vadd.f32 %v427, %v531
    %v547 = vadd.f32 %v431, %v535
    %v548 = vadd.f32 %v433, %v537
    %v549 = vadd.f32 %v437, %v541
    %v550 = vadd.f32 %v439, %v543
    %s551 = scalar_lea.vmem [#allocation3], 24
    %v552 = vld [vmem:[%s551] sm:$0xff]
    %v553 = vld [vmem:[%s551 + $0x8] sm:$0xff]
    %v554 = vld [vmem:[%s551 + $0x10] sm:$0xf]
    %v556 = vsel %vm134, %v552, 0
    %v559 = vsel %vm134, %v553, 0
    %v562 = vsel %vm134, %v554, 0
    %564 = vmatprep.subr.mxu0 0.0
    %565 = vmatpush1.msra.mxu0 0.0
    %566 = vmatprep.subr.mxu0 0.0
    %567 = vmatpush1.msra.mxu0 0.0
    %568 = vmatprep.subr.mxu0 0.0
    %569 = vmatpush1.msra.mxu0 0.0
    %570 = vmatprep.subr.mxu0 0.0
    %571 = vmatpush1.msra.mxu0 0.0
    %572 = vmatprep.subr.mxu0 0.0
    %573 = vmatpush1.msra.mxu0 0.0
    %574 = vmatprep.subr.mxu0 0.0
    %575 = vmatpush1.msra.mxu0 0.0
    %576 = vmatprep.subr.mxu0 0.0
    %577 = vmatpush1.msra.mxu0 0.0
    %578 = vmatprep.subr.mxu0 0.0
    %579 = vmatpush1.msra.mxu0 0.0
    %580 = vmatprep.subr.mxu0 0.0
    %581 = vmatpush1.msra.mxu0 0.0
    %582 = vmatprep.subr.mxu0 0.0
    %583 = vmatpush1.msra.mxu0 0.0
    %584 = vmatprep.subr.mxu0 0.0
    %585 = vmatpush1.msra.mxu0 0.0
    %586 = vmatprep.subr.mxu0 0.0
    %587 = vmatpush1.msra.mxu0 %v130
    %588 = vmatprep.subr.mxu0 0.0
    %589 = vmatpush1.msra.mxu0 %v129
    %590 = vmatprep.subr.mxu0 0.0
    %591 = vmatpush1.msra.mxu0 %v128
    %592 = vmatprep.subr.mxu0 0.0
    %593 = vmatpush1.msra.mxu0 %v127
    %594 = vmatprep.subr.mxu0 0.0
    %595 = vmatpush1.msra.mxu0 %v126
    %596 = vmatprep.subr.mxu0 0.0
    %597 = vmatpush2.msra.mxu0 0.0
    %598 = vmatprep.subr.mxu0 0.0
    %599 = vmatpush2.msra.mxu0 0.0
    %600 = vmatprep.subr.mxu0 0.0
    %601 = vmatpush2.msra.mxu0 0.0
    %602 = vmatprep.subr.mxu0 0.0
    %603 = vmatpush2.msra.mxu0 0.0
    %604 = vmatprep.subr.mxu0 0.0
    %605 = vmatpush2.msra.mxu0 0.0
    %606 = vmatprep.subr.mxu0 0.0
    %607 = vmatpush2.msra.mxu0 0.0
    %608 = vmatprep.subr.mxu0 0.0
    %609 = vmatpush2.msra.mxu0 0.0
    %610 = vmatprep.subr.mxu0 0.0
    %611 = vmatpush2.msra.mxu0 0.0
    %612 = vmatprep.subr.mxu0 0.0
    %613 = vmatpush2.msra.mxu0 0.0
    %614 = vmatprep.subr.mxu0 0.0
    %615 = vmatpush2.msra.mxu0 0.0
    %616 = vmatprep.subr.mxu0 0.0
    %617 = vmatpush2.msra.mxu0 0.0
    %618 = vmatprep.subr.mxu0 0.0
    %619 = vmatpush2.msra.mxu0 0.0
    %620 = vmatprep.subr.mxu0 0.0
    %621 = vmatpush2.msra.mxu0 0.0
    %622 = vmatprep.subr.mxu0 0.0
    %623 = vmatpush2.msra.mxu0 0.0
    %624 = vmatprep.subr.mxu0 0.0
    %625 = vmatpush2.msra.mxu0 0.0
    %626 = vmatprep.subr.mxu0 0.0
    %627 = vmatpush2.msra.mxu0 0.0
    %628 = vmatprep.mubr.f32.mxu0 0.0
    %629 = vmatmul.mubr.f32.gmra.mxu0 %v556
    %v630 = vpop.f32.mrf.mxu0
    %v631 = vadd.f32 0.0, %v630
    %v632 = vpop.f32.mrf.mxu0
    %633 = vmatprep.mubr.f32.mxu0 0.0
    %634 = vmatmul.mubr.f32.gmra.mxu0 %v559
    %v635 = vpop.f32.mrf.mxu0
    %v636 = vadd.f32 0.0, %v635
    %v637 = vpop.f32.mrf.mxu0
    %638 = vmatprep.mubr.f32.mxu0 0.0
    %639 = vmatmul.mubr.f32.gmra.mxu0 %v562
    %v640 = vpop.f32.mrf.mxu0
    %v641 = vadd.f32 0.0, %v640
    %v642 = vpop.f32.mrf.mxu0
    %643 = vdwg.mxu0
    %s644 = scalar_lea.vmem [#allocation5], 480
    %v645 = vld [vmem:[%s644] sm:$0xff]
    %v646 = vld [vmem:[%s644 + $0x8] sm:$0xff]
    %v647 = vld [vmem:[%s644 + $0x10] sm:$0xff]
    %v648 = vld [vmem:[%s644 + $0x18] sm:$0xff]
    %v649 = vld [vmem:[%s644 + $0x20] sm:$0xff]
    %v650 = vld [vmem:[%s644 + $0x28] sm:$0xff]
    %v651 = vld [vmem:[%s644 + $0x30] sm:$0xff]
    %v652 = vld [vmem:[%s644 + $0x38] sm:$0xff]
    %v653 = vld [vmem:[%s644 + $0x40] sm:$0xff]
    %v654 = vld [vmem:[%s644 + $0x48] sm:$0xff]
    %v655 = vld [vmem:[%s644 + $0x50] sm:$0xff]
    %v656 = vld [vmem:[%s644 + $0x58] sm:$0xff]
    %v657 = vld [vmem:[%s644 + $0x60] sm:$0xff]
    %v658 = vld [vmem:[%s644 + $0x68] sm:$0xff]
    %v659 = vld [vmem:[%s644 + $0x70] sm:$0xff]
    %v660 = vld [vmem:[%s644 + $0x78] sm:$0xff]
    %v661 = vld [vmem:[%s644 + $0x80] sm:$0xff]
    %v662 = vld [vmem:[%s644 + $0x88] sm:$0xff]
    %v663 = vld [vmem:[%s644 + $0x90] sm:$0xff]
    %v664 = vld [vmem:[%s644 + $0x98] sm:$0xff]
    %v666 = vsel %vm265, %v631, 0
    %v669 = vsel %vm265, %v636, 0
    %v672 = vsel %vm265, %v641, 0
    %674 = vmatprep.subr.mxu0 0.0
    %675 = vmatpush1.msra.mxu0 0.0
    %676 = vmatprep.subr.mxu0 0.0
    %677 = vmatpush1.msra.mxu0 0.0
    %678 = vmatprep.subr.mxu0 0.0
    %679 = vmatpush1.msra.mxu0 0.0
    %680 = vmatprep.subr.mxu0 0.0
    %681 = vmatpush1.msra.mxu0 0.0
    %682 = vmatprep.subr.mxu0 0.0
    %683 = vmatpush1.msra.mxu0 0.0
    %684 = vmatprep.subr.mxu0 0.0
    %685 = vmatpush1.msra.mxu0 0.0
    %686 = vmatprep.subr.mxu0 %v664
    %687 = vmatpush1.msra.mxu0 %v663
    %688 = vmatprep.subr.mxu0 %v662
    %689 = vmatpush1.msra.mxu0 %v661
    %690 = vmatprep.subr.mxu0 %v660
    %691 = vmatpush1.msra.mxu0 %v659
    %692 = vmatprep.subr.mxu0 %v658
    %693 = vmatpush1.msra.mxu0 %v657
    %694 = vmatprep.subr.mxu0 %v656
    %695 = vmatpush1.msra.mxu0 %v655
    %696 = vmatprep.subr.mxu0 %v654
    %697 = vmatpush1.msra.mxu0 %v653
    %698 = vmatprep.subr.mxu0 %v652
    %699 = vmatpush1.msra.mxu0 %v651
    %700 = vmatprep.subr.mxu0 %v650
    %701 = vmatpush1.msra.mxu0 %v649
    %702 = vmatprep.subr.mxu0 %v648
    %703 = vmatpush1.msra.mxu0 %v647
    %704 = vmatprep.subr.mxu0 %v646
    %705 = vmatpush1.msra.mxu0 %v645
    %706 = vmatprep.subr.mxu0 0.0
    %707 = vmatpush2.msra.mxu0 0.0
    %708 = vmatprep.subr.mxu0 0.0
    %709 = vmatpush2.msra.mxu0 0.0
    %710 = vmatprep.subr.mxu0 0.0
    %711 = vmatpush2.msra.mxu0 0.0
    %712 = vmatprep.subr.mxu0 0.0
    %713 = vmatpush2.msra.mxu0 0.0
    %714 = vmatprep.subr.mxu0 0.0
    %715 = vmatpush2.msra.mxu0 0.0
    %716 = vmatprep.subr.mxu0 0.0
    %717 = vmatpush2.msra.mxu0 0.0
    %718 = vmatprep.subr.mxu0 0.0
    %719 = vmatpush2.msra.mxu0 0.0
    %720 = vmatprep.subr.mxu0 0.0
    %721 = vmatpush2.msra.mxu0 0.0
    %722 = vmatprep.subr.mxu0 0.0
    %723 = vmatpush2.msra.mxu0 0.0
    %724 = vmatprep.subr.mxu0 0.0
    %725 = vmatpush2.msra.mxu0 0.0
    %726 = vmatprep.subr.mxu0 0.0
    %727 = vmatpush2.msra.mxu0 0.0
    %728 = vmatprep.subr.mxu0 0.0
    %729 = vmatpush2.msra.mxu0 0.0
    %730 = vmatprep.subr.mxu0 0.0
    %731 = vmatpush2.msra.mxu0 0.0
    %732 = vmatprep.subr.mxu0 0.0
    %733 = vmatpush2.msra.mxu0 0.0
    %734 = vmatprep.subr.mxu0 0.0
    %735 = vmatpush2.msra.mxu0 0.0
    %736 = vmatprep.subr.mxu0 0.0
    %737 = vmatpush2.msra.mxu0 0.0
    %738 = vmatprep.mubr.f32.mxu0 0.0
    %739 = vmatmul.mubr.f32.gmra.mxu0 %v666
    %v740 = vpop.f32.mrf.mxu0
    %v741 = vadd.f32 0.0, %v740
    %v742 = vpop.f32.mrf.mxu0
    %v743 = vadd.f32 0.0, %v742
    %744 = vmatprep.mubr.f32.mxu0 0.0
    %745 = vmatmul.mubr.f32.gmra.mxu0 %v669
    %v746 = vpop.f32.mrf.mxu0
    %v747 = vadd.f32 0.0, %v746
    %v748 = vpop.f32.mrf.mxu0
    %v749 = vadd.f32 0.0, %v748
    %750 = vmatprep.mubr.f32.mxu0 0.0
    %751 = vmatmul.mubr.f32.gmra.mxu0 %v672
    %v752 = vpop.f32.mrf.mxu0
    %v753 = vadd.f32 0.0, %v752
    %v754 = vpop.f32.mrf.mxu0
    %v755 = vadd.f32 0.0, %v754
    %756 = vdwg.mxu0
    %v757 = vadd.f32 %v545, %v741
    %v758 = vadd.f32 %v546, %v743
    %v759 = vadd.f32 %v547, %v747
    %v760 = vadd.f32 %v548, %v749
    %v761 = vadd.f32 %v549, %v753
    %v762 = vadd.f32 %v550, %v755
    %s763 = scalar_lea.vmem [#allocation5], 640
    %v764 = vld [vmem:[%s763] sm:$0xff]
    %v765 = vld [vmem:[%s763 + $0x8] sm:$0xff]
    %v766 = vld [vmem:[%s763 + $0x10] sm:$0xff]
    %v767 = vld [vmem:[%s763 + $0x18] sm:$0xff]
    %v768 = vld [vmem:[%s763 + $0x20] sm:$0xff]
    %v769 = vld [vmem:[%s763 + $0x28] sm:$0xff]
    %v770 = vld [vmem:[%s763 + $0x30] sm:$0xff]
    %v771 = vld [vmem:[%s763 + $0x38] sm:$0xff]
    %v772 = vld [vmem:[%s763 + $0x40] sm:$0xff]
    %v773 = vld [vmem:[%s763 + $0x48] sm:$0xff]
    %v774 = vld [vmem:[%s763 + $0x50] sm:$0xff]
    %v775 = vld [vmem:[%s763 + $0x58] sm:$0xff]
    %v776 = vld [vmem:[%s763 + $0x60] sm:$0xff]
    %v777 = vld [vmem:[%s763 + $0x68] sm:$0xff]
    %v778 = vld [vmem:[%s763 + $0x70] sm:$0xff]
    %v779 = vld [vmem:[%s763 + $0x78] sm:$0xff]
    %v780 = vld [vmem:[%s763 + $0x80] sm:$0xff]
    %v781 = vld [vmem:[%s763 + $0x88] sm:$0xff]
    %v782 = vld [vmem:[%s763 + $0x90] sm:$0xff]
    %v783 = vld [vmem:[%s763 + $0x98] sm:$0xff]
    %784 = vmatprep.subr.mxu0 0.0
    %785 = vmatpush1.msra.mxu0 0.0
    %786 = vmatprep.subr.mxu0 0.0
    %787 = vmatpush1.msra.mxu0 0.0
    %788 = vmatprep.subr.mxu0 0.0
    %789 = vmatpush1.msra.mxu0 0.0
    %790 = vmatprep.subr.mxu0 0.0
    %791 = vmatpush1.msra.mxu0 0.0
    %792 = vmatprep.subr.mxu0 0.0
    %793 = vmatpush1.msra.mxu0 0.0
    %794 = vmatprep.subr.mxu0 0.0
    %795 = vmatpush1.msra.mxu0 0.0
    %796 = vmatprep.subr.mxu0 %v783
    %797 = vmatpush1.msra.mxu0 %v782
    %798 = vmatprep.subr.mxu0 %v781
    %799 = vmatpush1.msra.mxu0 %v780
    %800 = vmatprep.subr.mxu0 %v779
    %801 = vmatpush1.msra.mxu0 %v778
    %802 = vmatprep.subr.mxu0 %v777
    %803 = vmatpush1.msra.mxu0 %v776
    %804 = vmatprep.subr.mxu0 %v775
    %805 = vmatpush1.msra.mxu0 %v774
    %806 = vmatprep.subr.mxu0 %v773
    %807 = vmatpush1.msra.mxu0 %v772
    %808 = vmatprep.subr.mxu0 %v771
    %809 = vmatpush1.msra.mxu0 %v770
    %810 = vmatprep.subr.mxu0 %v769
    %811 = vmatpush1.msra.mxu0 %v768
    %812 = vmatprep.subr.mxu0 %v767
    %813 = vmatpush1.msra.mxu0 %v766
    %814 = vmatprep.subr.mxu0 %v765
    %815 = vmatpush1.msra.mxu0 %v764
    %816 = vmatprep.subr.mxu0 0.0
    %817 = vmatpush2.msra.mxu0 0.0
    %818 = vmatprep.subr.mxu0 0.0
    %819 = vmatpush2.msra.mxu0 0.0
    %820 = vmatprep.subr.mxu0 0.0
    %821 = vmatpush2.msra.mxu0 0.0
    %822 = vmatprep.subr.mxu0 0.0
    %823 = vmatpush2.msra.mxu0 0.0
    %824 = vmatprep.subr.mxu0 0.0
    %825 = vmatpush2.msra.mxu0 0.0
    %826 = vmatprep.subr.mxu0 0.0
    %827 = vmatpush2.msra.mxu0 0.0
    %828 = vmatprep.subr.mxu0 0.0
    %829 = vmatpush2.msra.mxu0 0.0
    %830 = vmatprep.subr.mxu0 0.0
    %831 = vmatpush2.msra.mxu0 0.0
    %832 = vmatprep.subr.mxu0 0.0
    %833 = vmatpush2.msra.mxu0 0.0
    %834 = vmatprep.subr.mxu0 0.0
    %835 = vmatpush2.msra.mxu0 0.0
    %836 = vmatprep.subr.mxu0 0.0
    %837 = vmatpush2.msra.mxu0 0.0
    %838 = vmatprep.subr.mxu0 0.0
    %839 = vmatpush2.msra.mxu0 0.0
    %840 = vmatprep.subr.mxu0 0.0
    %841 = vmatpush2.msra.mxu0 0.0
    %842 = vmatprep.subr.mxu0 0.0
    %843 = vmatpush2.msra.mxu0 0.0
    %844 = vmatprep.subr.mxu0 0.0
    %845 = vmatpush2.msra.mxu0 0.0
    %846 = vmatprep.subr.mxu0 0.0
    %847 = vmatpush2.msra.mxu0 0.0
    %848 = vmatprep.mubr.f32.mxu0 0.0
    %849 = vmatmul.mubr.f32.gmra.mxu0 %v666
    %v850 = vpop.f32.mrf.mxu0
    %v851 = vadd.f32 0.0, %v850
    %v852 = vpop.f32.mrf.mxu0
    %v853 = vadd.f32 0.0, %v852
    %854 = vmatprep.mubr.f32.mxu0 0.0
    %855 = vmatmul.mubr.f32.gmra.mxu0 %v669
    %v856 = vpop.f32.mrf.mxu0
    %v857 = vadd.f32 0.0, %v856
    %v858 = vpop.f32.mrf.mxu0
    %v859 = vadd.f32 0.0, %v858
    %860 = vmatprep.mubr.f32.mxu0 0.0
    %861 = vmatmul.mubr.f32.gmra.mxu0 %v672
    %v862 = vpop.f32.mrf.mxu0
    %v863 = vadd.f32 0.0, %v862
    %v864 = vpop.f32.mrf.mxu0
    %v865 = vadd.f32 0.0, %v864
    %866 = vdwg.mxu0
    %v867 = vadd.f32 %v757, %v851
    %v868 = vadd.f32 %v758, %v853
    %v869 = vadd.f32 %v759, %v857
    %v870 = vadd.f32 %v760, %v859
    %v871 = vadd.f32 %v761, %v863
    %v872 = vadd.f32 %v762, %v865
    %s873 = scalar_lea.vmem [#allocation5], 800
    %v874 = vld [vmem:[%s873] sm:$0xff]
    %v875 = vld [vmem:[%s873 + $0x8] sm:$0xff]
    %v876 = vld [vmem:[%s873 + $0x10] sm:$0xff]
    %v877 = vld [vmem:[%s873 + $0x18] sm:$0xff]
    %v878 = vld [vmem:[%s873 + $0x20] sm:$0xff]
    %v879 = vld [vmem:[%s873 + $0x28] sm:$0xff]
    %v880 = vld [vmem:[%s873 + $0x30] sm:$0xff]
    %v881 = vld [vmem:[%s873 + $0x38] sm:$0xff]
    %v882 = vld [vmem:[%s873 + $0x40] sm:$0xff]
    %v883 = vld [vmem:[%s873 + $0x48] sm:$0xff]
    %v884 = vld [vmem:[%s873 + $0x50] sm:$0xff]
    %v885 = vld [vmem:[%s873 + $0x58] sm:$0xff]
    %v886 = vld [vmem:[%s873 + $0x60] sm:$0xff]
    %v887 = vld [vmem:[%s873 + $0x68] sm:$0xff]
    %v888 = vld [vmem:[%s873 + $0x70] sm:$0xff]
    %v889 = vld [vmem:[%s873 + $0x78] sm:$0xff]
    %v890 = vld [vmem:[%s873 + $0x80] sm:$0xff]
    %v891 = vld [vmem:[%s873 + $0x88] sm:$0xff]
    %v892 = vld [vmem:[%s873 + $0x90] sm:$0xff]
    %v893 = vld [vmem:[%s873 + $0x98] sm:$0xff]
    %894 = vmatprep.subr.mxu0 0.0
    %895 = vmatpush1.msra.mxu0 0.0
    %896 = vmatprep.subr.mxu0 0.0
    %897 = vmatpush1.msra.mxu0 0.0
    %898 = vmatprep.subr.mxu0 0.0
    %899 = vmatpush1.msra.mxu0 0.0
    %900 = vmatprep.subr.mxu0 0.0
    %901 = vmatpush1.msra.mxu0 0.0
    %902 = vmatprep.subr.mxu0 0.0
    %903 = vmatpush1.msra.mxu0 0.0
    %904 = vmatprep.subr.mxu0 0.0
    %905 = vmatpush1.msra.mxu0 0.0
    %906 = vmatprep.subr.mxu0 %v893
    %907 = vmatpush1.msra.mxu0 %v892
    %908 = vmatprep.subr.mxu0 %v891
    %909 = vmatpush1.msra.mxu0 %v890
    %910 = vmatprep.subr.mxu0 %v889
    %911 = vmatpush1.msra.mxu0 %v888
    %912 = vmatprep.subr.mxu0 %v887
    %913 = vmatpush1.msra.mxu0 %v886
    %914 = vmatprep.subr.mxu0 %v885
    %915 = vmatpush1.msra.mxu0 %v884
    %916 = vmatprep.subr.mxu0 %v883
    %917 = vmatpush1.msra.mxu0 %v882
    %918 = vmatprep.subr.mxu0 %v881
    %919 = vmatpush1.msra.mxu0 %v880
    %920 = vmatprep.subr.mxu0 %v879
    %921 = vmatpush1.msra.mxu0 %v878
    %922 = vmatprep.subr.mxu0 %v877
    %923 = vmatpush1.msra.mxu0 %v876
    %924 = vmatprep.subr.mxu0 %v875
    %925 = vmatpush1.msra.mxu0 %v874
    %926 = vmatprep.subr.mxu0 0.0
    %927 = vmatpush2.msra.mxu0 0.0
    %928 = vmatprep.subr.mxu0 0.0
    %929 = vmatpush2.msra.mxu0 0.0
    %930 = vmatprep.subr.mxu0 0.0
    %931 = vmatpush2.msra.mxu0 0.0
    %932 = vmatprep.subr.mxu0 0.0
    %933 = vmatpush2.msra.mxu0 0.0
    %934 = vmatprep.subr.mxu0 0.0
    %935 = vmatpush2.msra.mxu0 0.0
    %936 = vmatprep.subr.mxu0 0.0
    %937 = vmatpush2.msra.mxu0 0.0
    %938 = vmatprep.subr.mxu0 0.0
    %939 = vmatpush2.msra.mxu0 0.0
    %940 = vmatprep.subr.mxu0 0.0
    %941 = vmatpush2.msra.mxu0 0.0
    %942 = vmatprep.subr.mxu0 0.0
    %943 = vmatpush2.msra.mxu0 0.0
    %944 = vmatprep.subr.mxu0 0.0
    %945 = vmatpush2.msra.mxu0 0.0
    %946 = vmatprep.subr.mxu0 0.0
    %947 = vmatpush2.msra.mxu0 0.0
    %948 = vmatprep.subr.mxu0 0.0
    %949 = vmatpush2.msra.mxu0 0.0
    %950 = vmatprep.subr.mxu0 0.0
    %951 = vmatpush2.msra.mxu0 0.0
    %952 = vmatprep.subr.mxu0 0.0
    %953 = vmatpush2.msra.mxu0 0.0
    %954 = vmatprep.subr.mxu0 0.0
    %955 = vmatpush2.msra.mxu0 0.0
    %956 = vmatprep.subr.mxu0 0.0
    %957 = vmatpush2.msra.mxu0 0.0
    %958 = vmatprep.mubr.f32.mxu0 0.0
    %959 = vmatmul.mubr.f32.gmra.mxu0 %v666
    %v960 = vpop.f32.mrf.mxu0
    %v961 = vadd.f32 0.0, %v960
    %v962 = vpop.f32.mrf.mxu0
    %v963 = vadd.f32 0.0, %v962
    %964 = vmatprep.mubr.f32.mxu0 0.0
    %965 = vmatmul.mubr.f32.gmra.mxu0 %v669
    %v966 = vpop.f32.mrf.mxu0
    %v967 = vadd.f32 0.0, %v966
    %v968 = vpop.f32.mrf.mxu0
    %v969 = vadd.f32 0.0, %v968
    %970 = vmatprep.mubr.f32.mxu0 0.0
    %971 = vmatmul.mubr.f32.gmra.mxu0 %v672
    %v972 = vpop.f32.mrf.mxu0
    %v973 = vadd.f32 0.0, %v972
    %v974 = vpop.f32.mrf.mxu0
    %v975 = vadd.f32 0.0, %v974
    %976 = vdwg.mxu0
    %v977 = vadd.f32 %v867, %v961
    %v978 = vadd.f32 %v868, %v963
    %v979 = vadd.f32 %v869, %v967
    %v980 = vadd.f32 %v870, %v969
    %v981 = vadd.f32 %v871, %v973
    %v982 = vadd.f32 %v872, %v975
    %s983 = scalar_lea.vmem [#allocation3], 48
    %v984 = vld [vmem:[%s983] sm:$0xff]
    %v985 = vld [vmem:[%s983 + $0x8] sm:$0xff]
    %v986 = vld [vmem:[%s983 + $0x10] sm:$0xf]
    %v988 = vsel %vm134, %v984, 0
    %v991 = vsel %vm134, %v985, 0
    %v994 = vsel %vm134, %v986, 0
    %996 = vmatprep.subr.mxu0 0.0
    %997 = vmatpush1.msra.mxu0 0.0
    %998 = vmatprep.subr.mxu0 0.0
    %999 = vmatpush1.msra.mxu0 0.0
    %1000 = vmatprep.subr.mxu0 0.0
    %1001 = vmatpush1.msra.mxu0 0.0
    %1002 = vmatprep.subr.mxu0 0.0
    %1003 = vmatpush1.msra.mxu0 0.0
    %1004 = vmatprep.subr.mxu0 0.0
    %1005 = vmatpush1.msra.mxu0 0.0
    %1006 = vmatprep.subr.mxu0 0.0
    %1007 = vmatpush1.msra.mxu0 0.0
    %1008 = vmatprep.subr.mxu0 0.0
    %1009 = vmatpush1.msra.mxu0 0.0
    %1010 = vmatprep.subr.mxu0 0.0
    %1011 = vmatpush1.msra.mxu0 0.0
    %1012 = vmatprep.subr.mxu0 0.0
    %1013 = vmatpush1.msra.mxu0 0.0
    %1014 = vmatprep.subr.mxu0 0.0
    %1015 = vmatpush1.msra.mxu0 0.0
    %1016 = vmatprep.subr.mxu0 0.0
    %1017 = vmatpush1.msra.mxu0 0.0
    %1018 = vmatprep.subr.mxu0 0.0
    %1019 = vmatpush1.msra.mxu0 %v130
    %1020 = vmatprep.subr.mxu0 0.0
    %1021 = vmatpush1.msra.mxu0 %v129
    %1022 = vmatprep.subr.mxu0 0.0
    %1023 = vmatpush1.msra.mxu0 %v128
    %1024 = vmatprep.subr.mxu0 0.0
    %1025 = vmatpush1.msra.mxu0 %v127
    %1026 = vmatprep.subr.mxu0 0.0
    %1027 = vmatpush1.msra.mxu0 %v126
    %1028 = vmatprep.subr.mxu0 0.0
    %1029 = vmatpush2.msra.mxu0 0.0
    %1030 = vmatprep.subr.mxu0 0.0
    %1031 = vmatpush2.msra.mxu0 0.0
    %1032 = vmatprep.subr.mxu0 0.0
    %1033 = vmatpush2.msra.mxu0 0.0
    %1034 = vmatprep.subr.mxu0 0.0
    %1035 = vmatpush2.msra.mxu0 0.0
    %1036 = vmatprep.subr.mxu0 0.0
    %1037 = vmatpush2.msra.mxu0 0.0
    %1038 = vmatprep.subr.mxu0 0.0
    %1039 = vmatpush2.msra.mxu0 0.0
    %1040 = vmatprep.subr.mxu0 0.0
    %1041 = vmatpush2.msra.mxu0 0.0
    %1042 = vmatprep.subr.mxu0 0.0
    %1043 = vmatpush2.msra.mxu0 0.0
    %1044 = vmatprep.subr.mxu0 0.0
    %1045 = vmatpush2.msra.mxu0 0.0
    %1046 = vmatprep.subr.mxu0 0.0
    %1047 = vmatpush2.msra.mxu0 0.0
    %1048 = vmatprep.subr.mxu0 0.0
    %1049 = vmatpush2.msra.mxu0 0.0
    %1050 = vmatprep.subr.mxu0 0.0
    %1051 = vmatpush2.msra.mxu0 0.0
    %1052 = vmatprep.subr.mxu0 0.0
    %1053 = vmatpush2.msra.mxu0 0.0
    %1054 = vmatprep.subr.mxu0 0.0
    %1055 = vmatpush2.msra.mxu0 0.0
    %1056 = vmatprep.subr.mxu0 0.0
    %1057 = vmatpush2.msra.mxu0 0.0
    %1058 = vmatprep.subr.mxu0 0.0
    %1059 = vmatpush2.msra.mxu0 0.0
    %1060 = vmatprep.mubr.f32.mxu0 0.0
    %1061 = vmatmul.mubr.f32.gmra.mxu0 %v988
    %v1062 = vpop.f32.mrf.mxu0
    %v1063 = vadd.f32 0.0, %v1062
    %v1064 = vpop.f32.mrf.mxu0
    %1065 = vmatprep.mubr.f32.mxu0 0.0
    %1066 = vmatmul.mubr.f32.gmra.mxu0 %v991
    %v1067 = vpop.f32.mrf.mxu0
    %v1068 = vadd.f32 0.0, %v1067
    %v1069 = vpop.f32.mrf.mxu0
    %1070 = vmatprep.mubr.f32.mxu0 0.0
    %1071 = vmatmul.mubr.f32.gmra.mxu0 %v994
    %v1072 = vpop.f32.mrf.mxu0
    %v1073 = vadd.f32 0.0, %v1072
    %v1074 = vpop.f32.mrf.mxu0
    %1075 = vdwg.mxu0
    %s1076 = scalar_lea.vmem [#allocation5], 960
    %v1077 = vld [vmem:[%s1076] sm:$0xff]
    %v1078 = vld [vmem:[%s1076 + $0x8] sm:$0xff]
    %v1079 = vld [vmem:[%s1076 + $0x10] sm:$0xff]
    %v1080 = vld [vmem:[%s1076 + $0x18] sm:$0xff]
    %v1081 = vld [vmem:[%s1076 + $0x20] sm:$0xff]
    %v1082 = vld [vmem:[%s1076 + $0x28] sm:$0xff]
    %v1083 = vld [vmem:[%s1076 + $0x30] sm:$0xff]
    %v1084 = vld [vmem:[%s1076 + $0x38] sm:$0xff]
    %v1085 = vld [vmem:[%s1076 + $0x40] sm:$0xff]
    %v1086 = vld [vmem:[%s1076 + $0x48] sm:$0xff]
    %v1087 = vld [vmem:[%s1076 + $0x50] sm:$0xff]
    %v1088 = vld [vmem:[%s1076 + $0x58] sm:$0xff]
    %v1089 = vld [vmem:[%s1076 + $0x60] sm:$0xff]
    %v1090 = vld [vmem:[%s1076 + $0x68] sm:$0xff]
    %v1091 = vld [vmem:[%s1076 + $0x70] sm:$0xff]
    %v1092 = vld [vmem:[%s1076 + $0x78] sm:$0xff]
    %v1093 = vld [vmem:[%s1076 + $0x80] sm:$0xff]
    %v1094 = vld [vmem:[%s1076 + $0x88] sm:$0xff]
    %v1095 = vld [vmem:[%s1076 + $0x90] sm:$0xff]
    %v1096 = vld [vmem:[%s1076 + $0x98] sm:$0xff]
    %v1098 = vsel %vm265, %v1063, 0
    %v1101 = vsel %vm265, %v1068, 0
    %v1104 = vsel %vm265, %v1073, 0
    %1106 = vmatprep.subr.mxu0 0.0
    %1107 = vmatpush1.msra.mxu0 0.0
    %1108 = vmatprep.subr.mxu0 0.0
    %1109 = vmatpush1.msra.mxu0 0.0
    %1110 = vmatprep.subr.mxu0 0.0
    %1111 = vmatpush1.msra.mxu0 0.0
    %1112 = vmatprep.subr.mxu0 0.0
    %1113 = vmatpush1.msra.mxu0 0.0
    %1114 = vmatprep.subr.mxu0 0.0
    %1115 = vmatpush1.msra.mxu0 0.0
    %1116 = vmatprep.subr.mxu0 0.0
    %1117 = vmatpush1.msra.mxu0 0.0
    %1118 = vmatprep.subr.mxu0 %v1096
    %1119 = vmatpush1.msra.mxu0 %v1095
    %1120 = vmatprep.subr.mxu0 %v1094
    %1121 = vmatpush1.msra.mxu0 %v1093
    %1122 = vmatprep.subr.mxu0 %v1092
    %1123 = vmatpush1.msra.mxu0 %v1091
    %1124 = vmatprep.subr.mxu0 %v1090
    %1125 = vmatpush1.msra.mxu0 %v1089
    %1126 = vmatprep.subr.mxu0 %v1088
    %1127 = vmatpush1.msra.mxu0 %v1087
    %1128 = vmatprep.subr.mxu0 %v1086
    %1129 = vmatpush1.msra.mxu0 %v1085
    %1130 = vmatprep.subr.mxu0 %v1084
    %1131 = vmatpush1.msra.mxu0 %v1083
    %1132 = vmatprep.subr.mxu0 %v1082
    %1133 = vmatpush1.msra.mxu0 %v1081
    %1134 = vmatprep.subr.mxu0 %v1080
    %1135 = vmatpush1.msra.mxu0 %v1079
    %1136 = vmatprep.subr.mxu0 %v1078
    %1137 = vmatpush1.msra.mxu0 %v1077
    %1138 = vmatprep.subr.mxu0 0.0
    %1139 = vmatpush2.msra.mxu0 0.0
    %1140 = vmatprep.subr.mxu0 0.0
    %1141 = vmatpush2.msra.mxu0 0.0
    %1142 = vmatprep.subr.mxu0 0.0
    %1143 = vmatpush2.msra.mxu0 0.0
    %1144 = vmatprep.subr.mxu0 0.0
    %1145 = vmatpush2.msra.mxu0 0.0
    %1146 = vmatprep.subr.mxu0 0.0
    %1147 = vmatpush2.msra.mxu0 0.0
    %1148 = vmatprep.subr.mxu0 0.0
    %1149 = vmatpush2.msra.mxu0 0.0
    %1150 = vmatprep.subr.mxu0 0.0
    %1151 = vmatpush2.msra.mxu0 0.0
    %1152 = vmatprep.subr.mxu0 0.0
    %1153 = vmatpush2.msra.mxu0 0.0
    %1154 = vmatprep.subr.mxu0 0.0
    %1155 = vmatpush2.msra.mxu0 0.0
    %1156 = vmatprep.subr.mxu0 0.0
    %1157 = vmatpush2.msra.mxu0 0.0
    %1158 = vmatprep.subr.mxu0 0.0
    %1159 = vmatpush2.msra.mxu0 0.0
    %1160 = vmatprep.subr.mxu0 0.0
    %1161 = vmatpush2.msra.mxu0 0.0
    %1162 = vmatprep.subr.mxu0 0.0
    %1163 = vmatpush2.msra.mxu0 0.0
    %1164 = vmatprep.subr.mxu0 0.0
    %1165 = vmatpush2.msra.mxu0 0.0
    %1166 = vmatprep.subr.mxu0 0.0
    %1167 = vmatpush2.msra.mxu0 0.0
    %1168 = vmatprep.subr.mxu0 0.0
    %1169 = vmatpush2.msra.mxu0 0.0
    %1170 = vmatprep.mubr.f32.mxu0 0.0
    %1171 = vmatmul.mubr.f32.gmra.mxu0 %v1098
    %v1172 = vpop.f32.mrf.mxu0
    %v1173 = vadd.f32 0.0, %v1172
    %v1174 = vpop.f32.mrf.mxu0
    %v1175 = vadd.f32 0.0, %v1174
    %1176 = vmatprep.mubr.f32.mxu0 0.0
    %1177 = vmatmul.mubr.f32.gmra.mxu0 %v1101
    %v1178 = vpop.f32.mrf.mxu0
    %v1179 = vadd.f32 0.0, %v1178
    %v1180 = vpop.f32.mrf.mxu0
    %v1181 = vadd.f32 0.0, %v1180
    %1182 = vmatprep.mubr.f32.mxu0 0.0
    %1183 = vmatmul.mubr.f32.gmra.mxu0 %v1104
    %v1184 = vpop.f32.mrf.mxu0
    %v1185 = vadd.f32 0.0, %v1184
    %v1186 = vpop.f32.mrf.mxu0
    %v1187 = vadd.f32 0.0, %v1186
    %1188 = vdwg.mxu0
    %v1189 = vadd.f32 %v977, %v1173
    %v1190 = vadd.f32 %v978, %v1175
    %v1191 = vadd.f32 %v979, %v1179
    %v1192 = vadd.f32 %v980, %v1181
    %v1193 = vadd.f32 %v981, %v1185
    %v1194 = vadd.f32 %v982, %v1187
    %s1195 = scalar_lea.vmem [#allocation5], 1120
    %v1196 = vld [vmem:[%s1195] sm:$0xff]
    %v1197 = vld [vmem:[%s1195 + $0x8] sm:$0xff]
    %v1198 = vld [vmem:[%s1195 + $0x10] sm:$0xff]
    %v1199 = vld [vmem:[%s1195 + $0x18] sm:$0xff]
    %v1200 = vld [vmem:[%s1195 + $0x20] sm:$0xff]
    %v1201 = vld [vmem:[%s1195 + $0x28] sm:$0xff]
    %v1202 = vld [vmem:[%s1195 + $0x30] sm:$0xff]
    %v1203 = vld [vmem:[%s1195 + $0x38] sm:$0xff]
    %v1204 = vld [vmem:[%s1195 + $0x40] sm:$0xff]
    %v1205 = vld [vmem:[%s1195 + $0x48] sm:$0xff]
    %v1206 = vld [vmem:[%s1195 + $0x50] sm:$0xff]
    %v1207 = vld [vmem:[%s1195 + $0x58] sm:$0xff]
    %v1208 = vld [vmem:[%s1195 + $0x60] sm:$0xff]
    %v1209 = vld [vmem:[%s1195 + $0x68] sm:$0xff]
    %v1210 = vld [vmem:[%s1195 + $0x70] sm:$0xff]
    %v1211 = vld [vmem:[%s1195 + $0x78] sm:$0xff]
    %v1212 = vld [vmem:[%s1195 + $0x80] sm:$0xff]
    %v1213 = vld [vmem:[%s1195 + $0x88] sm:$0xff]
    %v1214 = vld [vmem:[%s1195 + $0x90] sm:$0xff]
    %v1215 = vld [vmem:[%s1195 + $0x98] sm:$0xff]
    %1216 = vmatprep.subr.mxu0 0.0
    %1217 = vmatpush1.msra.mxu0 0.0
    %1218 = vmatprep.subr.mxu0 0.0
    %1219 = vmatpush1.msra.mxu0 0.0
    %1220 = vmatprep.subr.mxu0 0.0
    %1221 = vmatpush1.msra.mxu0 0.0
    %1222 = vmatprep.subr.mxu0 0.0
    %1223 = vmatpush1.msra.mxu0 0.0
    %1224 = vmatprep.subr.mxu0 0.0
    %1225 = vmatpush1.msra.mxu0 0.0
    %1226 = vmatprep.subr.mxu0 0.0
    %1227 = vmatpush1.msra.mxu0 0.0
    %1228 = vmatprep.subr.mxu0 %v1215
    %1229 = vmatpush1.msra.mxu0 %v1214
    %1230 = vmatprep.subr.mxu0 %v1213
    %1231 = vmatpush1.msra.mxu0 %v1212
    %1232 = vmatprep.subr.mxu0 %v1211
    %1233 = vmatpush1.msra.mxu0 %v1210
    %1234 = vmatprep.subr.mxu0 %v1209
    %1235 = vmatpush1.msra.mxu0 %v1208
    %1236 = vmatprep.subr.mxu0 %v1207
    %1237 = vmatpush1.msra.mxu0 %v1206
    %1238 = vmatprep.subr.mxu0 %v1205
    %1239 = vmatpush1.msra.mxu0 %v1204
    %1240 = vmatprep.subr.mxu0 %v1203
    %1241 = vmatpush1.msra.mxu0 %v1202
    %1242 = vmatprep.subr.mxu0 %v1201
    %1243 = vmatpush1.msra.mxu0 %v1200
    %1244 = vmatprep.subr.mxu0 %v1199
    %1245 = vmatpush1.msra.mxu0 %v1198
    %1246 = vmatprep.subr.mxu0 %v1197
    %1247 = vmatpush1.msra.mxu0 %v1196
    %1248 = vmatprep.subr.mxu0 0.0
    %1249 = vmatpush2.msra.mxu0 0.0
    %1250 = vmatprep.subr.mxu0 0.0
    %1251 = vmatpush2.msra.mxu0 0.0
    %1252 = vmatprep.subr.mxu0 0.0
    %1253 = vmatpush2.msra.mxu0 0.0
    %1254 = vmatprep.subr.mxu0 0.0
    %1255 = vmatpush2.msra.mxu0 0.0
    %1256 = vmatprep.subr.mxu0 0.0
    %1257 = vmatpush2.msra.mxu0 0.0
    %1258 = vmatprep.subr.mxu0 0.0
    %1259 = vmatpush2.msra.mxu0 0.0
    %1260 = vmatprep.subr.mxu0 0.0
    %1261 = vmatpush2.msra.mxu0 0.0
    %1262 = vmatprep.subr.mxu0 0.0
    %1263 = vmatpush2.msra.mxu0 0.0
    %1264 = vmatprep.subr.mxu0 0.0
    %1265 = vmatpush2.msra.mxu0 0.0
    %1266 = vmatprep.subr.mxu0 0.0
    %1267 = vmatpush2.msra.mxu0 0.0
    %1268 = vmatprep.subr.mxu0 0.0
    %1269 = vmatpush2.msra.mxu0 0.0
    %1270 = vmatprep.subr.mxu0 0.0
    %1271 = vmatpush2.msra.mxu0 0.0
    %1272 = vmatprep.subr.mxu0 0.0
    %1273 = vmatpush2.msra.mxu0 0.0
    %1274 = vmatprep.subr.mxu0 0.0
    %1275 = vmatpush2.msra.mxu0 0.0
    %1276 = vmatprep.subr.mxu0 0.0
    %1277 = vmatpush2.msra.mxu0 0.0
    %1278 = vmatprep.subr.mxu0 0.0
    %1279 = vmatpush2.msra.mxu0 0.0
    %1280 = vmatprep.mubr.f32.mxu0 0.0
    %1281 = vmatmul.mubr.f32.gmra.mxu0 %v1098
    %v1282 = vpop.f32.mrf.mxu0
    %v1283 = vadd.f32 0.0, %v1282
    %v1284 = vpop.f32.mrf.mxu0
    %v1285 = vadd.f32 0.0, %v1284
    %1286 = vmatprep.mubr.f32.mxu0 0.0
    %1287 = vmatmul.mubr.f32.gmra.mxu0 %v1101
    %v1288 = vpop.f32.mrf.mxu0
    %v1289 = vadd.f32 0.0, %v1288
    %v1290 = vpop.f32.mrf.mxu0
    %v1291 = vadd.f32 0.0, %v1290
    %1292 = vmatprep.mubr.f32.mxu0 0.0
    %1293 = vmatmul.mubr.f32.gmra.mxu0 %v1104
    %v1294 = vpop.f32.mrf.mxu0
    %v1295 = vadd.f32 0.0, %v1294
    %v1296 = vpop.f32.mrf.mxu0
    %v1297 = vadd.f32 0.0, %v1296
    %1298 = vdwg.mxu0
    %v1299 = vadd.f32 %v1189, %v1283
    %v1300 = vadd.f32 %v1190, %v1285
    %v1301 = vadd.f32 %v1191, %v1289
    %v1302 = vadd.f32 %v1192, %v1291
    %v1303 = vadd.f32 %v1193, %v1295
    %v1304 = vadd.f32 %v1194, %v1297
    %s1305 = scalar_lea.vmem [#allocation5], 1280
    %v1306 = vld [vmem:[%s1305] sm:$0xff]
    %v1307 = vld [vmem:[%s1305 + $0x8] sm:$0xff]
    %v1308 = vld [vmem:[%s1305 + $0x10] sm:$0xff]
    %v1309 = vld [vmem:[%s1305 + $0x18] sm:$0xff]
    %v1310 = vld [vmem:[%s1305 + $0x20] sm:$0xff]
    %v1311 = vld [vmem:[%s1305 + $0x28] sm:$0xff]
    %v1312 = vld [vmem:[%s1305 + $0x30] sm:$0xff]
    %v1313 = vld [vmem:[%s1305 + $0x38] sm:$0xff]
    %v1314 = vld [vmem:[%s1305 + $0x40] sm:$0xff]
    %v1315 = vld [vmem:[%s1305 + $0x48] sm:$0xff]
    %v1316 = vld [vmem:[%s1305 + $0x50] sm:$0xff]
    %v1317 = vld [vmem:[%s1305 + $0x58] sm:$0xff]
    %v1318 = vld [vmem:[%s1305 + $0x60] sm:$0xff]
    %v1319 = vld [vmem:[%s1305 + $0x68] sm:$0xff]
    %v1320 = vld [vmem:[%s1305 + $0x70] sm:$0xff]
    %v1321 = vld [vmem:[%s1305 + $0x78] sm:$0xff]
    %v1322 = vld [vmem:[%s1305 + $0x80] sm:$0xff]
    %v1323 = vld [vmem:[%s1305 + $0x88] sm:$0xff]
    %v1324 = vld [vmem:[%s1305 + $0x90] sm:$0xff]
    %v1325 = vld [vmem:[%s1305 + $0x98] sm:$0xff]
    %1326 = vmatprep.subr.mxu0 0.0
    %1327 = vmatpush1.msra.mxu0 0.0
    %1328 = vmatprep.subr.mxu0 0.0
    %1329 = vmatpush1.msra.mxu0 0.0
    %1330 = vmatprep.subr.mxu0 0.0
    %1331 = vmatpush1.msra.mxu0 0.0
    %1332 = vmatprep.subr.mxu0 0.0
    %1333 = vmatpush1.msra.mxu0 0.0
    %1334 = vmatprep.subr.mxu0 0.0
    %1335 = vmatpush1.msra.mxu0 0.0
    %1336 = vmatprep.subr.mxu0 0.0
    %1337 = vmatpush1.msra.mxu0 0.0
    %1338 = vmatprep.subr.mxu0 %v1325
    %1339 = vmatpush1.msra.mxu0 %v1324
    %1340 = vmatprep.subr.mxu0 %v1323
    %1341 = vmatpush1.msra.mxu0 %v1322
    %1342 = vmatprep.subr.mxu0 %v1321
    %1343 = vmatpush1.msra.mxu0 %v1320
    %1344 = vmatprep.subr.mxu0 %v1319
    %1345 = vmatpush1.msra.mxu0 %v1318
    %1346 = vmatprep.subr.mxu0 %v1317
    %1347 = vmatpush1.msra.mxu0 %v1316
    %1348 = vmatprep.subr.mxu0 %v1315
    %1349 = vmatpush1.msra.mxu0 %v1314
    %1350 = vmatprep.subr.mxu0 %v1313
    %1351 = vmatpush1.msra.mxu0 %v1312
    %1352 = vmatprep.subr.mxu0 %v1311
    %1353 = vmatpush1.msra.mxu0 %v1310
    %1354 = vmatprep.subr.mxu0 %v1309
    %1355 = vmatpush1.msra.mxu0 %v1308
    %1356 = vmatprep.subr.mxu0 %v1307
    %1357 = vmatpush1.msra.mxu0 %v1306
    %1358 = vmatprep.subr.mxu0 0.0
    %1359 = vmatpush2.msra.mxu0 0.0
    %1360 = vmatprep.subr.mxu0 0.0
    %1361 = vmatpush2.msra.mxu0 0.0
    %1362 = vmatprep.subr.mxu0 0.0
    %1363 = vmatpush2.msra.mxu0 0.0
    %1364 = vmatprep.subr.mxu0 0.0
    %1365 = vmatpush2.msra.mxu0 0.0
    %1366 = vmatprep.subr.mxu0 0.0
    %1367 = vmatpush2.msra.mxu0 0.0
    %1368 = vmatprep.subr.mxu0 0.0
    %1369 = vmatpush2.msra.mxu0 0.0
    %1370 = vmatprep.subr.mxu0 0.0
    %1371 = vmatpush2.msra.mxu0 0.0
    %1372 = vmatprep.subr.mxu0 0.0
    %1373 = vmatpush2.msra.mxu0 0.0
    %1374 = vmatprep.subr.mxu0 0.0
    %1375 = vmatpush2.msra.mxu0 0.0
    %1376 = vmatprep.subr.mxu0 0.0
    %1377 = vmatpush2.msra.mxu0 0.0
    %1378 = vmatprep.subr.mxu0 0.0
    %1379 = vmatpush2.msra.mxu0 0.0
    %1380 = vmatprep.subr.mxu0 0.0
    %1381 = vmatpush2.msra.mxu0 0.0
    %1382 = vmatprep.subr.mxu0 0.0
    %1383 = vmatpush2.msra.mxu0 0.0
    %1384 = vmatprep.subr.mxu0 0.0
    %1385 = vmatpush2.msra.mxu0 0.0
    %1386 = vmatprep.subr.mxu0 0.0
    %1387 = vmatpush2.msra.mxu0 0.0
    %1388 = vmatprep.subr.mxu0 0.0
    %1389 = vmatpush2.msra.mxu0 0.0
    %1390 = vmatprep.mubr.f32.mxu0 0.0
    %1391 = vmatmul.mubr.f32.gmra.mxu0 %v1098
    %v1392 = vpop.f32.mrf.mxu0
    %v1393 = vadd.f32 0.0, %v1392
    %v1394 = vpop.f32.mrf.mxu0
    %v1395 = vadd.f32 0.0, %v1394
    %1396 = vmatprep.mubr.f32.mxu0 0.0
    %1397 = vmatmul.mubr.f32.gmra.mxu0 %v1101
    %v1398 = vpop.f32.mrf.mxu0
    %v1399 = vadd.f32 0.0, %v1398
    %v1400 = vpop.f32.mrf.mxu0
    %v1401 = vadd.f32 0.0, %v1400
    %1402 = vmatprep.mubr.f32.mxu0 0.0
    %1403 = vmatmul.mubr.f32.gmra.mxu0 %v1104
    %v1404 = vpop.f32.mrf.mxu0
    %v1405 = vadd.f32 0.0, %v1404
    %v1406 = vpop.f32.mrf.mxu0
    %v1407 = vadd.f32 0.0, %v1406
    %1408 = vdwg.mxu0
    %v1409 = vadd.f32 %v1299, %v1393
    %v1410 = vadd.f32 %v1300, %v1395
    %v1411 = vadd.f32 %v1301, %v1399
    %v1412 = vadd.f32 %v1302, %v1401
    %v1413 = vadd.f32 %v1303, %v1405
    %v1414 = vadd.f32 %v1304, %v1407
    %v1415 = vld [vmem:[#allocation7] sm:$0x3]
    %v1417 = vlaneseq
    %v1418 = vshrl.u32 %v1417, 7
    %v1419 = vsub.s32 0, %v1418
    %v1420 = vrot.slane %v1415, %v1419
    %v1421 = vlaneseq
    %v1422 = vshrl.u32 %v1421, 7
    %v1423 = vsub.s32 1, %v1422
    %v1424 = vrot.slane %v1415, %v1423
    %v1427 = vadd.f32 %v1409, %v1420
    %v1428 = vadd.f32 %v1410, %v1424
    %v1429 = vadd.f32 %v1411, %v1420
    %v1430 = vadd.f32 %v1412, %v1424
    %v1431 = vadd.f32 %v1413, %v1420
    %v1432 = vadd.f32 %v1414, %v1424
    %v1433 = vmax.f32 %v1427, 0.0
    %v1434 = vmax.f32 %v1428, 0.0
    %v1435 = vmax.f32 %v1429, 0.0
    %v1436 = vmax.f32 %v1430, 0.0
    %v1437 = vmax.f32 %v1431, 0.0
    %v1438 = vmax.f32 %v1432, 0.0
    %v1439 = vld [vmem:[%s4] sm:$0xff]
    %v1440 = vld [vmem:[%s4 + $0x8] sm:$0x3]
    %vm1441 = vcmask 162816
    %v1443 = vsel %vm1441, %v1439, 0
    %v1446 = vsel %vm1441, %v1440, 0
    %vm1448 = vcmask 1043456
    %v1450 = vsel %vm1448, %v1437, 0
    %v1453 = vsel %vm1448, %v1438, 0
    %1455 = vmatprep.subr.mxu0 0.0
    %1456 = vmatpush1.msra.mxu0 0.0
    %1457 = vmatprep.subr.mxu0 0.0
    %1458 = vmatpush1.msra.mxu0 0.0
    %1459 = vmatprep.subr.mxu0 0.0
    %1460 = vmatpush1.msra.mxu0 0.0
    %1461 = vmatprep.subr.mxu0 0.0
    %1462 = vmatpush1.msra.mxu0 0.0
    %1463 = vmatprep.subr.mxu0 0.0
    %1464 = vmatpush1.msra.mxu0 0.0
    %1465 = vmatprep.subr.mxu0 0.0
    %1466 = vmatpush1.msra.mxu0 0.0
    %1467 = vmatprep.subr.mxu0 0.0
    %1468 = vmatpush1.msra.mxu0 0.0
    %1469 = vmatprep.subr.mxu0 0.0
    %1470 = vmatpush1.msra.mxu0 0.0
    %1471 = vmatprep.subr.mxu0 0.0
    %1472 = vmatpush1.msra.mxu0 0.0
    %1473 = vmatprep.subr.mxu0 0.0
    %1474 = vmatpush1.msra.mxu0 0.0
    %1475 = vmatprep.subr.mxu0 0.0
    %1476 = vmatpush1.msra.mxu0 0.0
    %1477 = vmatprep.subr.mxu0 0.0
    %1478 = vmatpush1.msra.mxu0 0.0
    %1479 = vmatprep.subr.mxu0 0.0
    %1480 = vmatpush1.msra.mxu0 0.0
    %1481 = vmatprep.subr.mxu0 %v1453
    %1482 = vmatpush1.msra.mxu0 %v1450
    %1483 = vmatprep.subr.mxu0 %v1436
    %1484 = vmatpush1.msra.mxu0 %v1435
    %1485 = vmatprep.subr.mxu0 %v1434
    %1486 = vmatpush1.msra.mxu0 %v1433
    %1487 = vmatprep.subr.mxu0 0.0
    %1488 = vmatpush2.msra.mxu0 0.0
    %1489 = vmatprep.subr.mxu0 0.0
    %1490 = vmatpush2.msra.mxu0 0.0
    %1491 = vmatprep.subr.mxu0 0.0
    %1492 = vmatpush2.msra.mxu0 0.0
    %1493 = vmatprep.subr.mxu0 0.0
    %1494 = vmatpush2.msra.mxu0 0.0
    %1495 = vmatprep.subr.mxu0 0.0
    %1496 = vmatpush2.msra.mxu0 0.0
    %1497 = vmatprep.subr.mxu0 0.0
    %1498 = vmatpush2.msra.mxu0 0.0
    %1499 = vmatprep.subr.mxu0 0.0
    %1500 = vmatpush2.msra.mxu0 0.0
    %1501 = vmatprep.subr.mxu0 0.0
    %1502 = vmatpush2.msra.mxu0 0.0
    %1503 = vmatprep.subr.mxu0 0.0
    %1504 = vmatpush2.msra.mxu0 0.0
    %1505 = vmatprep.subr.mxu0 0.0
    %1506 = vmatpush2.msra.mxu0 0.0
    %1507 = vmatprep.subr.mxu0 0.0
    %1508 = vmatpush2.msra.mxu0 0.0
    %1509 = vmatprep.subr.mxu0 0.0
    %1510 = vmatpush2.msra.mxu0 0.0
    %1511 = vmatprep.subr.mxu0 0.0
    %1512 = vmatpush2.msra.mxu0 0.0
    %1513 = vmatprep.subr.mxu0 0.0
    %1514 = vmatpush2.msra.mxu0 0.0
    %1515 = vmatprep.subr.mxu0 0.0
    %1516 = vmatpush2.msra.mxu0 0.0
    %1517 = vmatprep.subr.mxu0 0.0
    %1518 = vmatpush2.msra.mxu0 0.0
    %1519 = vmatprep.mubr.f32.mxu0 0.0
    %1520 = vmatmul.mubr.f32.gmra.mxu0 %v1443
    %v1521 = vpop.f32.mrf.mxu0
    %v1522 = vadd.f32 0.0, %v1521
    %v1523 = vpop.f32.mrf.mxu0
    %v1524 = vadd.f32 0.0, %v1523
    %1525 = vmatprep.mubr.f32.mxu0 0.0
    %1526 = vmatmul.mubr.f32.gmra.mxu0 %v1446
    %v1527 = vpop.f32.mrf.mxu0
    %v1528 = vadd.f32 0.0, %v1527
    %v1529 = vpop.f32.mrf.mxu0
    %v1530 = vadd.f32 0.0, %v1529
    %1531 = vdwg.mxu0
    %v1532 = vld [vmem:[#allocation8] sm:$0xff]
    %v1533 = vld [vmem:[#allocation8 + $0x8] sm:$0xff]
    %v1534 = vld [vmem:[#allocation8 + $0x10] sm:$0xff]
    %v1535 = vld [vmem:[#allocation8 + $0x18] sm:$0xff]
    %v1536 = vld [vmem:[#allocation8 + $0x20] sm:$0xff]
    %v1537 = vld [vmem:[#allocation8 + $0x28] sm:$0xff]
    %v1538 = vld [vmem:[#allocation8 + $0x30] sm:$0xff]
    %v1539 = vld [vmem:[#allocation8 + $0x38] sm:$0xff]
    %v1540 = vld [vmem:[#allocation8 + $0x40] sm:$0xff]
    %v1541 = vld [vmem:[#allocation8 + $0x48] sm:$0xff]
    %v1542 = vld [vmem:[#allocation8 + $0x50] sm:$0xff]
    %v1543 = vld [vmem:[#allocation8 + $0x58] sm:$0xff]
    %v1544 = vld [vmem:[#allocation8 + $0x60] sm:$0xff]
    %v1545 = vld [vmem:[#allocation8 + $0x68] sm:$0xff]
    %v1546 = vld [vmem:[#allocation8 + $0x70] sm:$0xff]
    %v1547 = vld [vmem:[#allocation8 + $0x78] sm:$0xff]
    %v1548 = vld [vmem:[#allocation8 + $0x80] sm:$0xff]
    %v1549 = vld [vmem:[#allocation8 + $0x88] sm:$0xff]
    %v1550 = vld [vmem:[#allocation8 + $0x90] sm:$0xff]
    %v1551 = vld [vmem:[#allocation8 + $0x98] sm:$0xff]
    %v1552 = vld [vmem:[#allocation8 + $0xa0] sm:$0xff]
    %v1553 = vld [vmem:[#allocation8 + $0xa8] sm:$0xff]
    %v1554 = vld [vmem:[#allocation8 + $0xb0] sm:$0xff]
    %v1555 = vld [vmem:[#allocation8 + $0xb8] sm:$0xff]
    %v1556 = vld [vmem:[#allocation8 + $0xc0] sm:$0xff]
    %v1557 = vld [vmem:[#allocation8 + $0xc8] sm:$0xff]
    %v1558 = vld [vmem:[#allocation8 + $0xd0] sm:$0xff]
    %v1559 = vld [vmem:[#allocation8 + $0xd8] sm:$0xff]
    %v1560 = vld [vmem:[#allocation8 + $0xe0] sm:$0xff]
    %v1561 = vld [vmem:[#allocation8 + $0xe8] sm:$0xff]
    %v1562 = vld [vmem:[#allocation8 + $0xf0] sm:$0xff]
    %v1563 = vld [vmem:[#allocation8 + $0xf8] sm:$0xff]
    %v1564 = vld [vmem:[#allocation8 + $0x100] sm:$0xff]
    %v1565 = vld [vmem:[#allocation8 + $0x108] sm:$0xff]
    %v1566 = vld [vmem:[#allocation8 + $0x110] sm:$0xff]
    %v1567 = vld [vmem:[#allocation8 + $0x118] sm:$0xff]
    %v1568 = vld [vmem:[#allocation8 + $0x120] sm:$0xff]
    %v1569 = vld [vmem:[#allocation8 + $0x128] sm:$0xff]
    %v1570 = vld [vmem:[#allocation8 + $0x130] sm:$0xff]
    %v1571 = vld [vmem:[#allocation8 + $0x138] sm:$0xff]
    %s1572 = scalar_lea.vmem [#allocation8], 320
    %v1573 = vld [vmem:[%s1572] sm:$0xff]
    %v1574 = vld [vmem:[%s1572 + $0x8] sm:$0xff]
    %v1575 = vld [vmem:[%s1572 + $0x10] sm:$0xff]
    %v1576 = vld [vmem:[%s1572 + $0x18] sm:$0xff]
    %v1577 = vld [vmem:[%s1572 + $0x20] sm:$0xff]
    %v1578 = vld [vmem:[%s1572 + $0x28] sm:$0xff]
    %v1579 = vld [vmem:[%s1572 + $0x30] sm:$0xff]
    %v1580 = vld [vmem:[%s1572 + $0x38] sm:$0xff]
    %v1581 = vld [vmem:[%s1572 + $0x40] sm:$0xff]
    %v1582 = vld [vmem:[%s1572 + $0x48] sm:$0xff]
    %v1583 = vld [vmem:[%s1572 + $0x50] sm:$0xff]
    %v1584 = vld [vmem:[%s1572 + $0x58] sm:$0xff]
    %v1585 = vld [vmem:[%s1572 + $0x60] sm:$0xff]
    %v1586 = vld [vmem:[%s1572 + $0x68] sm:$0xff]
    %v1587 = vld [vmem:[%s1572 + $0x70] sm:$0xff]
    %v1588 = vld [vmem:[%s1572 + $0x78] sm:$0xff]
    %v1589 = vld [vmem:[%s1572 + $0x80] sm:$0xff]
    %v1590 = vld [vmem:[%s1572 + $0x88] sm:$0xff]
    %v1591 = vld [vmem:[%s1572 + $0x90] sm:$0xff]
    %v1592 = vld [vmem:[%s1572 + $0x98] sm:$0xff]
    %v1593 = vld [vmem:[%s1572 + $0xa0] sm:$0xff]
    %v1594 = vld [vmem:[%s1572 + $0xa8] sm:$0xff]
    %v1595 = vld [vmem:[%s1572 + $0xb0] sm:$0xff]
    %v1596 = vld [vmem:[%s1572 + $0xb8] sm:$0xff]
    %v1597 = vld [vmem:[%s1572 + $0xc0] sm:$0xff]
    %v1598 = vld [vmem:[%s1572 + $0xc8] sm:$0xff]
    %v1599 = vld [vmem:[%s1572 + $0xd0] sm:$0xff]
    %v1600 = vld [vmem:[%s1572 + $0xd8] sm:$0xff]
    %v1601 = vld [vmem:[%s1572 + $0xe0] sm:$0xff]
    %v1602 = vld [vmem:[%s1572 + $0xe8] sm:$0xff]
    %v1603 = vld [vmem:[%s1572 + $0xf0] sm:$0xff]
    %v1604 = vld [vmem:[%s1572 + $0xf8] sm:$0xff]
    %v1605 = vld [vmem:[%s1572 + $0x100] sm:$0xff]
    %v1606 = vld [vmem:[%s1572 + $0x108] sm:$0xff]
    %v1607 = vld [vmem:[%s1572 + $0x110] sm:$0xff]
    %v1608 = vld [vmem:[%s1572 + $0x118] sm:$0xff]
    %v1609 = vld [vmem:[%s1572 + $0x120] sm:$0xff]
    %v1610 = vld [vmem:[%s1572 + $0x128] sm:$0xff]
    %v1611 = vld [vmem:[%s1572 + $0x130] sm:$0xff]
    %v1612 = vld [vmem:[%s1572 + $0x138] sm:$0xff]
    %vm1613 = vcmask 261120
    %v1615 = vsel %vm1613, %v1524, 0
    %v1618 = vsel %vm1613, %v1530, 0
    %1620 = vmatprep.subr.mxu0 %v1604
    %1621 = vmatpush1.msra.mxu0 %v1603
    %1622 = vmatprep.subr.mxu0 %v1602
    %1623 = vmatpush1.msra.mxu0 %v1601
    %1624 = vmatprep.subr.mxu0 %v1600
    %1625 = vmatpush1.msra.mxu0 %v1599
    %1626 = vmatprep.subr.mxu0 %v1598
    %1627 = vmatpush1.msra.mxu0 %v1597
    %1628 = vmatprep.subr.mxu0 %v1596
    %1629 = vmatpush1.msra.mxu0 %v1595
    %1630 = vmatprep.subr.mxu0 %v1594
    %1631 = vmatpush1.msra.mxu0 %v1593
    %1632 = vmatprep.subr.mxu0 %v1592
    %1633 = vmatpush1.msra.mxu0 %v1591
    %1634 = vmatprep.subr.mxu0 %v1590
    %1635 = vmatpush1.msra.mxu0 %v1589
    %1636 = vmatprep.subr.mxu0 %v1588
    %1637 = vmatpush1.msra.mxu0 %v1587
    %1638 = vmatprep.subr.mxu0 %v1586
    %1639 = vmatpush1.msra.mxu0 %v1585
    %1640 = vmatprep.subr.mxu0 %v1584
    %1641 = vmatpush1.msra.mxu0 %v1583
    %1642 = vmatprep.subr.mxu0 %v1582
    %1643 = vmatpush1.msra.mxu0 %v1581
    %1644 = vmatprep.subr.mxu0 %v1580
    %1645 = vmatpush1.msra.mxu0 %v1579
    %1646 = vmatprep.subr.mxu0 %v1578
    %1647 = vmatpush1.msra.mxu0 %v1577
    %1648 = vmatprep.subr.mxu0 %v1576
    %1649 = vmatpush1.msra.mxu0 %v1575
    %1650 = vmatprep.subr.mxu0 %v1574
    %1651 = vmatpush1.msra.mxu0 %v1573
    %1652 = vmatprep.subr.mxu0 0.0
    %1653 = vmatpush2.msra.mxu0 0.0
    %1654 = vmatprep.subr.mxu0 0.0
    %1655 = vmatpush2.msra.mxu0 0.0
    %1656 = vmatprep.subr.mxu0 0.0
    %1657 = vmatpush2.msra.mxu0 0.0
    %1658 = vmatprep.subr.mxu0 0.0
    %1659 = vmatpush2.msra.mxu0 0.0
    %1660 = vmatprep.subr.mxu0 0.0
    %1661 = vmatpush2.msra.mxu0 0.0
    %1662 = vmatprep.subr.mxu0 0.0
    %1663 = vmatpush2.msra.mxu0 0.0
    %1664 = vmatprep.subr.mxu0 0.0
    %1665 = vmatpush2.msra.mxu0 0.0
    %1666 = vmatprep.subr.mxu0 0.0
    %1667 = vmatpush2.msra.mxu0 0.0
    %1668 = vmatprep.subr.mxu0 0.0
    %1669 = vmatpush2.msra.mxu0 0.0
    %1670 = vmatprep.subr.mxu0 0.0
    %1671 = vmatpush2.msra.mxu0 0.0
    %1672 = vmatprep.subr.mxu0 0.0
    %1673 = vmatpush2.msra.mxu0 0.0
    %1674 = vmatprep.subr.mxu0 0.0
    %1675 = vmatpush2.msra.mxu0 0.0
    %1676 = vmatprep.subr.mxu0 %v1612
    %1677 = vmatpush2.msra.mxu0 %v1611
    %1678 = vmatprep.subr.mxu0 %v1610
    %1679 = vmatpush2.msra.mxu0 %v1609
    %1680 = vmatprep.subr.mxu0 %v1608
    %1681 = vmatpush2.msra.mxu0 %v1607
    %1682 = vmatprep.subr.mxu0 %v1606
    %1683 = vmatpush2.msra.mxu0 %v1605
    %1684 = vmatprep.mubr.f32.mxu0 %v1615
    %1685 = vmatmul.mubr.f32.gmra.mxu0 %v1522
    %v1686 = vpop.f32.mrf.mxu0
    %v1687 = vadd.f32 0.0, %v1686
    %v1688 = vpop.f32.mrf.mxu0
    %v1689 = vadd.f32 0.0, %v1688
    %1690 = vmatprep.mubr.f32.mxu0 %v1618
    %1691 = vmatmul.mubr.f32.gmra.mxu0 %v1528
    %v1692 = vpop.f32.mrf.mxu0
    %v1693 = vadd.f32 0.0, %v1692
    %v1694 = vpop.f32.mrf.mxu0
    %v1695 = vadd.f32 0.0, %v1694
    %1696 = vdwg.mxu0
    %1697 = vmatprep.subr.mxu0 %v1563
    %1698 = vmatpush1.msra.mxu0 %v1562
    %1699 = vmatprep.subr.mxu0 %v1561
    %1700 = vmatpush1.msra.mxu0 %v1560
    %1701 = vmatprep.subr.mxu0 %v1559
    %1702 = vmatpush1.msra.mxu0 %v1558
    %1703 = vmatprep.subr.mxu0 %v1557
    %1704 = vmatpush1.msra.mxu0 %v1556
    %1705 = vmatprep.subr.mxu0 %v1555
    %1706 = vmatpush1.msra.mxu0 %v1554
    %1707 = vmatprep.subr.mxu0 %v1553
    %1708 = vmatpush1.msra.mxu0 %v1552
    %1709 = vmatprep.subr.mxu0 %v1551
    %1710 = vmatpush1.msra.mxu0 %v1550
    %1711 = vmatprep.subr.mxu0 %v1549
    %1712 = vmatpush1.msra.mxu0 %v1548
    %1713 = vmatprep.subr.mxu0 %v1547
    %1714 = vmatpush1.msra.mxu0 %v1546
    %1715 = vmatprep.subr.mxu0 %v1545
    %1716 = vmatpush1.msra.mxu0 %v1544
    %1717 = vmatprep.subr.mxu0 %v1543
    %1718 = vmatpush1.msra.mxu0 %v1542
    %1719 = vmatprep.subr.mxu0 %v1541
    %1720 = vmatpush1.msra.mxu0 %v1540
    %1721 = vmatprep.subr.mxu0 %v1539
    %1722 = vmatpush1.msra.mxu0 %v1538
    %1723 = vmatprep.subr.mxu0 %v1537
    %1724 = vmatpush1.msra.mxu0 %v1536
    %1725 = vmatprep.subr.mxu0 %v1535
    %1726 = vmatpush1.msra.mxu0 %v1534
    %1727 = vmatprep.subr.mxu0 %v1533
    %1728 = vmatpush1.msra.mxu0 %v1532
    %1729 = vmatprep.subr.mxu0 0.0
    %1730 = vmatpush2.msra.mxu0 0.0
    %1731 = vmatprep.subr.mxu0 0.0
    %1732 = vmatpush2.msra.mxu0 0.0
    %1733 = vmatprep.subr.mxu0 0.0
    %1734 = vmatpush2.msra.mxu0 0.0
    %1735 = vmatprep.subr.mxu0 0.0
    %1736 = vmatpush2.msra.mxu0 0.0
    %1737 = vmatprep.subr.mxu0 0.0
    %1738 = vmatpush2.msra.mxu0 0.0
    %1739 = vmatprep.subr.mxu0 0.0
    %1740 = vmatpush2.msra.mxu0 0.0
    %1741 = vmatprep.subr.mxu0 0.0
    %1742 = vmatpush2.msra.mxu0 0.0
    %1743 = vmatprep.subr.mxu0 0.0
    %1744 = vmatpush2.msra.mxu0 0.0
    %1745 = vmatprep.subr.mxu0 0.0
    %1746 = vmatpush2.msra.mxu0 0.0
    %1747 = vmatprep.subr.mxu0 0.0
    %1748 = vmatpush2.msra.mxu0 0.0
    %1749 = vmatprep.subr.mxu0 0.0
    %1750 = vmatpush2.msra.mxu0 0.0
    %1751 = vmatprep.subr.mxu0 0.0
    %1752 = vmatpush2.msra.mxu0 0.0
    %1753 = vmatprep.subr.mxu0 %v1571
    %1754 = vmatpush2.msra.mxu0 %v1570
    %1755 = vmatprep.subr.mxu0 %v1569
    %1756 = vmatpush2.msra.mxu0 %v1568
    %1757 = vmatprep.subr.mxu0 %v1567
    %1758 = vmatpush2.msra.mxu0 %v1566
    %1759 = vmatprep.subr.mxu0 %v1565
    %1760 = vmatpush2.msra.mxu0 %v1564
    %1761 = vmatprep.mubr.f32.mxu0 %v1615
    %1762 = vmatmul.mubr.f32.gmra.mxu0 %v1522
    %v1763 = vpop.f32.mrf.mxu0
    %v1764 = vadd.f32 %v1687, %v1763
    %v1765 = vpop.f32.mrf.mxu0
    %v1766 = vadd.f32 %v1689, %v1765
    %1767 = vmatprep.mubr.f32.mxu0 %v1618
    %1768 = vmatmul.mubr.f32.gmra.mxu0 %v1528
    %v1769 = vpop.f32.mrf.mxu0
    %v1770 = vadd.f32 %v1693, %v1769
    %v1771 = vpop.f32.mrf.mxu0
    %v1772 = vadd.f32 %v1695, %v1771
    %1773 = vdwg.mxu0
    %s1774 = scalar_lea.vmem [#allocation8], 640
    %v1775 = vld [vmem:[%s1774] sm:$0xff]
    %v1776 = vld [vmem:[%s1774 + $0x8] sm:$0xff]
    %v1777 = vld [vmem:[%s1774 + $0x10] sm:$0xff]
    %v1778 = vld [vmem:[%s1774 + $0x18] sm:$0xff]
    %v1779 = vld [vmem:[%s1774 + $0x20] sm:$0xff]
    %v1780 = vld [vmem:[%s1774 + $0x28] sm:$0xff]
    %v1781 = vld [vmem:[%s1774 + $0x30] sm:$0xff]
    %v1782 = vld [vmem:[%s1774 + $0x38] sm:$0xff]
    %v1783 = vld [vmem:[%s1774 + $0x40] sm:$0xff]
    %v1784 = vld [vmem:[%s1774 + $0x48] sm:$0xff]
    %v1785 = vld [vmem:[%s1774 + $0x50] sm:$0xff]
    %v1786 = vld [vmem:[%s1774 + $0x58] sm:$0xff]
    %v1787 = vld [vmem:[%s1774 + $0x60] sm:$0xff]
    %v1788 = vld [vmem:[%s1774 + $0x68] sm:$0xff]
    %v1789 = vld [vmem:[%s1774 + $0x70] sm:$0xff]
    %v1790 = vld [vmem:[%s1774 + $0x78] sm:$0xff]
    %v1791 = vld [vmem:[%s1774 + $0x80] sm:$0xff]
    %v1792 = vld [vmem:[%s1774 + $0x88] sm:$0xff]
    %v1793 = vld [vmem:[%s1774 + $0x90] sm:$0xff]
    %v1794 = vld [vmem:[%s1774 + $0x98] sm:$0xff]
    %v1795 = vld [vmem:[%s1774 + $0xa0] sm:$0xff]
    %v1796 = vld [vmem:[%s1774 + $0xa8] sm:$0xff]
    %v1797 = vld [vmem:[%s1774 + $0xb0] sm:$0xff]
    %v1798 = vld [vmem:[%s1774 + $0xb8] sm:$0xff]
    %v1799 = vld [vmem:[%s1774 + $0xc0] sm:$0xff]
    %v1800 = vld [vmem:[%s1774 + $0xc8] sm:$0xff]
    %v1801 = vld [vmem:[%s1774 + $0xd0] sm:$0xff]
    %v1802 = vld [vmem:[%s1774 + $0xd8] sm:$0xff]
    %v1803 = vld [vmem:[%s1774 + $0xe0] sm:$0xff]
    %v1804 = vld [vmem:[%s1774 + $0xe8] sm:$0xff]
    %v1805 = vld [vmem:[%s1774 + $0xf0] sm:$0xff]
    %v1806 = vld [vmem:[%s1774 + $0xf8] sm:$0xff]
    %v1807 = vld [vmem:[%s1774 + $0x100] sm:$0xff]
    %v1808 = vld [vmem:[%s1774 + $0x108] sm:$0xff]
    %v1809 = vld [vmem:[%s1774 + $0x110] sm:$0xff]
    %v1810 = vld [vmem:[%s1774 + $0x118] sm:$0xff]
    %v1811 = vld [vmem:[%s1774 + $0x120] sm:$0xff]
    %v1812 = vld [vmem:[%s1774 + $0x128] sm:$0xff]
    %v1813 = vld [vmem:[%s1774 + $0x130] sm:$0xff]
    %v1814 = vld [vmem:[%s1774 + $0x138] sm:$0xff]
    %1815 = vmatprep.subr.mxu0 %v1806
    %1816 = vmatpush1.msra.mxu0 %v1805
    %1817 = vmatprep.subr.mxu0 %v1804
    %1818 = vmatpush1.msra.mxu0 %v1803
    %1819 = vmatprep.subr.mxu0 %v1802
    %1820 = vmatpush1.msra.mxu0 %v1801
    %1821 = vmatprep.subr.mxu0 %v1800
    %1822 = vmatpush1.msra.mxu0 %v1799
    %1823 = vmatprep.subr.mxu0 %v1798
    %1824 = vmatpush1.msra.mxu0 %v1797
    %1825 = vmatprep.subr.mxu0 %v1796
    %1826 = vmatpush1.msra.mxu0 %v1795
    %1827 = vmatprep.subr.mxu0 %v1794
    %1828 = vmatpush1.msra.mxu0 %v1793
    %1829 = vmatprep.subr.mxu0 %v1792
    %1830 = vmatpush1.msra.mxu0 %v1791
    %1831 = vmatprep.subr.mxu0 %v1790
    %1832 = vmatpush1.msra.mxu0 %v1789
    %1833 = vmatprep.subr.mxu0 %v1788
    %1834 = vmatpush1.msra.mxu0 %v1787
    %1835 = vmatprep.subr.mxu0 %v1786
    %1836 = vmatpush1.msra.mxu0 %v1785
    %1837 = vmatprep.subr.mxu0 %v1784
    %1838 = vmatpush1.msra.mxu0 %v1783
    %1839 = vmatprep.subr.mxu0 %v1782
    %1840 = vmatpush1.msra.mxu0 %v1781
    %1841 = vmatprep.subr.mxu0 %v1780
    %1842 = vmatpush1.msra.mxu0 %v1779
    %1843 = vmatprep.subr.mxu0 %v1778
    %1844 = vmatpush1.msra.mxu0 %v1777
    %1845 = vmatprep.subr.mxu0 %v1776
    %1846 = vmatpush1.msra.mxu0 %v1775
    %1847 = vmatprep.subr.mxu0 0.0
    %1848 = vmatpush2.msra.mxu0 0.0
    %1849 = vmatprep.subr.mxu0 0.0
    %1850 = vmatpush2.msra.mxu0 0.0
    %1851 = vmatprep.subr.mxu0 0.0
    %1852 = vmatpush2.msra.mxu0 0.0
    %1853 = vmatprep.subr.mxu0 0.0
    %1854 = vmatpush2.msra.mxu0 0.0
    %1855 = vmatprep.subr.mxu0 0.0
    %1856 = vmatpush2.msra.mxu0 0.0
    %1857 = vmatprep.subr.mxu0 0.0
    %1858 = vmatpush2.msra.mxu0 0.0
    %1859 = vmatprep.subr.mxu0 0.0
    %1860 = vmatpush2.msra.mxu0 0.0
    %1861 = vmatprep.subr.mxu0 0.0
    %1862 = vmatpush2.msra.mxu0 0.0
    %1863 = vmatprep.subr.mxu0 0.0
    %1864 = vmatpush2.msra.mxu0 0.0
    %1865 = vmatprep.subr.mxu0 0.0
    %1866 = vmatpush2.msra.mxu0 0.0
    %1867 = vmatprep.subr.mxu0 0.0
    %1868 = vmatpush2.msra.mxu0 0.0
    %1869 = vmatprep.subr.mxu0 0.0
    %1870 = vmatpush2.msra.mxu0 0.0
    %1871 = vmatprep.subr.mxu0 %v1814
    %1872 = vmatpush2.msra.mxu0 %v1813
    %1873 = vmatprep.subr.mxu0 %v1812
    %1874 = vmatpush2.msra.mxu0 %v1811
    %1875 = vmatprep.subr.mxu0 %v1810
    %1876 = vmatpush2.msra.mxu0 %v1809
    %1877 = vmatprep.subr.mxu0 %v1808
    %1878 = vmatpush2.msra.mxu0 %v1807
    %1879 = vmatprep.mubr.f32.mxu0 %v1615
    %1880 = vmatmul.mubr.f32.gmra.mxu0 %v1522
    %v1881 = vpop.f32.mrf.mxu0
    %v1882 = vadd.f32 0.0, %v1881
    %v1883 = vpop.f32.mrf.mxu0
    %v1884 = vadd.f32 0.0, %v1883
    %1885 = vmatprep.mubr.f32.mxu0 %v1618
    %1886 = vmatmul.mubr.f32.gmra.mxu0 %v1528
    %v1887 = vpop.f32.mrf.mxu0
    %v1888 = vadd.f32 0.0, %v1887
    %v1889 = vpop.f32.mrf.mxu0
    %v1890 = vadd.f32 0.0, %v1889
    %1891 = vdwg.mxu0
    %v1892 = vadd.f32 %v1764, %v1882
    %v1893 = vadd.f32 %v1766, %v1884
    %v1894 = vadd.f32 %v1770, %v1888
    %v1895 = vadd.f32 %v1772, %v1890
    %s1896 = scalar_lea.vmem %s4, 16
    %v1897 = vld [vmem:[%s1896] sm:$0xff]
    %v1898 = vld [vmem:[%s1896 + $0x8] sm:$0x3]
    %v1900 = vsel %vm1441, %v1897, 0
    %v1903 = vsel %vm1441, %v1898, 0
    %1905 = vmatprep.subr.mxu0 0.0
    %1906 = vmatpush1.msra.mxu0 0.0
    %1907 = vmatprep.subr.mxu0 0.0
    %1908 = vmatpush1.msra.mxu0 0.0
    %1909 = vmatprep.subr.mxu0 0.0
    %1910 = vmatpush1.msra.mxu0 0.0
    %1911 = vmatprep.subr.mxu0 0.0
    %1912 = vmatpush1.msra.mxu0 0.0
    %1913 = vmatprep.subr.mxu0 0.0
    %1914 = vmatpush1.msra.mxu0 0.0
    %1915 = vmatprep.subr.mxu0 0.0
    %1916 = vmatpush1.msra.mxu0 0.0
    %1917 = vmatprep.subr.mxu0 0.0
    %1918 = vmatpush1.msra.mxu0 0.0
    %1919 = vmatprep.subr.mxu0 0.0
    %1920 = vmatpush1.msra.mxu0 0.0
    %1921 = vmatprep.subr.mxu0 0.0
    %1922 = vmatpush1.msra.mxu0 0.0
    %1923 = vmatprep.subr.mxu0 0.0
    %1924 = vmatpush1.msra.mxu0 0.0
    %1925 = vmatprep.subr.mxu0 0.0
    %1926 = vmatpush1.msra.mxu0 0.0
    %1927 = vmatprep.subr.mxu0 0.0
    %1928 = vmatpush1.msra.mxu0 0.0
    %1929 = vmatprep.subr.mxu0 0.0
    %1930 = vmatpush1.msra.mxu0 0.0
    %1931 = vmatprep.subr.mxu0 %v1453
    %1932 = vmatpush1.msra.mxu0 %v1450
    %1933 = vmatprep.subr.mxu0 %v1436
    %1934 = vmatpush1.msra.mxu0 %v1435
    %1935 = vmatprep.subr.mxu0 %v1434
    %1936 = vmatpush1.msra.mxu0 %v1433
    %1937 = vmatprep.subr.mxu0 0.0
    %1938 = vmatpush2.msra.mxu0 0.0
    %1939 = vmatprep.subr.mxu0 0.0
    %1940 = vmatpush2.msra.mxu0 0.0
    %1941 = vmatprep.subr.mxu0 0.0
    %1942 = vmatpush2.msra.mxu0 0.0
    %1943 = vmatprep.subr.mxu0 0.0
    %1944 = vmatpush2.msra.mxu0 0.0
    %1945 = vmatprep.subr.mxu0 0.0
    %1946 = vmatpush2.msra.mxu0 0.0
    %1947 = vmatprep.subr.mxu0 0.0
    %1948 = vmatpush2.msra.mxu0 0.0
    %1949 = vmatprep.subr.mxu0 0.0
    %1950 = vmatpush2.msra.mxu0 0.0
    %1951 = vmatprep.subr.mxu0 0.0
    %1952 = vmatpush2.msra.mxu0 0.0
    %1953 = vmatprep.subr.mxu0 0.0
    %1954 = vmatpush2.msra.mxu0 0.0
    %1955 = vmatprep.subr.mxu0 0.0
    %1956 = vmatpush2.msra.mxu0 0.0
    %1957 = vmatprep.subr.mxu0 0.0
    %1958 = vmatpush2.msra.mxu0 0.0
    %1959 = vmatprep.subr.mxu0 0.0
    %1960 = vmatpush2.msra.mxu0 0.0
    %1961 = vmatprep.subr.mxu0 0.0
    %1962 = vmatpush2.msra.mxu0 0.0
    %1963 = vmatprep.subr.mxu0 0.0
    %1964 = vmatpush2.msra.mxu0 0.0
    %1965 = vmatprep.subr.mxu0 0.0
    %1966 = vmatpush2.msra.mxu0 0.0
    %1967 = vmatprep.subr.mxu0 0.0
    %1968 = vmatpush2.msra.mxu0 0.0
    %1969 = vmatprep.mubr.f32.mxu0 0.0
    %1970 = vmatmul.mubr.f32.gmra.mxu0 %v1900
    %v1971 = vpop.f32.mrf.mxu0
    %v1972 = vadd.f32 0.0, %v1971
    %v1973 = vpop.f32.mrf.mxu0
    %v1974 = vadd.f32 0.0, %v1973
    %1975 = vmatprep.mubr.f32.mxu0 0.0
    %1976 = vmatmul.mubr.f32.gmra.mxu0 %v1903
    %v1977 = vpop.f32.mrf.mxu0
    %v1978 = vadd.f32 0.0, %v1977
    %v1979 = vpop.f32.mrf.mxu0
    %v1980 = vadd.f32 0.0, %v1979
    %1981 = vdwg.mxu0
    %s1982 = scalar_lea.vmem [#allocation8], 960
    %v1983 = vld [vmem:[%s1982] sm:$0xff]
    %v1984 = vld [vmem:[%s1982 + $0x8] sm:$0xff]
    %v1985 = vld [vmem:[%s1982 + $0x10] sm:$0xff]
    %v1986 = vld [vmem:[%s1982 + $0x18] sm:$0xff]
    %v1987 = vld [vmem:[%s1982 + $0x20] sm:$0xff]
    %v1988 = vld [vmem:[%s1982 + $0x28] sm:$0xff]
    %v1989 = vld [vmem:[%s1982 + $0x30] sm:$0xff]
    %v1990 = vld [vmem:[%s1982 + $0x38] sm:$0xff]
    %v1991 = vld [vmem:[%s1982 + $0x40] sm:$0xff]
    %v1992 = vld [vmem:[%s1982 + $0x48] sm:$0xff]
    %v1993 = vld [vmem:[%s1982 + $0x50] sm:$0xff]
    %v1994 = vld [vmem:[%s1982 + $0x58] sm:$0xff]
    %v1995 = vld [vmem:[%s1982 + $0x60] sm:$0xff]
    %v1996 = vld [vmem:[%s1982 + $0x68] sm:$0xff]
    %v1997 = vld [vmem:[%s1982 + $0x70] sm:$0xff]
    %v1998 = vld [vmem:[%s1982 + $0x78] sm:$0xff]
    %v1999 = vld [vmem:[%s1982 + $0x80] sm:$0xff]
    %v2000 = vld [vmem:[%s1982 + $0x88] sm:$0xff]
    %v2001 = vld [vmem:[%s1982 + $0x90] sm:$0xff]
    %v2002 = vld [vmem:[%s1982 + $0x98] sm:$0xff]
    %v2003 = vld [vmem:[%s1982 + $0xa0] sm:$0xff]
    %v2004 = vld [vmem:[%s1982 + $0xa8] sm:$0xff]
    %v2005 = vld [vmem:[%s1982 + $0xb0] sm:$0xff]
    %v2006 = vld [vmem:[%s1982 + $0xb8] sm:$0xff]
    %v2007 = vld [vmem:[%s1982 + $0xc0] sm:$0xff]
    %v2008 = vld [vmem:[%s1982 + $0xc8] sm:$0xff]
    %v2009 = vld [vmem:[%s1982 + $0xd0] sm:$0xff]
    %v2010 = vld [vmem:[%s1982 + $0xd8] sm:$0xff]
    %v2011 = vld [vmem:[%s1982 + $0xe0] sm:$0xff]
    %v2012 = vld [vmem:[%s1982 + $0xe8] sm:$0xff]
    %v2013 = vld [vmem:[%s1982 + $0xf0] sm:$0xff]
    %v2014 = vld [vmem:[%s1982 + $0xf8] sm:$0xff]
    %v2015 = vld [vmem:[%s1982 + $0x100] sm:$0xff]
    %v2016 = vld [vmem:[%s1982 + $0x108] sm:$0xff]
    %v2017 = vld [vmem:[%s1982 + $0x110] sm:$0xff]
    %v2018 = vld [vmem:[%s1982 + $0x118] sm:$0xff]
    %v2019 = vld [vmem:[%s1982 + $0x120] sm:$0xff]
    %v2020 = vld [vmem:[%s1982 + $0x128] sm:$0xff]
    %v2021 = vld [vmem:[%s1982 + $0x130] sm:$0xff]
    %v2022 = vld [vmem:[%s1982 + $0x138] sm:$0xff]
    %v2024 = vsel %vm1613, %v1974, 0
    %v2027 = vsel %vm1613, %v1980, 0
    %2029 = vmatprep.subr.mxu0 %v2014
    %2030 = vmatpush1.msra.mxu0 %v2013
    %2031 = vmatprep.subr.mxu0 %v2012
    %2032 = vmatpush1.msra.mxu0 %v2011
    %2033 = vmatprep.subr.mxu0 %v2010
    %2034 = vmatpush1.msra.mxu0 %v2009
    %2035 = vmatprep.subr.mxu0 %v2008
    %2036 = vmatpush1.msra.mxu0 %v2007
    %2037 = vmatprep.subr.mxu0 %v2006
    %2038 = vmatpush1.msra.mxu0 %v2005
    %2039 = vmatprep.subr.mxu0 %v2004
    %2040 = vmatpush1.msra.mxu0 %v2003
    %2041 = vmatprep.subr.mxu0 %v2002
    %2042 = vmatpush1.msra.mxu0 %v2001
    %2043 = vmatprep.subr.mxu0 %v2000
    %2044 = vmatpush1.msra.mxu0 %v1999
    %2045 = vmatprep.subr.mxu0 %v1998
    %2046 = vmatpush1.msra.mxu0 %v1997
    %2047 = vmatprep.subr.mxu0 %v1996
    %2048 = vmatpush1.msra.mxu0 %v1995
    %2049 = vmatprep.subr.mxu0 %v1994
    %2050 = vmatpush1.msra.mxu0 %v1993
    %2051 = vmatprep.subr.mxu0 %v1992
    %2052 = vmatpush1.msra.mxu0 %v1991
    %2053 = vmatprep.subr.mxu0 %v1990
    %2054 = vmatpush1.msra.mxu0 %v1989
    %2055 = vmatprep.subr.mxu0 %v1988
    %2056 = vmatpush1.msra.mxu0 %v1987
    %2057 = vmatprep.subr.mxu0 %v1986
    %2058 = vmatpush1.msra.mxu0 %v1985
    %2059 = vmatprep.subr.mxu0 %v1984
    %2060 = vmatpush1.msra.mxu0 %v1983
    %2061 = vmatprep.subr.mxu0 0.0
    %2062 = vmatpush2.msra.mxu0 0.0
    %2063 = vmatprep.subr.mxu0 0.0
    %2064 = vmatpush2.msra.mxu0 0.0
    %2065 = vmatprep.subr.mxu0 0.0
    %2066 = vmatpush2.msra.mxu0 0.0
    %2067 = vmatprep.subr.mxu0 0.0
    %2068 = vmatpush2.msra.mxu0 0.0
    %2069 = vmatprep.subr.mxu0 0.0
    %2070 = vmatpush2.msra.mxu0 0.0
    %2071 = vmatprep.subr.mxu0 0.0
    %2072 = vmatpush2.msra.mxu0 0.0
    %2073 = vmatprep.subr.mxu0 0.0
    %2074 = vmatpush2.msra.mxu0 0.0
    %2075 = vmatprep.subr.mxu0 0.0
    %2076 = vmatpush2.msra.mxu0 0.0
    %2077 = vmatprep.subr.mxu0 0.0
    %2078 = vmatpush2.msra.mxu0 0.0
    %2079 = vmatprep.subr.mxu0 0.0
    %2080 = vmatpush2.msra.mxu0 0.0
    %2081 = vmatprep.subr.mxu0 0.0
    %2082 = vmatpush2.msra.mxu0 0.0
    %2083 = vmatprep.subr.mxu0 0.0
    %2084 = vmatpush2.msra.mxu0 0.0
    %2085 = vmatprep.subr.mxu0 %v2022
    %2086 = vmatpush2.msra.mxu0 %v2021
    %2087 = vmatprep.subr.mxu0 %v2020
    %2088 = vmatpush2.msra.mxu0 %v2019
    %2089 = vmatprep.subr.mxu0 %v2018
    %2090 = vmatpush2.msra.mxu0 %v2017
    %2091 = vmatprep.subr.mxu0 %v2016
    %2092 = vmatpush2.msra.mxu0 %v2015
    %2093 = vmatprep.mubr.f32.mxu0 %v2024
    %2094 = vmatmul.mubr.f32.gmra.mxu0 %v1972
    %v2095 = vpop.f32.mrf.mxu0
    %v2096 = vadd.f32 0.0, %v2095
    %v2097 = vpop.f32.mrf.mxu0
    %v2098 = vadd.f32 0.0, %v2097
    %2099 = vmatprep.mubr.f32.mxu0 %v2027
    %2100 = vmatmul.mubr.f32.gmra.mxu0 %v1978
    %v2101 = vpop.f32.mrf.mxu0
    %v2102 = vadd.f32 0.0, %v2101
    %v2103 = vpop.f32.mrf.mxu0
    %v2104 = vadd.f32 0.0, %v2103
    %2105 = vdwg.mxu0
    %v2106 = vadd.f32 %v1892, %v2096
    %v2107 = vadd.f32 %v1893, %v2098
    %v2108 = vadd.f32 %v1894, %v2102
    %v2109 = vadd.f32 %v1895, %v2104
    %s2110 = scalar_lea.vmem [#allocation8], 1280
    %v2111 = vld [vmem:[%s2110] sm:$0xff]
    %v2112 = vld [vmem:[%s2110 + $0x8] sm:$0xff]
    %v2113 = vld [vmem:[%s2110 + $0x10] sm:$0xff]
    %v2114 = vld [vmem:[%s2110 + $0x18] sm:$0xff]
    %v2115 = vld [vmem:[%s2110 + $0x20] sm:$0xff]
    %v2116 = vld [vmem:[%s2110 + $0x28] sm:$0xff]
    %v2117 = vld [vmem:[%s2110 + $0x30] sm:$0xff]
    %v2118 = vld [vmem:[%s2110 + $0x38] sm:$0xff]
    %v2119 = vld [vmem:[%s2110 + $0x40] sm:$0xff]
    %v2120 = vld [vmem:[%s2110 + $0x48] sm:$0xff]
    %v2121 = vld [vmem:[%s2110 + $0x50] sm:$0xff]
    %v2122 = vld [vmem:[%s2110 + $0x58] sm:$0xff]
    %v2123 = vld [vmem:[%s2110 + $0x60] sm:$0xff]
    %v2124 = vld [vmem:[%s2110 + $0x68] sm:$0xff]
    %v2125 = vld [vmem:[%s2110 + $0x70] sm:$0xff]
    %v2126 = vld [vmem:[%s2110 + $0x78] sm:$0xff]
    %v2127 = vld [vmem:[%s2110 + $0x80] sm:$0xff]
    %v2128 = vld [vmem:[%s2110 + $0x88] sm:$0xff]
    %v2129 = vld [vmem:[%s2110 + $0x90] sm:$0xff]
    %v2130 = vld [vmem:[%s2110 + $0x98] sm:$0xff]
    %v2131 = vld [vmem:[%s2110 + $0xa0] sm:$0xff]
    %v2132 = vld [vmem:[%s2110 + $0xa8] sm:$0xff]
    %v2133 = vld [vmem:[%s2110 + $0xb0] sm:$0xff]
    %v2134 = vld [vmem:[%s2110 + $0xb8] sm:$0xff]
    %v2135 = vld [vmem:[%s2110 + $0xc0] sm:$0xff]
    %v2136 = vld [vmem:[%s2110 + $0xc8] sm:$0xff]
    %v2137 = vld [vmem:[%s2110 + $0xd0] sm:$0xff]
    %v2138 = vld [vmem:[%s2110 + $0xd8] sm:$0xff]
    %v2139 = vld [vmem:[%s2110 + $0xe0] sm:$0xff]
    %v2140 = vld [vmem:[%s2110 + $0xe8] sm:$0xff]
    %v2141 = vld [vmem:[%s2110 + $0xf0] sm:$0xff]
    %v2142 = vld [vmem:[%s2110 + $0xf8] sm:$0xff]
    %v2143 = vld [vmem:[%s2110 + $0x100] sm:$0xff]
    %v2144 = vld [vmem:[%s2110 + $0x108] sm:$0xff]
    %v2145 = vld [vmem:[%s2110 + $0x110] sm:$0xff]
    %v2146 = vld [vmem:[%s2110 + $0x118] sm:$0xff]
    %v2147 = vld [vmem:[%s2110 + $0x120] sm:$0xff]
    %v2148 = vld [vmem:[%s2110 + $0x128] sm:$0xff]
    %v2149 = vld [vmem:[%s2110 + $0x130] sm:$0xff]
    %v2150 = vld [vmem:[%s2110 + $0x138] sm:$0xff]
    %2151 = vmatprep.subr.mxu0 %v2142
    %2152 = vmatpush1.msra.mxu0 %v2141
    %2153 = vmatprep.subr.mxu0 %v2140
    %2154 = vmatpush1.msra.mxu0 %v2139
    %2155 = vmatprep.subr.mxu0 %v2138
    %2156 = vmatpush1.msra.mxu0 %v2137
    %2157 = vmatprep.subr.mxu0 %v2136
    %2158 = vmatpush1.msra.mxu0 %v2135
    %2159 = vmatprep.subr.mxu0 %v2134
    %2160 = vmatpush1.msra.mxu0 %v2133
    %2161 = vmatprep.subr.mxu0 %v2132
    %2162 = vmatpush1.msra.mxu0 %v2131
    %2163 = vmatprep.subr.mxu0 %v2130
    %2164 = vmatpush1.msra.mxu0 %v2129
    %2165 = vmatprep.subr.mxu0 %v2128
    %2166 = vmatpush1.msra.mxu0 %v2127
    %2167 = vmatprep.subr.mxu0 %v2126
    %2168 = vmatpush1.msra.mxu0 %v2125
    %2169 = vmatprep.subr.mxu0 %v2124
    %2170 = vmatpush1.msra.mxu0 %v2123
    %2171 = vmatprep.subr.mxu0 %v2122
    %2172 = vmatpush1.msra.mxu0 %v2121
    %2173 = vmatprep.subr.mxu0 %v2120
    %2174 = vmatpush1.msra.mxu0 %v2119
    %2175 = vmatprep.subr.mxu0 %v2118
    %2176 = vmatpush1.msra.mxu0 %v2117
    %2177 = vmatprep.subr.mxu0 %v2116
    %2178 = vmatpush1.msra.mxu0 %v2115
    %2179 = vmatprep.subr.mxu0 %v2114
    %2180 = vmatpush1.msra.mxu0 %v2113
    %2181 = vmatprep.subr.mxu0 %v2112
    %2182 = vmatpush1.msra.mxu0 %v2111
    %2183 = vmatprep.subr.mxu0 0.0
    %2184 = vmatpush2.msra.mxu0 0.0
    %2185 = vmatprep.subr.mxu0 0.0
    %2186 = vmatpush2.msra.mxu0 0.0
    %2187 = vmatprep.subr.mxu0 0.0
    %2188 = vmatpush2.msra.mxu0 0.0
    %2189 = vmatprep.subr.mxu0 0.0
    %2190 = vmatpush2.msra.mxu0 0.0
    %2191 = vmatprep.subr.mxu0 0.0
    %2192 = vmatpush2.msra.mxu0 0.0
    %2193 = vmatprep.subr.mxu0 0.0
    %2194 = vmatpush2.msra.mxu0 0.0
    %2195 = vmatprep.subr.mxu0 0.0
    %2196 = vmatpush2.msra.mxu0 0.0
    %2197 = vmatprep.subr.mxu0 0.0
    %2198 = vmatpush2.msra.mxu0 0.0
    %2199 = vmatprep.subr.mxu0 0.0
    %2200 = vmatpush2.msra.mxu0 0.0
    %2201 = vmatprep.subr.mxu0 0.0
    %2202 = vmatpush2.msra.mxu0 0.0
    %2203 = vmatprep.subr.mxu0 0.0
    %2204 = vmatpush2.msra.mxu0 0.0
    %2205 = vmatprep.subr.mxu0 0.0
    %2206 = vmatpush2.msra.mxu0 0.0
    %2207 = vmatprep.subr.mxu0 %v2150
    %2208 = vmatpush2.msra.mxu0 %v2149
    %2209 = vmatprep.subr.mxu0 %v2148
    %2210 = vmatpush2.msra.mxu0 %v2147
    %2211 = vmatprep.subr.mxu0 %v2146
    %2212 = vmatpush2.msra.mxu0 %v2145
    %2213 = vmatprep.subr.mxu0 %v2144
    %2214 = vmatpush2.msra.mxu0 %v2143
    %2215 = vmatprep.mubr.f32.mxu0 %v2024
    %2216 = vmatmul.mubr.f32.gmra.mxu0 %v1972
    %v2217 = vpop.f32.mrf.mxu0
    %v2218 = vadd.f32 0.0, %v2217
    %v2219 = vpop.f32.mrf.mxu0
    %v2220 = vadd.f32 0.0, %v2219
    %2221 = vmatprep.mubr.f32.mxu0 %v2027
    %2222 = vmatmul.mubr.f32.gmra.mxu0 %v1978
    %v2223 = vpop.f32.mrf.mxu0
    %v2224 = vadd.f32 0.0, %v2223
    %v2225 = vpop.f32.mrf.mxu0
    %v2226 = vadd.f32 0.0, %v2225
    %2227 = vdwg.mxu0
    %v2228 = vadd.f32 %v2106, %v2218
    %v2229 = vadd.f32 %v2107, %v2220
    %v2230 = vadd.f32 %v2108, %v2224
    %v2231 = vadd.f32 %v2109, %v2226
    %s2232 = scalar_lea.vmem [#allocation8], 1600
    %v2233 = vld [vmem:[%s2232] sm:$0xff]
    %v2234 = vld [vmem:[%s2232 + $0x8] sm:$0xff]
    %v2235 = vld [vmem:[%s2232 + $0x10] sm:$0xff]
    %v2236 = vld [vmem:[%s2232 + $0x18] sm:$0xff]
    %v2237 = vld [vmem:[%s2232 + $0x20] sm:$0xff]
    %v2238 = vld [vmem:[%s2232 + $0x28] sm:$0xff]
    %v2239 = vld [vmem:[%s2232 + $0x30] sm:$0xff]
    %v2240 = vld [vmem:[%s2232 + $0x38] sm:$0xff]
    %v2241 = vld [vmem:[%s2232 + $0x40] sm:$0xff]
    %v2242 = vld [vmem:[%s2232 + $0x48] sm:$0xff]
    %v2243 = vld [vmem:[%s2232 + $0x50] sm:$0xff]
    %v2244 = vld [vmem:[%s2232 + $0x58] sm:$0xff]
    %v2245 = vld [vmem:[%s2232 + $0x60] sm:$0xff]
    %v2246 = vld [vmem:[%s2232 + $0x68] sm:$0xff]
    %v2247 = vld [vmem:[%s2232 + $0x70] sm:$0xff]
    %v2248 = vld [vmem:[%s2232 + $0x78] sm:$0xff]
    %v2249 = vld [vmem:[%s2232 + $0x80] sm:$0xff]
    %v2250 = vld [vmem:[%s2232 + $0x88] sm:$0xff]
    %v2251 = vld [vmem:[%s2232 + $0x90] sm:$0xff]
    %v2252 = vld [vmem:[%s2232 + $0x98] sm:$0xff]
    %v2253 = vld [vmem:[%s2232 + $0xa0] sm:$0xff]
    %v2254 = vld [vmem:[%s2232 + $0xa8] sm:$0xff]
    %v2255 = vld [vmem:[%s2232 + $0xb0] sm:$0xff]
    %v2256 = vld [vmem:[%s2232 + $0xb8] sm:$0xff]
    %v2257 = vld [vmem:[%s2232 + $0xc0] sm:$0xff]
    %v2258 = vld [vmem:[%s2232 + $0xc8] sm:$0xff]
    %v2259 = vld [vmem:[%s2232 + $0xd0] sm:$0xff]
    %v2260 = vld [vmem:[%s2232 + $0xd8] sm:$0xff]
    %v2261 = vld [vmem:[%s2232 + $0xe0] sm:$0xff]
    %v2262 = vld [vmem:[%s2232 + $0xe8] sm:$0xff]
    %v2263 = vld [vmem:[%s2232 + $0xf0] sm:$0xff]
    %v2264 = vld [vmem:[%s2232 + $0xf8] sm:$0xff]
    %v2265 = vld [vmem:[%s2232 + $0x100] sm:$0xff]
    %v2266 = vld [vmem:[%s2232 + $0x108] sm:$0xff]
    %v2267 = vld [vmem:[%s2232 + $0x110] sm:$0xff]
    %v2268 = vld [vmem:[%s2232 + $0x118] sm:$0xff]
    %v2269 = vld [vmem:[%s2232 + $0x120] sm:$0xff]
    %v2270 = vld [vmem:[%s2232 + $0x128] sm:$0xff]
    %v2271 = vld [vmem:[%s2232 + $0x130] sm:$0xff]
    %v2272 = vld [vmem:[%s2232 + $0x138] sm:$0xff]
    %2273 = vmatprep.subr.mxu0 %v2264
    %2274 = vmatpush1.msra.mxu0 %v2263
    %2275 = vmatprep.subr.mxu0 %v2262
    %2276 = vmatpush1.msra.mxu0 %v2261
    %2277 = vmatprep.subr.mxu0 %v2260
    %2278 = vmatpush1.msra.mxu0 %v2259
    %2279 = vmatprep.subr.mxu0 %v2258
    %2280 = vmatpush1.msra.mxu0 %v2257
    %2281 = vmatprep.subr.mxu0 %v2256
    %2282 = vmatpush1.msra.mxu0 %v2255
    %2283 = vmatprep.subr.mxu0 %v2254
    %2284 = vmatpush1.msra.mxu0 %v2253
    %2285 = vmatprep.subr.mxu0 %v2252
    %2286 = vmatpush1.msra.mxu0 %v2251
    %2287 = vmatprep.subr.mxu0 %v2250
    %2288 = vmatpush1.msra.mxu0 %v2249
    %2289 = vmatprep.subr.mxu0 %v2248
    %2290 = vmatpush1.msra.mxu0 %v2247
    %2291 = vmatprep.subr.mxu0 %v2246
    %2292 = vmatpush1.msra.mxu0 %v2245
    %2293 = vmatprep.subr.mxu0 %v2244
    %2294 = vmatpush1.msra.mxu0 %v2243
    %2295 = vmatprep.subr.mxu0 %v2242
    %2296 = vmatpush1.msra.mxu0 %v2241
    %2297 = vmatprep.subr.mxu0 %v2240
    %2298 = vmatpush1.msra.mxu0 %v2239
    %2299 = vmatprep.subr.mxu0 %v2238
    %2300 = vmatpush1.msra.mxu0 %v2237
    %2301 = vmatprep.subr.mxu0 %v2236
    %2302 = vmatpush1.msra.mxu0 %v2235
    %2303 = vmatprep.subr.mxu0 %v2234
    %2304 = vmatpush1.msra.mxu0 %v2233
    %2305 = vmatprep.subr.mxu0 0.0
    %2306 = vmatpush2.msra.mxu0 0.0
    %2307 = vmatprep.subr.mxu0 0.0
    %2308 = vmatpush2.msra.mxu0 0.0
    %2309 = vmatprep.subr.mxu0 0.0
    %2310 = vmatpush2.msra.mxu0 0.0
    %2311 = vmatprep.subr.mxu0 0.0
    %2312 = vmatpush2.msra.mxu0 0.0
    %2313 = vmatprep.subr.mxu0 0.0
    %2314 = vmatpush2.msra.mxu0 0.0
    %2315 = vmatprep.subr.mxu0 0.0
    %2316 = vmatpush2.msra.mxu0 0.0
    %2317 = vmatprep.subr.mxu0 0.0
    %2318 = vmatpush2.msra.mxu0 0.0
    %2319 = vmatprep.subr.mxu0 0.0
    %2320 = vmatpush2.msra.mxu0 0.0
    %2321 = vmatprep.subr.mxu0 0.0
    %2322 = vmatpush2.msra.mxu0 0.0
    %2323 = vmatprep.subr.mxu0 0.0
    %2324 = vmatpush2.msra.mxu0 0.0
    %2325 = vmatprep.subr.mxu0 0.0
    %2326 = vmatpush2.msra.mxu0 0.0
    %2327 = vmatprep.subr.mxu0 0.0
    %2328 = vmatpush2.msra.mxu0 0.0
    %2329 = vmatprep.subr.mxu0 %v2272
    %2330 = vmatpush2.msra.mxu0 %v2271
    %2331 = vmatprep.subr.mxu0 %v2270
    %2332 = vmatpush2.msra.mxu0 %v2269
    %2333 = vmatprep.subr.mxu0 %v2268
    %2334 = vmatpush2.msra.mxu0 %v2267
    %2335 = vmatprep.subr.mxu0 %v2266
    %2336 = vmatpush2.msra.mxu0 %v2265
    %2337 = vmatprep.mubr.f32.mxu0 %v2024
    %2338 = vmatmul.mubr.f32.gmra.mxu0 %v1972
    %v2339 = vpop.f32.mrf.mxu0
    %v2340 = vadd.f32 0.0, %v2339
    %v2341 = vpop.f32.mrf.mxu0
    %v2342 = vadd.f32 0.0, %v2341
    %2343 = vmatprep.mubr.f32.mxu0 %v2027
    %2344 = vmatmul.mubr.f32.gmra.mxu0 %v1978
    %v2345 = vpop.f32.mrf.mxu0
    %v2346 = vadd.f32 0.0, %v2345
    %v2347 = vpop.f32.mrf.mxu0
    %v2348 = vadd.f32 0.0, %v2347
    %2349 = vdwg.mxu0
    %v2350 = vadd.f32 %v2228, %v2340
    %v2351 = vadd.f32 %v2229, %v2342
    %v2352 = vadd.f32 %v2230, %v2346
    %v2353 = vadd.f32 %v2231, %v2348
    %s2354 = scalar_lea.vmem %s4, 32
    %v2355 = vld [vmem:[%s2354] sm:$0xff]
    %v2356 = vld [vmem:[%s2354 + $0x8] sm:$0x3]
    %v2358 = vsel %vm1441, %v2355, 0
    %v2361 = vsel %vm1441, %v2356, 0
    %2363 = vmatprep.subr.mxu0 0.0
    %2364 = vmatpush1.msra.mxu0 0.0
    %2365 = vmatprep.subr.mxu0 0.0
    %2366 = vmatpush1.msra.mxu0 0.0
    %2367 = vmatprep.subr.mxu0 0.0
    %2368 = vmatpush1.msra.mxu0 0.0
    %2369 = vmatprep.subr.mxu0 0.0
    %2370 = vmatpush1.msra.mxu0 0.0
    %2371 = vmatprep.subr.mxu0 0.0
    %2372 = vmatpush1.msra.mxu0 0.0
    %2373 = vmatprep.subr.mxu0 0.0
    %2374 = vmatpush1.msra.mxu0 0.0
    %2375 = vmatprep.subr.mxu0 0.0
    %2376 = vmatpush1.msra.mxu0 0.0
    %2377 = vmatprep.subr.mxu0 0.0
    %2378 = vmatpush1.msra.mxu0 0.0
    %2379 = vmatprep.subr.mxu0 0.0
    %2380 = vmatpush1.msra.mxu0 0.0
    %2381 = vmatprep.subr.mxu0 0.0
    %2382 = vmatpush1.msra.mxu0 0.0
    %2383 = vmatprep.subr.mxu0 0.0
    %2384 = vmatpush1.msra.mxu0 0.0
    %2385 = vmatprep.subr.mxu0 0.0
    %2386 = vmatpush1.msra.mxu0 0.0
    %2387 = vmatprep.subr.mxu0 0.0
    %2388 = vmatpush1.msra.mxu0 0.0
    %2389 = vmatprep.subr.mxu0 %v1453
    %2390 = vmatpush1.msra.mxu0 %v1450
    %2391 = vmatprep.subr.mxu0 %v1436
    %2392 = vmatpush1.msra.mxu0 %v1435
    %2393 = vmatprep.subr.mxu0 %v1434
    %2394 = vmatpush1.msra.mxu0 %v1433
    %2395 = vmatprep.subr.mxu0 0.0
    %2396 = vmatpush2.msra.mxu0 0.0
    %2397 = vmatprep.subr.mxu0 0.0
    %2398 = vmatpush2.msra.mxu0 0.0
    %2399 = vmatprep.subr.mxu0 0.0
    %2400 = vmatpush2.msra.mxu0 0.0
    %2401 = vmatprep.subr.mxu0 0.0
    %2402 = vmatpush2.msra.mxu0 0.0
    %2403 = vmatprep.subr.mxu0 0.0
    %2404 = vmatpush2.msra.mxu0 0.0
    %2405 = vmatprep.subr.mxu0 0.0
    %2406 = vmatpush2.msra.mxu0 0.0
    %2407 = vmatprep.subr.mxu0 0.0
    %2408 = vmatpush2.msra.mxu0 0.0
    %2409 = vmatprep.subr.mxu0 0.0
    %2410 = vmatpush2.msra.mxu0 0.0
    %2411 = vmatprep.subr.mxu0 0.0
    %2412 = vmatpush2.msra.mxu0 0.0
    %2413 = vmatprep.subr.mxu0 0.0
    %2414 = vmatpush2.msra.mxu0 0.0
    %2415 = vmatprep.subr.mxu0 0.0
    %2416 = vmatpush2.msra.mxu0 0.0
    %2417 = vmatprep.subr.mxu0 0.0
    %2418 = vmatpush2.msra.mxu0 0.0
    %2419 = vmatprep.subr.mxu0 0.0
    %2420 = vmatpush2.msra.mxu0 0.0
    %2421 = vmatprep.subr.mxu0 0.0
    %2422 = vmatpush2.msra.mxu0 0.0
    %2423 = vmatprep.subr.mxu0 0.0
    %2424 = vmatpush2.msra.mxu0 0.0
    %2425 = vmatprep.subr.mxu0 0.0
    %2426 = vmatpush2.msra.mxu0 0.0
    %2427 = vmatprep.mubr.f32.mxu0 0.0
    %2428 = vmatmul.mubr.f32.gmra.mxu0 %v2358
    %v2429 = vpop.f32.mrf.mxu0
    %v2430 = vadd.f32 0.0, %v2429
    %v2431 = vpop.f32.mrf.mxu0
    %v2432 = vadd.f32 0.0, %v2431
    %2433 = vmatprep.mubr.f32.mxu0 0.0
    %2434 = vmatmul.mubr.f32.gmra.mxu0 %v2361
    %v2435 = vpop.f32.mrf.mxu0
    %v2436 = vadd.f32 0.0, %v2435
    %v2437 = vpop.f32.mrf.mxu0
    %v2438 = vadd.f32 0.0, %v2437
    %2439 = vdwg.mxu0
    %s2440 = scalar_lea.vmem [#allocation8], 1920
    %v2441 = vld [vmem:[%s2440] sm:$0xff]
    %v2442 = vld [vmem:[%s2440 + $0x8] sm:$0xff]
    %v2443 = vld [vmem:[%s2440 + $0x10] sm:$0xff]
    %v2444 = vld [vmem:[%s2440 + $0x18] sm:$0xff]
    %v2445 = vld [vmem:[%s2440 + $0x20] sm:$0xff]
    %v2446 = vld [vmem:[%s2440 + $0x28] sm:$0xff]
    %v2447 = vld [vmem:[%s2440 + $0x30] sm:$0xff]
    %v2448 = vld [vmem:[%s2440 + $0x38] sm:$0xff]
    %v2449 = vld [vmem:[%s2440 + $0x40] sm:$0xff]
    %v2450 = vld [vmem:[%s2440 + $0x48] sm:$0xff]
    %v2451 = vld [vmem:[%s2440 + $0x50] sm:$0xff]
    %v2452 = vld [vmem:[%s2440 + $0x58] sm:$0xff]
    %v2453 = vld [vmem:[%s2440 + $0x60] sm:$0xff]
    %v2454 = vld [vmem:[%s2440 + $0x68] sm:$0xff]
    %v2455 = vld [vmem:[%s2440 + $0x70] sm:$0xff]
    %v2456 = vld [vmem:[%s2440 + $0x78] sm:$0xff]
    %v2457 = vld [vmem:[%s2440 + $0x80] sm:$0xff]
    %v2458 = vld [vmem:[%s2440 + $0x88] sm:$0xff]
    %v2459 = vld [vmem:[%s2440 + $0x90] sm:$0xff]
    %v2460 = vld [vmem:[%s2440 + $0x98] sm:$0xff]
    %v2461 = vld [vmem:[%s2440 + $0xa0] sm:$0xff]
    %v2462 = vld [vmem:[%s2440 + $0xa8] sm:$0xff]
    %v2463 = vld [vmem:[%s2440 + $0xb0] sm:$0xff]
    %v2464 = vld [vmem:[%s2440 + $0xb8] sm:$0xff]
    %v2465 = vld [vmem:[%s2440 + $0xc0] sm:$0xff]
    %v2466 = vld [vmem:[%s2440 + $0xc8] sm:$0xff]
    %v2467 = vld [vmem:[%s2440 + $0xd0] sm:$0xff]
    %v2468 = vld [vmem:[%s2440 + $0xd8] sm:$0xff]
    %v2469 = vld [vmem:[%s2440 + $0xe0] sm:$0xff]
    %v2470 = vld [vmem:[%s2440 + $0xe8] sm:$0xff]
    %v2471 = vld [vmem:[%s2440 + $0xf0] sm:$0xff]
    %v2472 = vld [vmem:[%s2440 + $0xf8] sm:$0xff]
    %v2473 = vld [vmem:[%s2440 + $0x100] sm:$0xff]
    %v2474 = vld [vmem:[%s2440 + $0x108] sm:$0xff]
    %v2475 = vld [vmem:[%s2440 + $0x110] sm:$0xff]
    %v2476 = vld [vmem:[%s2440 + $0x118] sm:$0xff]
    %v2477 = vld [vmem:[%s2440 + $0x120] sm:$0xff]
    %v2478 = vld [vmem:[%s2440 + $0x128] sm:$0xff]
    %v2479 = vld [vmem:[%s2440 + $0x130] sm:$0xff]
    %v2480 = vld [vmem:[%s2440 + $0x138] sm:$0xff]
    %v2482 = vsel %vm1613, %v2432, 0
    %v2485 = vsel %vm1613, %v2438, 0
    %2487 = vmatprep.subr.mxu0 %v2472
    %2488 = vmatpush1.msra.mxu0 %v2471
    %2489 = vmatprep.subr.mxu0 %v2470
    %2490 = vmatpush1.msra.mxu0 %v2469
    %2491 = vmatprep.subr.mxu0 %v2468
    %2492 = vmatpush1.msra.mxu0 %v2467
    %2493 = vmatprep.subr.mxu0 %v2466
    %2494 = vmatpush1.msra.mxu0 %v2465
    %2495 = vmatprep.subr.mxu0 %v2464
    %2496 = vmatpush1.msra.mxu0 %v2463
    %2497 = vmatprep.subr.mxu0 %v2462
    %2498 = vmatpush1.msra.mxu0 %v2461
    %2499 = vmatprep.subr.mxu0 %v2460
    %2500 = vmatpush1.msra.mxu0 %v2459
    %2501 = vmatprep.subr.mxu0 %v2458
    %2502 = vmatpush1.msra.mxu0 %v2457
    %2503 = vmatprep.subr.mxu0 %v2456
    %2504 = vmatpush1.msra.mxu0 %v2455
    %2505 = vmatprep.subr.mxu0 %v2454
    %2506 = vmatpush1.msra.mxu0 %v2453
    %2507 = vmatprep.subr.mxu0 %v2452
    %2508 = vmatpush1.msra.mxu0 %v2451
    %2509 = vmatprep.subr.mxu0 %v2450
    %2510 = vmatpush1.msra.mxu0 %v2449
    %2511 = vmatprep.subr.mxu0 %v2448
    %2512 = vmatpush1.msra.mxu0 %v2447
    %2513 = vmatprep.subr.mxu0 %v2446
    %2514 = vmatpush1.msra.mxu0 %v2445
    %2515 = vmatprep.subr.mxu0 %v2444
    %2516 = vmatpush1.msra.mxu0 %v2443
    %2517 = vmatprep.subr.mxu0 %v2442
    %2518 = vmatpush1.msra.mxu0 %v2441
    %2519 = vmatprep.subr.mxu0 0.0
    %2520 = vmatpush2.msra.mxu0 0.0
    %2521 = vmatprep.subr.mxu0 0.0
    %2522 = vmatpush2.msra.mxu0 0.0
    %2523 = vmatprep.subr.mxu0 0.0
    %2524 = vmatpush2.msra.mxu0 0.0
    %2525 = vmatprep.subr.mxu0 0.0
    %2526 = vmatpush2.msra.mxu0 0.0
    %2527 = vmatprep.subr.mxu0 0.0
    %2528 = vmatpush2.msra.mxu0 0.0
    %2529 = vmatprep.subr.mxu0 0.0
    %2530 = vmatpush2.msra.mxu0 0.0
    %2531 = vmatprep.subr.mxu0 0.0
    %2532 = vmatpush2.msra.mxu0 0.0
    %2533 = vmatprep.subr.mxu0 0.0
    %2534 = vmatpush2.msra.mxu0 0.0
    %2535 = vmatprep.subr.mxu0 0.0
    %2536 = vmatpush2.msra.mxu0 0.0
    %2537 = vmatprep.subr.mxu0 0.0
    %2538 = vmatpush2.msra.mxu0 0.0
    %2539 = vmatprep.subr.mxu0 0.0
    %2540 = vmatpush2.msra.mxu0 0.0
    %2541 = vmatprep.subr.mxu0 0.0
    %2542 = vmatpush2.msra.mxu0 0.0
    %2543 = vmatprep.subr.mxu0 %v2480
    %2544 = vmatpush2.msra.mxu0 %v2479
    %2545 = vmatprep.subr.mxu0 %v2478
    %2546 = vmatpush2.msra.mxu0 %v2477
    %2547 = vmatprep.subr.mxu0 %v2476
    %2548 = vmatpush2.msra.mxu0 %v2475
    %2549 = vmatprep.subr.mxu0 %v2474
    %2550 = vmatpush2.msra.mxu0 %v2473
    %2551 = vmatprep.mubr.f32.mxu0 %v2482
    %2552 = vmatmul.mubr.f32.gmra.mxu0 %v2430
    %v2553 = vpop.f32.mrf.mxu0
    %v2554 = vadd.f32 0.0, %v2553
    %v2555 = vpop.f32.mrf.mxu0
    %v2556 = vadd.f32 0.0, %v2555
    %2557 = vmatprep.mubr.f32.mxu0 %v2485
    %2558 = vmatmul.mubr.f32.gmra.mxu0 %v2436
    %v2559 = vpop.f32.mrf.mxu0
    %v2560 = vadd.f32 0.0, %v2559
    %v2561 = vpop.f32.mrf.mxu0
    %v2562 = vadd.f32 0.0, %v2561
    %2563 = vdwg.mxu0
    %v2564 = vadd.f32 %v2350, %v2554
    %v2565 = vadd.f32 %v2351, %v2556
    %v2566 = vadd.f32 %v2352, %v2560
    %v2567 = vadd.f32 %v2353, %v2562
    %s2568 = scalar_lea.vmem [#allocation8], 2240
    %v2569 = vld [vmem:[%s2568] sm:$0xff]
    %v2570 = vld [vmem:[%s2568 + $0x8] sm:$0xff]
    %v2571 = vld [vmem:[%s2568 + $0x10] sm:$0xff]
    %v2572 = vld [vmem:[%s2568 + $0x18] sm:$0xff]
    %v2573 = vld [vmem:[%s2568 + $0x20] sm:$0xff]
    %v2574 = vld [vmem:[%s2568 + $0x28] sm:$0xff]
    %v2575 = vld [vmem:[%s2568 + $0x30] sm:$0xff]
    %v2576 = vld [vmem:[%s2568 + $0x38] sm:$0xff]
    %v2577 = vld [vmem:[%s2568 + $0x40] sm:$0xff]
    %v2578 = vld [vmem:[%s2568 + $0x48] sm:$0xff]
    %v2579 = vld [vmem:[%s2568 + $0x50] sm:$0xff]
    %v2580 = vld [vmem:[%s2568 + $0x58] sm:$0xff]
    %v2581 = vld [vmem:[%s2568 + $0x60] sm:$0xff]
    %v2582 = vld [vmem:[%s2568 + $0x68] sm:$0xff]
    %v2583 = vld [vmem:[%s2568 + $0x70] sm:$0xff]
    %v2584 = vld [vmem:[%s2568 + $0x78] sm:$0xff]
    %v2585 = vld [vmem:[%s2568 + $0x80] sm:$0xff]
    %v2586 = vld [vmem:[%s2568 + $0x88] sm:$0xff]
    %v2587 = vld [vmem:[%s2568 + $0x90] sm:$0xff]
    %v2588 = vld [vmem:[%s2568 + $0x98] sm:$0xff]
    %v2589 = vld [vmem:[%s2568 + $0xa0] sm:$0xff]
    %v2590 = vld [vmem:[%s2568 + $0xa8] sm:$0xff]
    %v2591 = vld [vmem:[%s2568 + $0xb0] sm:$0xff]
    %v2592 = vld [vmem:[%s2568 + $0xb8] sm:$0xff]
    %v2593 = vld [vmem:[%s2568 + $0xc0] sm:$0xff]
    %v2594 = vld [vmem:[%s2568 + $0xc8] sm:$0xff]
    %v2595 = vld [vmem:[%s2568 + $0xd0] sm:$0xff]
    %v2596 = vld [vmem:[%s2568 + $0xd8] sm:$0xff]
    %v2597 = vld [vmem:[%s2568 + $0xe0] sm:$0xff]
    %v2598 = vld [vmem:[%s2568 + $0xe8] sm:$0xff]
    %v2599 = vld [vmem:[%s2568 + $0xf0] sm:$0xff]
    %v2600 = vld [vmem:[%s2568 + $0xf8] sm:$0xff]
    %v2601 = vld [vmem:[%s2568 + $0x100] sm:$0xff]
    %v2602 = vld [vmem:[%s2568 + $0x108] sm:$0xff]
    %v2603 = vld [vmem:[%s2568 + $0x110] sm:$0xff]
    %v2604 = vld [vmem:[%s2568 + $0x118] sm:$0xff]
    %v2605 = vld [vmem:[%s2568 + $0x120] sm:$0xff]
    %v2606 = vld [vmem:[%s2568 + $0x128] sm:$0xff]
    %v2607 = vld [vmem:[%s2568 + $0x130] sm:$0xff]
    %v2608 = vld [vmem:[%s2568 + $0x138] sm:$0xff]
    %2609 = vmatprep.subr.mxu0 %v2600
    %2610 = vmatpush1.msra.mxu0 %v2599
    %2611 = vmatprep.subr.mxu0 %v2598
    %2612 = vmatpush1.msra.mxu0 %v2597
    %2613 = vmatprep.subr.mxu0 %v2596
    %2614 = vmatpush1.msra.mxu0 %v2595
    %2615 = vmatprep.subr.mxu0 %v2594
    %2616 = vmatpush1.msra.mxu0 %v2593
    %2617 = vmatprep.subr.mxu0 %v2592
    %2618 = vmatpush1.msra.mxu0 %v2591
    %2619 = vmatprep.subr.mxu0 %v2590
    %2620 = vmatpush1.msra.mxu0 %v2589
    %2621 = vmatprep.subr.mxu0 %v2588
    %2622 = vmatpush1.msra.mxu0 %v2587
    %2623 = vmatprep.subr.mxu0 %v2586
    %2624 = vmatpush1.msra.mxu0 %v2585
    %2625 = vmatprep.subr.mxu0 %v2584
    %2626 = vmatpush1.msra.mxu0 %v2583
    %2627 = vmatprep.subr.mxu0 %v2582
    %2628 = vmatpush1.msra.mxu0 %v2581
    %2629 = vmatprep.subr.mxu0 %v2580
    %2630 = vmatpush1.msra.mxu0 %v2579
    %2631 = vmatprep.subr.mxu0 %v2578
    %2632 = vmatpush1.msra.mxu0 %v2577
    %2633 = vmatprep.subr.mxu0 %v2576
    %2634 = vmatpush1.msra.mxu0 %v2575
    %2635 = vmatprep.subr.mxu0 %v2574
    %2636 = vmatpush1.msra.mxu0 %v2573
    %2637 = vmatprep.subr.mxu0 %v2572
    %2638 = vmatpush1.msra.mxu0 %v2571
    %2639 = vmatprep.subr.mxu0 %v2570
    %2640 = vmatpush1.msra.mxu0 %v2569
    %2641 = vmatprep.subr.mxu0 0.0
    %2642 = vmatpush2.msra.mxu0 0.0
    %2643 = vmatprep.subr.mxu0 0.0
    %2644 = vmatpush2.msra.mxu0 0.0
    %2645 = vmatprep.subr.mxu0 0.0
    %2646 = vmatpush2.msra.mxu0 0.0
    %2647 = vmatprep.subr.mxu0 0.0
    %2648 = vmatpush2.msra.mxu0 0.0
    %2649 = vmatprep.subr.mxu0 0.0
    %2650 = vmatpush2.msra.mxu0 0.0
    %2651 = vmatprep.subr.mxu0 0.0
    %2652 = vmatpush2.msra.mxu0 0.0
    %2653 = vmatprep.subr.mxu0 0.0
    %2654 = vmatpush2.msra.mxu0 0.0
    %2655 = vmatprep.subr.mxu0 0.0
    %2656 = vmatpush2.msra.mxu0 0.0
    %2657 = vmatprep.subr.mxu0 0.0
    %2658 = vmatpush2.msra.mxu0 0.0
    %2659 = vmatprep.subr.mxu0 0.0
    %2660 = vmatpush2.msra.mxu0 0.0
    %2661 = vmatprep.subr.mxu0 0.0
    %2662 = vmatpush2.msra.mxu0 0.0
    %2663 = vmatprep.subr.mxu0 0.0
    %2664 = vmatpush2.msra.mxu0 0.0
    %2665 = vmatprep.subr.mxu0 %v2608
    %2666 = vmatpush2.msra.mxu0 %v2607
    %2667 = vmatprep.subr.mxu0 %v2606
    %2668 = vmatpush2.msra.mxu0 %v2605
    %2669 = vmatprep.subr.mxu0 %v2604
    %2670 = vmatpush2.msra.mxu0 %v2603
    %2671 = vmatprep.subr.mxu0 %v2602
    %2672 = vmatpush2.msra.mxu0 %v2601
    %2673 = vmatprep.mubr.f32.mxu0 %v2482
    %2674 = vmatmul.mubr.f32.gmra.mxu0 %v2430
    %v2675 = vpop.f32.mrf.mxu0
    %v2676 = vadd.f32 0.0, %v2675
    %v2677 = vpop.f32.mrf.mxu0
    %v2678 = vadd.f32 0.0, %v2677
    %2679 = vmatprep.mubr.f32.mxu0 %v2485
    %2680 = vmatmul.mubr.f32.gmra.mxu0 %v2436
    %v2681 = vpop.f32.mrf.mxu0
    %v2682 = vadd.f32 0.0, %v2681
    %v2683 = vpop.f32.mrf.mxu0
    %v2684 = vadd.f32 0.0, %v2683
    %2685 = vdwg.mxu0
    %v2686 = vadd.f32 %v2564, %v2676
    %v2687 = vadd.f32 %v2565, %v2678
    %v2688 = vadd.f32 %v2566, %v2682
    %v2689 = vadd.f32 %v2567, %v2684
    %s2690 = scalar_lea.vmem [#allocation8], 2560
    %v2691 = vld [vmem:[%s2690] sm:$0xff]
    %v2692 = vld [vmem:[%s2690 + $0x8] sm:$0xff]
    %v2693 = vld [vmem:[%s2690 + $0x10] sm:$0xff]
    %v2694 = vld [vmem:[%s2690 + $0x18] sm:$0xff]
    %v2695 = vld [vmem:[%s2690 + $0x20] sm:$0xff]
    %v2696 = vld [vmem:[%s2690 + $0x28] sm:$0xff]
    %v2697 = vld [vmem:[%s2690 + $0x30] sm:$0xff]
    %v2698 = vld [vmem:[%s2690 + $0x38] sm:$0xff]
    %v2699 = vld [vmem:[%s2690 + $0x40] sm:$0xff]
    %v2700 = vld [vmem:[%s2690 + $0x48] sm:$0xff]
    %v2701 = vld [vmem:[%s2690 + $0x50] sm:$0xff]
    %v2702 = vld [vmem:[%s2690 + $0x58] sm:$0xff]
    %v2703 = vld [vmem:[%s2690 + $0x60] sm:$0xff]
    %v2704 = vld [vmem:[%s2690 + $0x68] sm:$0xff]
    %v2705 = vld [vmem:[%s2690 + $0x70] sm:$0xff]
    %v2706 = vld [vmem:[%s2690 + $0x78] sm:$0xff]
    %v2707 = vld [vmem:[%s2690 + $0x80] sm:$0xff]
    %v2708 = vld [vmem:[%s2690 + $0x88] sm:$0xff]
    %v2709 = vld [vmem:[%s2690 + $0x90] sm:$0xff]
    %v2710 = vld [vmem:[%s2690 + $0x98] sm:$0xff]
    %v2711 = vld [vmem:[%s2690 + $0xa0] sm:$0xff]
    %v2712 = vld [vmem:[%s2690 + $0xa8] sm:$0xff]
    %v2713 = vld [vmem:[%s2690 + $0xb0] sm:$0xff]
    %v2714 = vld [vmem:[%s2690 + $0xb8] sm:$0xff]
    %v2715 = vld [vmem:[%s2690 + $0xc0] sm:$0xff]
    %v2716 = vld [vmem:[%s2690 + $0xc8] sm:$0xff]
    %v2717 = vld [vmem:[%s2690 + $0xd0] sm:$0xff]
    %v2718 = vld [vmem:[%s2690 + $0xd8] sm:$0xff]
    %v2719 = vld [vmem:[%s2690 + $0xe0] sm:$0xff]
    %v2720 = vld [vmem:[%s2690 + $0xe8] sm:$0xff]
    %v2721 = vld [vmem:[%s2690 + $0xf0] sm:$0xff]
    %v2722 = vld [vmem:[%s2690 + $0xf8] sm:$0xff]
    %v2723 = vld [vmem:[%s2690 + $0x100] sm:$0xff]
    %v2724 = vld [vmem:[%s2690 + $0x108] sm:$0xff]
    %v2725 = vld [vmem:[%s2690 + $0x110] sm:$0xff]
    %v2726 = vld [vmem:[%s2690 + $0x118] sm:$0xff]
    %v2727 = vld [vmem:[%s2690 + $0x120] sm:$0xff]
    %v2728 = vld [vmem:[%s2690 + $0x128] sm:$0xff]
    %v2729 = vld [vmem:[%s2690 + $0x130] sm:$0xff]
    %v2730 = vld [vmem:[%s2690 + $0x138] sm:$0xff]
    %2731 = vmatprep.subr.mxu0 %v2722
    %2732 = vmatpush1.msra.mxu0 %v2721
    %2733 = vmatprep.subr.mxu0 %v2720
    %2734 = vmatpush1.msra.mxu0 %v2719
    %2735 = vmatprep.subr.mxu0 %v2718
    %2736 = vmatpush1.msra.mxu0 %v2717
    %2737 = vmatprep.subr.mxu0 %v2716
    %2738 = vmatpush1.msra.mxu0 %v2715
    %2739 = vmatprep.subr.mxu0 %v2714
    %2740 = vmatpush1.msra.mxu0 %v2713
    %2741 = vmatprep.subr.mxu0 %v2712
    %2742 = vmatpush1.msra.mxu0 %v2711
    %2743 = vmatprep.subr.mxu0 %v2710
    %2744 = vmatpush1.msra.mxu0 %v2709
    %2745 = vmatprep.subr.mxu0 %v2708
    %2746 = vmatpush1.msra.mxu0 %v2707
    %2747 = vmatprep.subr.mxu0 %v2706
    %2748 = vmatpush1.msra.mxu0 %v2705
    %2749 = vmatprep.subr.mxu0 %v2704
    %2750 = vmatpush1.msra.mxu0 %v2703
    %2751 = vmatprep.subr.mxu0 %v2702
    %2752 = vmatpush1.msra.mxu0 %v2701
    %2753 = vmatprep.subr.mxu0 %v2700
    %2754 = vmatpush1.msra.mxu0 %v2699
    %2755 = vmatprep.subr.mxu0 %v2698
    %2756 = vmatpush1.msra.mxu0 %v2697
    %2757 = vmatprep.subr.mxu0 %v2696
    %2758 = vmatpush1.msra.mxu0 %v2695
    %2759 = vmatprep.subr.mxu0 %v2694
    %2760 = vmatpush1.msra.mxu0 %v2693
    %2761 = vmatprep.subr.mxu0 %v2692
    %2762 = vmatpush1.msra.mxu0 %v2691
    %2763 = vmatprep.subr.mxu0 0.0
    %2764 = vmatpush2.msra.mxu0 0.0
    %2765 = vmatprep.subr.mxu0 0.0
    %2766 = vmatpush2.msra.mxu0 0.0
    %2767 = vmatprep.subr.mxu0 0.0
    %2768 = vmatpush2.msra.mxu0 0.0
    %2769 = vmatprep.subr.mxu0 0.0
    %2770 = vmatpush2.msra.mxu0 0.0
    %2771 = vmatprep.subr.mxu0 0.0
    %2772 = vmatpush2.msra.mxu0 0.0
    %2773 = vmatprep.subr.mxu0 0.0
    %2774 = vmatpush2.msra.mxu0 0.0
    %2775 = vmatprep.subr.mxu0 0.0
    %2776 = vmatpush2.msra.mxu0 0.0
    %2777 = vmatprep.subr.mxu0 0.0
    %2778 = vmatpush2.msra.mxu0 0.0
    %2779 = vmatprep.subr.mxu0 0.0
    %2780 = vmatpush2.msra.mxu0 0.0
    %2781 = vmatprep.subr.mxu0 0.0
    %2782 = vmatpush2.msra.mxu0 0.0
    %2783 = vmatprep.subr.mxu0 0.0
    %2784 = vmatpush2.msra.mxu0 0.0
    %2785 = vmatprep.subr.mxu0 0.0
    %2786 = vmatpush2.msra.mxu0 0.0
    %2787 = vmatprep.subr.mxu0 %v2730
    %2788 = vmatpush2.msra.mxu0 %v2729
    %2789 = vmatprep.subr.mxu0 %v2728
    %2790 = vmatpush2.msra.mxu0 %v2727
    %2791 = vmatprep.subr.mxu0 %v2726
    %2792 = vmatpush2.msra.mxu0 %v2725
    %2793 = vmatprep.subr.mxu0 %v2724
    %2794 = vmatpush2.msra.mxu0 %v2723
    %2795 = vmatprep.mubr.f32.mxu0 %v2482
    %2796 = vmatmul.mubr.f32.gmra.mxu0 %v2430
    %v2797 = vpop.f32.mrf.mxu0
    %v2798 = vadd.f32 0.0, %v2797
    %v2799 = vpop.f32.mrf.mxu0
    %v2800 = vadd.f32 0.0, %v2799
    %2801 = vmatprep.mubr.f32.mxu0 %v2485
    %2802 = vmatmul.mubr.f32.gmra.mxu0 %v2436
    %v2803 = vpop.f32.mrf.mxu0
    %v2804 = vadd.f32 0.0, %v2803
    %v2805 = vpop.f32.mrf.mxu0
    %v2806 = vadd.f32 0.0, %v2805
    %2807 = vdwg.mxu0
    %v2808 = vadd.f32 %v2686, %v2798
    %v2809 = vadd.f32 %v2687, %v2800
    %v2810 = vadd.f32 %v2688, %v2804
    %v2811 = vadd.f32 %v2689, %v2806
    %v2812 = vld [vmem:[#allocation10] sm:$0x3]
    %v2814 = vlaneseq
    %v2815 = vshrl.u32 %v2814, 7
    %v2816 = vsub.s32 0, %v2815
    %v2817 = vrot.slane %v2812, %v2816
    %v2818 = vlaneseq
    %v2819 = vshrl.u32 %v2818, 7
    %v2820 = vsub.s32 1, %v2819
    %v2821 = vrot.slane %v2812, %v2820
    %v2824 = vadd.f32 %v2808, %v2817
    %v2825 = vadd.f32 %v2809, %v2821
    %v2826 = vadd.f32 %v2810, %v2817
    %v2827 = vadd.f32 %v2811, %v2821
    %v2828 = vmax.f32 %v2824, 0.0
    %v2829 = vmax.f32 %v2825, 0.0
    %v2830 = vmax.f32 %v2826, 0.0
    %v2831 = vmax.f32 %v2827, 0.0
    %v2832 = vld [vmem:[#allocation11] sm:$0xff]
    %v2833 = vld [vmem:[#allocation11 + $0x8] sm:$0xff]
    %v2834 = vld [vmem:[#allocation11 + $0x10] sm:$0x3]
    %v2835 = vld [vmem:[#allocation11 + $0x18] sm:$0x3]
    %v2836 = vmul.f32 %v2828, %v2832
    %v2837 = vmul.f32 %v2829, %v2833
    %v2838 = vmul.f32 %v2830, %v2834
    %v2839 = vmul.f32 %v2831, %v2835
    %v2840 = vld [vmem:[#allocation13] sm:$0x3]
    %vm2841 = vcmask 80896
    %v2843 = vsel %vm2841, %v2840, 0
    %vm2845 = vcmask 1041408
    %v2847 = vsel %vm2845, %v2838, 0
    %v2850 = vsel %vm2845, %v2839, 0
    %2852 = vmatprep.subr.mxu0 0.0
    %2853 = vmatpush1.msra.mxu0 0.0
    %2854 = vmatprep.subr.mxu0 0.0
    %2855 = vmatpush1.msra.mxu0 0.0
    %2856 = vmatprep.subr.mxu0 0.0
    %2857 = vmatpush1.msra.mxu0 0.0
    %2858 = vmatprep.subr.mxu0 0.0
    %2859 = vmatpush1.msra.mxu0 0.0
    %2860 = vmatprep.subr.mxu0 0.0
    %2861 = vmatpush1.msra.mxu0 0.0
    %2862 = vmatprep.subr.mxu0 0.0
    %2863 = vmatpush1.msra.mxu0 0.0
    %2864 = vmatprep.subr.mxu0 0.0
    %2865 = vmatpush1.msra.mxu0 0.0
    %2866 = vmatprep.subr.mxu0 0.0
    %2867 = vmatpush1.msra.mxu0 0.0
    %2868 = vmatprep.subr.mxu0 0.0
    %2869 = vmatpush1.msra.mxu0 0.0
    %2870 = vmatprep.subr.mxu0 0.0
    %2871 = vmatpush1.msra.mxu0 0.0
    %2872 = vmatprep.subr.mxu0 0.0
    %2873 = vmatpush1.msra.mxu0 0.0
    %2874 = vmatprep.subr.mxu0 0.0
    %2875 = vmatpush1.msra.mxu0 0.0
    %2876 = vmatprep.subr.mxu0 0.0
    %2877 = vmatpush1.msra.mxu0 0.0
    %2878 = vmatprep.subr.mxu0 0.0
    %2879 = vmatpush1.msra.mxu0 0.0
    %2880 = vmatprep.subr.mxu0 %v2850
    %2881 = vmatpush1.msra.mxu0 %v2847
    %2882 = vmatprep.subr.mxu0 %v2837
    %2883 = vmatpush1.msra.mxu0 %v2836
    %2884 = vmatprep.subr.mxu0 0.0
    %2885 = vmatpush2.msra.mxu0 0.0
    %2886 = vmatprep.subr.mxu0 0.0
    %2887 = vmatpush2.msra.mxu0 0.0
    %2888 = vmatprep.subr.mxu0 0.0
    %2889 = vmatpush2.msra.mxu0 0.0
    %2890 = vmatprep.subr.mxu0 0.0
    %2891 = vmatpush2.msra.mxu0 0.0
    %2892 = vmatprep.subr.mxu0 0.0
    %2893 = vmatpush2.msra.mxu0 0.0
    %2894 = vmatprep.subr.mxu0 0.0
    %2895 = vmatpush2.msra.mxu0 0.0
    %2896 = vmatprep.subr.mxu0 0.0
    %2897 = vmatpush2.msra.mxu0 0.0
    %2898 = vmatprep.subr.mxu0 0.0
    %2899 = vmatpush2.msra.mxu0 0.0
    %2900 = vmatprep.subr.mxu0 0.0
    %2901 = vmatpush2.msra.mxu0 0.0
    %2902 = vmatprep.subr.mxu0 0.0
    %2903 = vmatpush2.msra.mxu0 0.0
    %2904 = vmatprep.subr.mxu0 0.0
    %2905 = vmatpush2.msra.mxu0 0.0
    %2906 = vmatprep.subr.mxu0 0.0
    %2907 = vmatpush2.msra.mxu0 0.0
    %2908 = vmatprep.subr.mxu0 0.0
    %2909 = vmatpush2.msra.mxu0 0.0
    %2910 = vmatprep.subr.mxu0 0.0
    %2911 = vmatpush2.msra.mxu0 0.0
    %2912 = vmatprep.subr.mxu0 0.0
    %2913 = vmatpush2.msra.mxu0 0.0
    %2914 = vmatprep.subr.mxu0 0.0
    %2915 = vmatpush2.msra.mxu0 0.0
    %2916 = vmatprep.mubr.f32.mxu0 0.0
    %2917 = vmatmul.mubr.f32.gmra.mxu0 %v2843
    %v2918 = vpop.f32.mrf.mxu0
    %v2919 = vadd.f32 0.0, %v2918
    %v2920 = vpop.f32.mrf.mxu0
    %v2921 = vadd.f32 0.0, %v2920
    %2922 = vdwg.mxu0
    %v2923 = vsel %vm2845, %v2919, 0.0
    %vm2924 = vcmask 254976
    %v2925 = vsel %vm2924, %v2921, 0.0
    %v2926 = vadd.f32 %v2923, %v2925
    %2927 = vadd.xlane.f32.xlu0 %v2926
    %v2928 = vpop.xlane.xlu0 %2927
    %v2929 = vld [vmem:[#allocation2] sm:$0x1]
    %v2931 = vlaneseq
    %v2932 = vshrl.u32 %v2931, 7
    %v2933 = vsub.s32 0, %v2932
    %v2934 = vrot.slane %v2929, %v2933
    %v2936 = vadd.f32 %v2928, %v2934
    %vm2937 = vcmask 1024
    %2938 = vst.msk [vmem:[%s10] sm:$0x3] %vm2937, %v2936
    // Predicated region
    $region70: #{cnn_ws4_forward.1} parent=1 // pred_check
      _
    $region71: #{cnn_ws4_forward.1} parent=1 // pred_check_branch
      %2940 = sbr.rel (0) target = $region73
    $region72: #{cnn_ws4_forward.1} parent=1 // pred_region
      _
    $region73: #{cnn_ws4_forward.1} parent=1 // pred_fallthru
      _
    // Predicated region
    $region74: #{cnn_ws4_forward.1} parent=1 // pred_check
      _
    $region75: #{cnn_ws4_forward.1} parent=1 // pred_check_branch
      %2942 = sbr.rel (0) target = $region77
    $region76: #{cnn_ws4_forward.1} parent=1 // pred_region
      _
    $region77: #{cnn_ws4_forward.1} parent=1 // pred_fallthru
      _
    %2943 = vsyncpa [#allocation4], 1
    %2944 = vsyncpa [#allocation6], 1
    %2945 = vsyncpa [#allocation9], 1
    %2946 = vsyncpa [#allocation12], 1

</llo_original>
